<compile_context>
chip_gen: v7x
topology: tpu7x:2x2x1
jax: 0.10.0
libtpu: 0.0.40
codegen_flags: <defaults>
</compile_context>

<pallas_src>
import math

import jax
import jax.numpy as jnp
from jax.experimental import pallas as pl
from jax.experimental.pallas import tpu as pltpu

# ----------------------------- model config (small) -------------------------
B = 2              # batch
C = 3              # RGB, as ISIC images
IMG = 16           # spatial
PATCH = 4          # patch size -> 4x4 = 16 patches
D = 32             # hidden dim
HEADS = 4
DH = D // HEADS
MLP_HIDDEN = 64
DEPTH = 2
NUM_CLASSES = 1
DTYPE = jnp.float32

PATCH_DIM = C * PATCH * PATCH          # 48
N_PATCH = (IMG // PATCH) ** 2          # 16
T_REAL = N_PATCH + 1                   # 17 real tokens (patches + CLS)
T_PAD = 24                             # padded per-image token count (mult of 8)
TT = B * T_PAD                         # 48 = all tokens of the whole batch
HEAD_PAD = 128                         # lane-dense head output width
LN_EPS = 1e-6
NEG_INF = -1e30


# ------------------------------ fused Pallas kernel --------------------------
def _ln(x, g, b, eps=LN_EPS):
    mu = jnp.mean(x, axis=-1, keepdims=True)
    xc = x - mu
    var = jnp.mean(xc * xc, axis=-1, keepdims=True)
    return xc * jax.lax.rsqrt(var + eps) * g + b


def _eva_fused_kernel(
    patches_ref, patch_w_ref, tok_bias_ref, attn_bias_ref,
    ln1_g_ref, ln1_b_ref, qkv_w_ref, qkv_b_ref, proj_w_ref, proj_b_ref,
    ln2_g_ref, ln2_b_ref, w12_ref, w3_ref, b3_ref,
    norm_g_ref, norm_b_ref, head_w_ref, head_b_ref,
    o_ref,
):
    f32 = jnp.float32
    bf16 = jnp.bfloat16

    # ---- patch embedding for the whole batch (TT, PATCH_DIM) @ (PATCH_DIM, D)
    emb = jnp.dot(patches_ref[...].astype(bf16), patch_w_ref[...],
                  preferred_element_type=f32)
    # token bias folds patch bias + pos embed + CLS token (pad rows are zero);
    # no VMEM scratch round-trip, everything stays in registers.
    x = emb + tok_bias_ref[...]                       # (TT, D) f32

    abias = attn_bias_ref[...]                        # (TT, TT) block-diag mask

    for l in range(DEPTH):
        # ------------------------- attention -------------------------
        h = _ln(x, ln1_g_ref[l], ln1_b_ref[l]).astype(bf16)
        # fused qkv projection (1/sqrt(DH) pre-folded into the Q columns)
        qkv = jnp.dot(h, qkv_w_ref[l], preferred_element_type=f32) + qkv_b_ref[l]
        attn = jnp.zeros((TT, D), f32)
        for hd in range(HEADS):
            q = qkv[:, hd * DH:(hd + 1) * DH].astype(bf16)
            k = qkv[:, D + hd * DH:D + (hd + 1) * DH].astype(bf16)
            v = qkv[:, 2 * D + hd * DH:2 * D + (hd + 1) * DH].astype(bf16)
            s = jax.lax.dot_general(q, k, (((1,), (1,)), ((), ())),
                                    preferred_element_type=f32)
            s = s + abias                              # mask cross-image + pad keys
            s = s - jnp.max(s, axis=-1, keepdims=True)
            p = jnp.exp(s)
            p = p * pl.reciprocal(jnp.sum(p, axis=-1, keepdims=True), approx=True)
            o_h = jnp.dot(p.astype(bf16), v, preferred_element_type=f32)
            # head-concat folded into the output projection; per-head weight
            # slab is a leading-axis ref load (no sub-tile value slicing).
            pw_h = proj_w_ref[l * HEADS + hd]          # (DH, D) bf16
            attn = attn + jnp.dot(o_h.astype(bf16), pw_h,
                                  preferred_element_type=f32)
        x = x + attn + proj_b_ref[l]

        # ------------------------- SwiGLU MLP -------------------------
        h2 = _ln(x, ln2_g_ref[l], ln2_b_ref[l]).astype(bf16)
        # fused gate||up projection -> one lane-full (TT, 128) MXU result
        h12 = jnp.dot(h2, w12_ref[l], preferred_element_type=f32)
        gate = h12[:, :MLP_HIDDEN]
        up = h12[:, MLP_HIDDEN:]
        hidden = (jax.nn.silu(gate) * up).astype(bf16)
        x = x + jnp.dot(hidden, w3_ref[l], preferred_element_type=f32) + b3_ref[l]

    # ---------------- final norm + head + sigmoid ----------------
    xf = _ln(x, norm_g_ref[...], norm_b_ref[...]).astype(bf16)
    # head computed for all rows (cheaper than in-kernel row gathers at this
    # size); wrapper picks the CLS row per image.  Lane-dense (TT, 128) store.
    logits = jnp.dot(xf, head_w_ref[...], preferred_element_type=f32) + head_b_ref[...]
    o_ref[...] = jax.nn.sigmoid(logits).astype(o_ref.dtype)


# ------------------------------ wrapper --------------------------------------
def _bcast_spec(shape):
    zeros = (0,) * len(shape)
    return pl.BlockSpec(shape, lambda i, _z=zeros: _z)


@jax.jit
def isic_forward(images, params):
    # images: NCHW float32 (B, C, IMG, IMG)
    b, c, hh, ww = images.shape
    p = PATCH
    nh, nw = hh // p, ww // p
    # patchify (pure reshape glue, no compute): NCHW -> (B, N_PATCH, C*P*P),
    # then zero-pad each image's rows to T_PAD (CLS/pad slots) and flatten.
    patches = images.reshape(b, c, nh, p, nw, p)
    patches = patches.transpose(0, 2, 4, 1, 3, 5).reshape(b, nh * nw, c * p * p)
    patches = jnp.pad(patches, ((0, 0), (0, T_PAD - N_PATCH), (0, 0)))
    patches = patches.reshape(b * T_PAD, PATCH_DIM)

    blk = params["blocks"]
    out = pl.pallas_call(
        _eva_fused_kernel,
        out_shape=jax.ShapeDtypeStruct((b * T_PAD, HEAD_PAD), DTYPE),
        grid=(1,),                                   # whole batch in one step
        in_specs=[
            _bcast_spec((TT, PATCH_DIM)),            # padded patches (all images)
            _bcast_spec((PATCH_DIM, D)),             # patch_w (bf16)
            _bcast_spec((TT, D)),                    # tok_bias (pos + cls + patch_b)
            _bcast_spec((TT, TT)),                   # block-diag additive attn mask
            _bcast_spec((DEPTH, 1, D)),              # ln1_g
            _bcast_spec((DEPTH, 1, D)),              # ln1_b
            _bcast_spec((DEPTH, D, 3 * D)),          # qkv_w (bf16, Q scaled)
            _bcast_spec((DEPTH, 1, 3 * D)),          # qkv_b
            _bcast_spec((DEPTH * HEADS, DH, D)),     # proj_w head-major (bf16)
            _bcast_spec((DEPTH, 1, D)),              # proj_b
            _bcast_spec((DEPTH, 1, D)),              # ln2_g
            _bcast_spec((DEPTH, 1, D)),              # ln2_b
            _bcast_spec((DEPTH, D, 2 * MLP_HIDDEN)), # w12 (gate||up fused, bf16)
            _bcast_spec((DEPTH, MLP_HIDDEN, D)),     # w3 (bf16)
            _bcast_spec((DEPTH, 1, D)),              # b3
            _bcast_spec((1, D)),                     # norm_g
            _bcast_spec((1, D)),                     # norm_b
            _bcast_spec((D, HEAD_PAD)),              # head_w (lane-padded, bf16)
            _bcast_spec((1, HEAD_PAD)),              # head_b (lane-padded)
        ],
        out_specs=pl.BlockSpec((TT, HEAD_PAD), lambda i: (0, 0)),
        compiler_params=pltpu.CompilerParams(
            dimension_semantics=("arbitrary",)),
    )(
        patches,
        params["patch_w"], params["tok_bias"], params["attn_bias"],
        blk["ln1_g"], blk["ln1_b"], blk["qkv_w"], blk["qkv_b"],
        blk["proj_w"], blk["proj_b"], blk["ln2_g"], blk["ln2_b"],
        blk["w12"], blk["w3"], blk["b3"],
        params["norm_g"], params["norm_b"], params["head_w"], params["head_b"],
    )
    # per-image CLS row, first class column
    return out.reshape(b, T_PAD, HEAD_PAD)[:, N_PATCH, :NUM_CLASSES]


# ------------------------------ parameter init -------------------------------
def init_params(key):
    f32 = jnp.float32
    bf16 = jnp.bfloat16

    def nrm(k, shape, scale=0.02):
        return (scale * jax.random.normal(k, shape)).astype(f32)

    keys = jax.random.split(key, 8)
    scale = 1.0 / math.sqrt(DH)

    patch_w = nrm(keys[0], (PATCH_DIM, D))
    patch_b = jnp.zeros((D,), f32)
    cls_tok = nrm(keys[1], (1, D))
    pos = nrm(keys[2], (T_REAL, D))

    # token bias: patch rows get patch_b + pos, CLS row gets cls + pos, pad rows 0
    tok = jnp.zeros((T_PAD, D), f32)
    tok = tok.at[:N_PATCH].set(pos[:N_PATCH] + patch_b[None, :])
    tok = tok.at[N_PATCH].set(pos[N_PATCH] + cls_tok[0])
    tok_bias = jnp.tile(tok, (B, 1))                       # (TT, D)

    # block-diagonal additive attention mask: a query only sees the real
    # (non-pad) keys of its own image.
    ids = jnp.arange(TT)
    same_img = (ids[:, None] // T_PAD) == (ids[None, :] // T_PAD)
    key_valid = (ids[None, :] % T_PAD) < T_REAL
    attn_bias = jnp.where(same_img & key_valid, 0.0, NEG_INF).astype(f32)

    qkv_w = nrm(keys[3], (DEPTH, D, 3 * D))
    qkv_w = qkv_w.at[:, :, :D].multiply(scale)             # fold 1/sqrt(DH) into Q
    qkv_b = jnp.zeros((DEPTH, 1, 3 * D), f32)              # (Q part would be scaled too)

    proj_w = nrm(keys[4], (DEPTH, D, D)).reshape(DEPTH * HEADS, DH, D)

    head_w = jnp.zeros((D, HEAD_PAD), f32)
    head_w = head_w.at[:, :NUM_CLASSES].set(nrm(keys[7], (D, NUM_CLASSES)))

    return {
        "patch_w": patch_w.astype(bf16),
        "tok_bias": tok_bias,
        "attn_bias": attn_bias,
        "norm_g": jnp.ones((1, D), f32),
        "norm_b": jnp.zeros((1, D), f32),
        "head_w": head_w.astype(bf16),
        "head_b": jnp.zeros((1, HEAD_PAD), f32),
        "blocks": {   # per-layer weights stacked along a leading DEPTH axis
            "ln1_g": jnp.ones((DEPTH, 1, D), f32),
            "ln1_b": jnp.zeros((DEPTH, 1, D), f32),
            "qkv_w": qkv_w.astype(bf16),
            "qkv_b": qkv_b,
            "proj_w": proj_w.astype(bf16),
            "proj_b": jnp.zeros((DEPTH, 1, D), f32),
            "ln2_g": jnp.ones((DEPTH, 1, D), f32),
            "ln2_b": jnp.zeros((DEPTH, 1, D), f32),
            "w12": nrm(keys[5], (DEPTH, D, 2 * MLP_HIDDEN)).astype(bf16),
            "w3": nrm(keys[6], (DEPTH, MLP_HIDDEN, D)).astype(bf16),
            "b3": jnp.zeros((DEPTH, 1, D), f32),
        },
    }


# ----------------------------------- main ------------------------------------
if __name__ == "__main__":
    key = jax.random.PRNGKey(0)
    k_img, k_par = jax.random.split(key)
    images = jax.random.normal(k_img, (B, C, IMG, IMG), dtype=DTYPE)
    params = init_params(k_par)

    out = isic_forward(images, params)
    out = jax.block_until_ready(out)

    assert out.shape == (B, NUM_CLASSES), out.shape
    assert bool(jnp.all(jnp.isfinite(out)))
    assert bool(jnp.all((out >= 0.0) & (out <= 1.0)))
    print("KERNEL_OK")
</pallas_src>

<mosaic_0001>
module attributes {stable_mosaic.version = 11 : i64} {
  func.func @_eva_fused_kernel(%arg0: i32, %arg1: memref<48x48xf32, #tpu.memory_space<vmem>>, %arg2: memref<48x32xbf16, #tpu.memory_space<vmem>>, %arg3: memref<48x32xf32, #tpu.memory_space<vmem>>, %arg4: memref<48x48xf32, #tpu.memory_space<vmem>>, %arg5: memref<2x1x32xf32, #tpu.memory_space<vmem>>, %arg6: memref<2x1x32xf32, #tpu.memory_space<vmem>>, %arg7: memref<2x32x96xbf16, #tpu.memory_space<vmem>>, %arg8: memref<2x1x96xf32, #tpu.memory_space<vmem>>, %arg9: memref<8x8x32xbf16, #tpu.memory_space<vmem>>, %arg10: memref<2x1x32xf32, #tpu.memory_space<vmem>>, %arg11: memref<2x1x32xf32, #tpu.memory_space<vmem>>, %arg12: memref<2x1x32xf32, #tpu.memory_space<vmem>>, %arg13: memref<2x32x128xbf16, #tpu.memory_space<vmem>>, %arg14: memref<2x64x32xbf16, #tpu.memory_space<vmem>>, %arg15: memref<2x1x32xf32, #tpu.memory_space<vmem>>, %arg16: memref<1x32xf32, #tpu.memory_space<vmem>>, %arg17: memref<1x32xf32, #tpu.memory_space<vmem>>, %arg18: memref<32x128xbf16, #tpu.memory_space<vmem>>, %arg19: memref<1x128xf32, #tpu.memory_space<vmem>>, %arg20: memref<48x128xf32, #tpu.memory_space<vmem>>) attributes {dimension_semantics = [#tpu.dimension_semantics<arbitrary>], iteration_bounds = array<i64: 1>, scalar_prefetch = 0 : i64, scratch_operands = 0 : i64, tpu.core_type = #tpu.core_type<tc>, window_params = [{pipeline_mode = #tpu.pipeline_mode<synchronous>, transform_indices = @transform_0, window_bounds = array<i64: 48, 48>}, {pipeline_mode = #tpu.pipeline_mode<synchronous>, transform_indices = @transform_1, window_bounds = array<i64: 48, 32>}, {pipeline_mode = #tpu.pipeline_mode<synchronous>, transform_indices = @transform_2, window_bounds = array<i64: 48, 32>}, {pipeline_mode = #tpu.pipeline_mode<synchronous>, transform_indices = @transform_3, window_bounds = array<i64: 48, 48>}, {pipeline_mode = #tpu.pipeline_mode<synchronous>, transform_indices = @transform_4, window_bounds = array<i64: 2, 1, 32>}, {pipeline_mode = #tpu.pipeline_mode<synchronous>, transform_indices = @transform_5, window_bounds = array<i64: 2, 1, 32>}, {pipeline_mode = #tpu.pipeline_mode<synchronous>, transform_indices = @transform_6, window_bounds = array<i64: 2, 32, 96>}, {pipeline_mode = #tpu.pipeline_mode<synchronous>, transform_indices = @transform_7, window_bounds = array<i64: 2, 1, 96>}, {pipeline_mode = #tpu.pipeline_mode<synchronous>, transform_indices = @transform_8, window_bounds = array<i64: 8, 8, 32>}, {pipeline_mode = #tpu.pipeline_mode<synchronous>, transform_indices = @transform_9, window_bounds = array<i64: 2, 1, 32>}, {pipeline_mode = #tpu.pipeline_mode<synchronous>, transform_indices = @transform_10, window_bounds = array<i64: 2, 1, 32>}, {pipeline_mode = #tpu.pipeline_mode<synchronous>, transform_indices = @transform_11, window_bounds = array<i64: 2, 1, 32>}, {pipeline_mode = #tpu.pipeline_mode<synchronous>, transform_indices = @transform_12, window_bounds = array<i64: 2, 32, 128>}, {pipeline_mode = #tpu.pipeline_mode<synchronous>, transform_indices = @transform_13, window_bounds = array<i64: 2, 64, 32>}, {pipeline_mode = #tpu.pipeline_mode<synchronous>, transform_indices = @transform_14, window_bounds = array<i64: 2, 1, 32>}, {pipeline_mode = #tpu.pipeline_mode<synchronous>, transform_indices = @transform_15, window_bounds = array<i64: 1, 32>}, {pipeline_mode = #tpu.pipeline_mode<synchronous>, transform_indices = @transform_16, window_bounds = array<i64: 1, 32>}, {pipeline_mode = #tpu.pipeline_mode<synchronous>, transform_indices = @transform_17, window_bounds = array<i64: 32, 128>}, {pipeline_mode = #tpu.pipeline_mode<synchronous>, transform_indices = @transform_18, window_bounds = array<i64: 1, 128>}, {pipeline_mode = #tpu.pipeline_mode<synchronous>, transform_indices = @transform_19, window_bounds = array<i64: 48, 128>}]} {
    %c0 = arith.constant 0 : index
    %c0_0 = arith.constant 0 : index
    %0 = vector.load %arg1[%c0, %c0_0] : memref<48x48xf32, #tpu.memory_space<vmem>>, vector<48x48xf32>
    %1 = arith.truncf %0 : vector<48x48xf32> to vector<48x48xbf16>
    %c0_1 = arith.constant 0 : index
    %c0_2 = arith.constant 0 : index
    %2 = vector.load %arg2[%c0_1, %c0_2] : memref<48x32xbf16, #tpu.memory_space<vmem>>, vector<48x32xbf16>
    %cst = arith.constant dense<0.000000e+00> : vector<48x32xf32>
    %3 = tpu.matmul %1, %2, %cst {dimension_numbers = #tpu.dot_dimension_numbers<[1], [0], [0], [1], [0, 0, 1, 1], [], []>} : vector<48x48xbf16>, vector<48x32xbf16>, vector<48x32xf32> -> vector<48x32xf32>
    %c0_3 = arith.constant 0 : index
    %c0_4 = arith.constant 0 : index
    %4 = vector.load %arg3[%c0_3, %c0_4] : memref<48x32xf32, #tpu.memory_space<vmem>>, vector<48x32xf32>
    %5 = arith.addf %3, %4 : vector<48x32xf32>
    %c0_5 = arith.constant 0 : index
    %c0_6 = arith.constant 0 : index
    %6 = vector.load %arg4[%c0_5, %c0_6] : memref<48x48xf32, #tpu.memory_space<vmem>>, vector<48x48xf32>
    %c0_7 = arith.constant 0 : index
    %c0_8 = arith.constant 0 : index
    %c0_9 = arith.constant 0 : index
    %7 = vector.load %arg5[%c0_7, %c0_8, %c0_9] : memref<2x1x32xf32, #tpu.memory_space<vmem>>, vector<1x1x32xf32>
    %8 = vector.shape_cast %7 : vector<1x1x32xf32> to vector<1x32xf32>
    %c0_10 = arith.constant 0 : index
    %c0_11 = arith.constant 0 : index
    %c0_12 = arith.constant 0 : index
    %9 = vector.load %arg6[%c0_10, %c0_11, %c0_12] : memref<2x1x32xf32, #tpu.memory_space<vmem>>, vector<1x1x32xf32>
    %10 = vector.shape_cast %9 : vector<1x1x32xf32> to vector<1x32xf32>
    %cst_13 = arith.constant dense<0.000000e+00> : vector<48xf32>
    %11 = vector.multi_reduction <add>, %5, %cst_13 [1] : vector<48x32xf32> to vector<48xf32>
    %12 = vector.shape_cast %11 : vector<48xf32> to vector<48x1xf32>
    %cst_14 = arith.constant 3.200000e+01 : f32
    %13 = vector.broadcast %cst_14 : f32 to vector<48x1xf32>
    %14 = arith.divf %12, %13 : vector<48x1xf32>
    %15 = vector.broadcast %14 : vector<48x1xf32> to vector<48x32xf32>
    %16 = arith.subf %5, %15 : vector<48x32xf32>
    %17 = arith.mulf %16, %16 : vector<48x32xf32>
    %cst_15 = arith.constant dense<0.000000e+00> : vector<48xf32>
    %18 = vector.multi_reduction <add>, %17, %cst_15 [1] : vector<48x32xf32> to vector<48xf32>
    %19 = vector.shape_cast %18 : vector<48xf32> to vector<48x1xf32>
    %cst_16 = arith.constant 3.200000e+01 : f32
    %20 = vector.broadcast %cst_16 : f32 to vector<48x1xf32>
    %21 = arith.divf %19, %20 : vector<48x1xf32>
    %cst_17 = arith.constant 9.99999997E-7 : f32
    %22 = vector.broadcast %cst_17 : f32 to vector<48x1xf32>
    %23 = arith.addf %21, %22 : vector<48x1xf32>
    %24 = math.rsqrt %23 : vector<48x1xf32>
    %25 = vector.broadcast %24 : vector<48x1xf32> to vector<48x32xf32>
    %26 = arith.mulf %16, %25 : vector<48x32xf32>
    %27 = vector.broadcast %8 : vector<1x32xf32> to vector<48x32xf32>
    %28 = arith.mulf %26, %27 : vector<48x32xf32>
    %29 = vector.broadcast %10 : vector<1x32xf32> to vector<48x32xf32>
    %30 = arith.addf %28, %29 : vector<48x32xf32>
    %31 = arith.truncf %30 : vector<48x32xf32> to vector<48x32xbf16>
    %c0_18 = arith.constant 0 : index
    %c0_19 = arith.constant 0 : index
    %c0_20 = arith.constant 0 : index
    %32 = vector.load %arg7[%c0_18, %c0_19, %c0_20] : memref<2x32x96xbf16, #tpu.memory_space<vmem>>, vector<1x32x96xbf16>
    %33 = vector.shape_cast %32 : vector<1x32x96xbf16> to vector<32x96xbf16>
    %cst_21 = arith.constant dense<0.000000e+00> : vector<48x96xf32>
    %34 = tpu.matmul %31, %33, %cst_21 {dimension_numbers = #tpu.dot_dimension_numbers<[1], [0], [0], [1], [0, 0, 1, 1], [], []>} : vector<48x32xbf16>, vector<32x96xbf16>, vector<48x96xf32> -> vector<48x96xf32>
    %c0_22 = arith.constant 0 : index
    %c0_23 = arith.constant 0 : index
    %c0_24 = arith.constant 0 : index
    %35 = vector.load %arg8[%c0_22, %c0_23, %c0_24] : memref<2x1x96xf32, #tpu.memory_space<vmem>>, vector<1x1x96xf32>
    %36 = vector.shape_cast %35 : vector<1x1x96xf32> to vector<1x96xf32>
    %37 = vector.broadcast %36 : vector<1x96xf32> to vector<48x96xf32>
    %38 = arith.addf %34, %37 : vector<48x96xf32>
    %cst_25 = arith.constant 0.000000e+00 : f32
    %39 = vector.broadcast %cst_25 : f32 to vector<48x32xf32>
    %40 = vector.extract_strided_slice %38 {offsets = [0, 0], sizes = [48, 8], strides = [1, 1]} : vector<48x96xf32> to vector<48x8xf32>
    %41 = arith.truncf %40 : vector<48x8xf32> to vector<48x8xbf16>
    %42 = vector.extract_strided_slice %38 {offsets = [0, 32], sizes = [48, 8], strides = [1, 1]} : vector<48x96xf32> to vector<48x8xf32>
    %43 = arith.truncf %42 : vector<48x8xf32> to vector<48x8xbf16>
    %44 = vector.extract_strided_slice %38 {offsets = [0, 64], sizes = [48, 8], strides = [1, 1]} : vector<48x96xf32> to vector<48x8xf32>
    %45 = arith.truncf %44 : vector<48x8xf32> to vector<48x8xbf16>
    %cst_26 = arith.constant dense<0.000000e+00> : vector<48x48xf32>
    %46 = tpu.matmul %41, %43, %cst_26 {dimension_numbers = #tpu.dot_dimension_numbers<[1], [1], [0], [0], [0, 0, 1, 0], [], []>} : vector<48x8xbf16>, vector<48x8xbf16>, vector<48x48xf32> -> vector<48x48xf32>
    %47 = arith.addf %46, %6 : vector<48x48xf32>
    %cst_27 = arith.constant dense<0xFF800000> : vector<48xf32>
    %48 = vector.multi_reduction <maximumf>, %47, %cst_27 [1] : vector<48x48xf32> to vector<48xf32>
    %49 = vector.shape_cast %48 : vector<48xf32> to vector<48x1xf32>
    %50 = vector.broadcast %49 : vector<48x1xf32> to vector<48x48xf32>
    %51 = arith.subf %47, %50 : vector<48x48xf32>
    %52 = math.exp %51 : vector<48x48xf32>
    %cst_28 = arith.constant dense<0.000000e+00> : vector<48xf32>
    %53 = vector.multi_reduction <add>, %52, %cst_28 [1] : vector<48x48xf32> to vector<48xf32>
    %54 = vector.shape_cast %53 : vector<48xf32> to vector<48x1xf32>
    %55 = tpu.reciprocal %54 {approx = true} : vector<48x1xf32> -> vector<48x1xf32>
    %56 = vector.broadcast %55 : vector<48x1xf32> to vector<48x48xf32>
    %57 = arith.mulf %52, %56 : vector<48x48xf32>
    %58 = arith.truncf %57 : vector<48x48xf32> to vector<48x48xbf16>
    %cst_29 = arith.constant dense<0.000000e+00> : vector<48x8xf32>
    %59 = tpu.matmul %58, %45, %cst_29 {dimension_numbers = #tpu.dot_dimension_numbers<[1], [0], [0], [1], [0, 0, 1, 1], [], []>} : vector<48x48xbf16>, vector<48x8xbf16>, vector<48x8xf32> -> vector<48x8xf32>
    %c0_30 = arith.constant 0 : index
    %c0_31 = arith.constant 0 : index
    %c0_32 = arith.constant 0 : index
    %60 = vector.load %arg9[%c0_30, %c0_31, %c0_32] : memref<8x8x32xbf16, #tpu.memory_space<vmem>>, vector<1x8x32xbf16>
    %61 = vector.shape_cast %60 : vector<1x8x32xbf16> to vector<8x32xbf16>
    %62 = arith.truncf %59 : vector<48x8xf32> to vector<48x8xbf16>
    %cst_33 = arith.constant dense<0.000000e+00> : vector<48x32xf32>
    %63 = tpu.matmul %62, %61, %cst_33 {dimension_numbers = #tpu.dot_dimension_numbers<[1], [0], [0], [1], [0, 0, 1, 1], [], []>} : vector<48x8xbf16>, vector<8x32xbf16>, vector<48x32xf32> -> vector<48x32xf32>
    %64 = arith.addf %39, %63 : vector<48x32xf32>
    %65 = vector.extract_strided_slice %38 {offsets = [0, 8], sizes = [48, 8], strides = [1, 1]} : vector<48x96xf32> to vector<48x8xf32>
    %66 = arith.truncf %65 : vector<48x8xf32> to vector<48x8xbf16>
    %67 = vector.extract_strided_slice %38 {offsets = [0, 40], sizes = [48, 8], strides = [1, 1]} : vector<48x96xf32> to vector<48x8xf32>
    %68 = arith.truncf %67 : vector<48x8xf32> to vector<48x8xbf16>
    %69 = vector.extract_strided_slice %38 {offsets = [0, 72], sizes = [48, 8], strides = [1, 1]} : vector<48x96xf32> to vector<48x8xf32>
    %70 = arith.truncf %69 : vector<48x8xf32> to vector<48x8xbf16>
    %cst_34 = arith.constant dense<0.000000e+00> : vector<48x48xf32>
    %71 = tpu.matmul %66, %68, %cst_34 {dimension_numbers = #tpu.dot_dimension_numbers<[1], [1], [0], [0], [0, 0, 1, 0], [], []>} : vector<48x8xbf16>, vector<48x8xbf16>, vector<48x48xf32> -> vector<48x48xf32>
    %72 = arith.addf %71, %6 : vector<48x48xf32>
    %cst_35 = arith.constant dense<0xFF800000> : vector<48xf32>
    %73 = vector.multi_reduction <maximumf>, %72, %cst_35 [1] : vector<48x48xf32> to vector<48xf32>
    %74 = vector.shape_cast %73 : vector<48xf32> to vector<48x1xf32>
    %75 = vector.broadcast %74 : vector<48x1xf32> to vector<48x48xf32>
    %76 = arith.subf %72, %75 : vector<48x48xf32>
    %77 = math.exp %76 : vector<48x48xf32>
    %cst_36 = arith.constant dense<0.000000e+00> : vector<48xf32>
    %78 = vector.multi_reduction <add>, %77, %cst_36 [1] : vector<48x48xf32> to vector<48xf32>
    %79 = vector.shape_cast %78 : vector<48xf32> to vector<48x1xf32>
    %80 = tpu.reciprocal %79 {approx = true} : vector<48x1xf32> -> vector<48x1xf32>
    %81 = vector.broadcast %80 : vector<48x1xf32> to vector<48x48xf32>
    %82 = arith.mulf %77, %81 : vector<48x48xf32>
    %83 = arith.truncf %82 : vector<48x48xf32> to vector<48x48xbf16>
    %cst_37 = arith.constant dense<0.000000e+00> : vector<48x8xf32>
    %84 = tpu.matmul %83, %70, %cst_37 {dimension_numbers = #tpu.dot_dimension_numbers<[1], [0], [0], [1], [0, 0, 1, 1], [], []>} : vector<48x48xbf16>, vector<48x8xbf16>, vector<48x8xf32> -> vector<48x8xf32>
    %c1 = arith.constant 1 : index
    %c0_38 = arith.constant 0 : index
    %c0_39 = arith.constant 0 : index
    %85 = vector.load %arg9[%c1, %c0_38, %c0_39] : memref<8x8x32xbf16, #tpu.memory_space<vmem>>, vector<1x8x32xbf16>
    %86 = vector.shape_cast %85 : vector<1x8x32xbf16> to vector<8x32xbf16>
    %87 = arith.truncf %84 : vector<48x8xf32> to vector<48x8xbf16>
    %cst_40 = arith.constant dense<0.000000e+00> : vector<48x32xf32>
    %88 = tpu.matmul %87, %86, %cst_40 {dimension_numbers = #tpu.dot_dimension_numbers<[1], [0], [0], [1], [0, 0, 1, 1], [], []>} : vector<48x8xbf16>, vector<8x32xbf16>, vector<48x32xf32> -> vector<48x32xf32>
    %89 = arith.addf %64, %88 : vector<48x32xf32>
    %90 = vector.extract_strided_slice %38 {offsets = [0, 16], sizes = [48, 8], strides = [1, 1]} : vector<48x96xf32> to vector<48x8xf32>
    %91 = arith.truncf %90 : vector<48x8xf32> to vector<48x8xbf16>
    %92 = vector.extract_strided_slice %38 {offsets = [0, 48], sizes = [48, 8], strides = [1, 1]} : vector<48x96xf32> to vector<48x8xf32>
    %93 = arith.truncf %92 : vector<48x8xf32> to vector<48x8xbf16>
    %94 = vector.extract_strided_slice %38 {offsets = [0, 80], sizes = [48, 8], strides = [1, 1]} : vector<48x96xf32> to vector<48x8xf32>
    %95 = arith.truncf %94 : vector<48x8xf32> to vector<48x8xbf16>
    %cst_41 = arith.constant dense<0.000000e+00> : vector<48x48xf32>
    %96 = tpu.matmul %91, %93, %cst_41 {dimension_numbers = #tpu.dot_dimension_numbers<[1], [1], [0], [0], [0, 0, 1, 0], [], []>} : vector<48x8xbf16>, vector<48x8xbf16>, vector<48x48xf32> -> vector<48x48xf32>
    %97 = arith.addf %96, %6 : vector<48x48xf32>
    %cst_42 = arith.constant dense<0xFF800000> : vector<48xf32>
    %98 = vector.multi_reduction <maximumf>, %97, %cst_42 [1] : vector<48x48xf32> to vector<48xf32>
    %99 = vector.shape_cast %98 : vector<48xf32> to vector<48x1xf32>
    %100 = vector.broadcast %99 : vector<48x1xf32> to vector<48x48xf32>
    %101 = arith.subf %97, %100 : vector<48x48xf32>
    %102 = math.exp %101 : vector<48x48xf32>
    %cst_43 = arith.constant dense<0.000000e+00> : vector<48xf32>
    %103 = vector.multi_reduction <add>, %102, %cst_43 [1] : vector<48x48xf32> to vector<48xf32>
    %104 = vector.shape_cast %103 : vector<48xf32> to vector<48x1xf32>
    %105 = tpu.reciprocal %104 {approx = true} : vector<48x1xf32> -> vector<48x1xf32>
    %106 = vector.broadcast %105 : vector<48x1xf32> to vector<48x48xf32>
    %107 = arith.mulf %102, %106 : vector<48x48xf32>
    %108 = arith.truncf %107 : vector<48x48xf32> to vector<48x48xbf16>
    %cst_44 = arith.constant dense<0.000000e+00> : vector<48x8xf32>
    %109 = tpu.matmul %108, %95, %cst_44 {dimension_numbers = #tpu.dot_dimension_numbers<[1], [0], [0], [1], [0, 0, 1, 1], [], []>} : vector<48x48xbf16>, vector<48x8xbf16>, vector<48x8xf32> -> vector<48x8xf32>
    %c2 = arith.constant 2 : index
    %c0_45 = arith.constant 0 : index
    %c0_46 = arith.constant 0 : index
    %110 = vector.load %arg9[%c2, %c0_45, %c0_46] : memref<8x8x32xbf16, #tpu.memory_space<vmem>>, vector<1x8x32xbf16>
    %111 = vector.shape_cast %110 : vector<1x8x32xbf16> to vector<8x32xbf16>
    %112 = arith.truncf %109 : vector<48x8xf32> to vector<48x8xbf16>
    %cst_47 = arith.constant dense<0.000000e+00> : vector<48x32xf32>
    %113 = tpu.matmul %112, %111, %cst_47 {dimension_numbers = #tpu.dot_dimension_numbers<[1], [0], [0], [1], [0, 0, 1, 1], [], []>} : vector<48x8xbf16>, vector<8x32xbf16>, vector<48x32xf32> -> vector<48x32xf32>
    %114 = arith.addf %89, %113 : vector<48x32xf32>
    %115 = vector.extract_strided_slice %38 {offsets = [0, 24], sizes = [48, 8], strides = [1, 1]} : vector<48x96xf32> to vector<48x8xf32>
    %116 = arith.truncf %115 : vector<48x8xf32> to vector<48x8xbf16>
    %117 = vector.extract_strided_slice %38 {offsets = [0, 56], sizes = [48, 8], strides = [1, 1]} : vector<48x96xf32> to vector<48x8xf32>
    %118 = arith.truncf %117 : vector<48x8xf32> to vector<48x8xbf16>
    %119 = vector.extract_strided_slice %38 {offsets = [0, 88], sizes = [48, 8], strides = [1, 1]} : vector<48x96xf32> to vector<48x8xf32>
    %120 = arith.truncf %119 : vector<48x8xf32> to vector<48x8xbf16>
    %cst_48 = arith.constant dense<0.000000e+00> : vector<48x48xf32>
    %121 = tpu.matmul %116, %118, %cst_48 {dimension_numbers = #tpu.dot_dimension_numbers<[1], [1], [0], [0], [0, 0, 1, 0], [], []>} : vector<48x8xbf16>, vector<48x8xbf16>, vector<48x48xf32> -> vector<48x48xf32>
    %122 = arith.addf %121, %6 : vector<48x48xf32>
    %cst_49 = arith.constant dense<0xFF800000> : vector<48xf32>
    %123 = vector.multi_reduction <maximumf>, %122, %cst_49 [1] : vector<48x48xf32> to vector<48xf32>
    %124 = vector.shape_cast %123 : vector<48xf32> to vector<48x1xf32>
    %125 = vector.broadcast %124 : vector<48x1xf32> to vector<48x48xf32>
    %126 = arith.subf %122, %125 : vector<48x48xf32>
    %127 = math.exp %126 : vector<48x48xf32>
    %cst_50 = arith.constant dense<0.000000e+00> : vector<48xf32>
    %128 = vector.multi_reduction <add>, %127, %cst_50 [1] : vector<48x48xf32> to vector<48xf32>
    %129 = vector.shape_cast %128 : vector<48xf32> to vector<48x1xf32>
    %130 = tpu.reciprocal %129 {approx = true} : vector<48x1xf32> -> vector<48x1xf32>
    %131 = vector.broadcast %130 : vector<48x1xf32> to vector<48x48xf32>
    %132 = arith.mulf %127, %131 : vector<48x48xf32>
    %133 = arith.truncf %132 : vector<48x48xf32> to vector<48x48xbf16>
    %cst_51 = arith.constant dense<0.000000e+00> : vector<48x8xf32>
    %134 = tpu.matmul %133, %120, %cst_51 {dimension_numbers = #tpu.dot_dimension_numbers<[1], [0], [0], [1], [0, 0, 1, 1], [], []>} : vector<48x48xbf16>, vector<48x8xbf16>, vector<48x8xf32> -> vector<48x8xf32>
    %c3 = arith.constant 3 : index
    %c0_52 = arith.constant 0 : index
    %c0_53 = arith.constant 0 : index
    %135 = vector.load %arg9[%c3, %c0_52, %c0_53] : memref<8x8x32xbf16, #tpu.memory_space<vmem>>, vector<1x8x32xbf16>
    %136 = vector.shape_cast %135 : vector<1x8x32xbf16> to vector<8x32xbf16>
    %137 = arith.truncf %134 : vector<48x8xf32> to vector<48x8xbf16>
    %cst_54 = arith.constant dense<0.000000e+00> : vector<48x32xf32>
    %138 = tpu.matmul %137, %136, %cst_54 {dimension_numbers = #tpu.dot_dimension_numbers<[1], [0], [0], [1], [0, 0, 1, 1], [], []>} : vector<48x8xbf16>, vector<8x32xbf16>, vector<48x32xf32> -> vector<48x32xf32>
    %139 = arith.addf %114, %138 : vector<48x32xf32>
    %140 = arith.addf %5, %139 : vector<48x32xf32>
    %c0_55 = arith.constant 0 : index
    %c0_56 = arith.constant 0 : index
    %c0_57 = arith.constant 0 : index
    %141 = vector.load %arg10[%c0_55, %c0_56, %c0_57] : memref<2x1x32xf32, #tpu.memory_space<vmem>>, vector<1x1x32xf32>
    %142 = vector.shape_cast %141 : vector<1x1x32xf32> to vector<1x32xf32>
    %143 = vector.broadcast %142 : vector<1x32xf32> to vector<48x32xf32>
    %144 = arith.addf %140, %143 : vector<48x32xf32>
    %c0_58 = arith.constant 0 : index
    %c0_59 = arith.constant 0 : index
    %c0_60 = arith.constant 0 : index
    %145 = vector.load %arg11[%c0_58, %c0_59, %c0_60] : memref<2x1x32xf32, #tpu.memory_space<vmem>>, vector<1x1x32xf32>
    %146 = vector.shape_cast %145 : vector<1x1x32xf32> to vector<1x32xf32>
    %c0_61 = arith.constant 0 : index
    %c0_62 = arith.constant 0 : index
    %c0_63 = arith.constant 0 : index
    %147 = vector.load %arg12[%c0_61, %c0_62, %c0_63] : memref<2x1x32xf32, #tpu.memory_space<vmem>>, vector<1x1x32xf32>
    %148 = vector.shape_cast %147 : vector<1x1x32xf32> to vector<1x32xf32>
    %cst_64 = arith.constant dense<0.000000e+00> : vector<48xf32>
    %149 = vector.multi_reduction <add>, %144, %cst_64 [1] : vector<48x32xf32> to vector<48xf32>
    %150 = vector.shape_cast %149 : vector<48xf32> to vector<48x1xf32>
    %cst_65 = arith.constant 3.200000e+01 : f32
    %151 = vector.broadcast %cst_65 : f32 to vector<48x1xf32>
    %152 = arith.divf %150, %151 : vector<48x1xf32>
    %153 = vector.broadcast %152 : vector<48x1xf32> to vector<48x32xf32>
    %154 = arith.subf %144, %153 : vector<48x32xf32>
    %155 = arith.mulf %154, %154 : vector<48x32xf32>
    %cst_66 = arith.constant dense<0.000000e+00> : vector<48xf32>
    %156 = vector.multi_reduction <add>, %155, %cst_66 [1] : vector<48x32xf32> to vector<48xf32>
    %157 = vector.shape_cast %156 : vector<48xf32> to vector<48x1xf32>
    %cst_67 = arith.constant 3.200000e+01 : f32
    %158 = vector.broadcast %cst_67 : f32 to vector<48x1xf32>
    %159 = arith.divf %157, %158 : vector<48x1xf32>
    %cst_68 = arith.constant 9.99999997E-7 : f32
    %160 = vector.broadcast %cst_68 : f32 to vector<48x1xf32>
    %161 = arith.addf %159, %160 : vector<48x1xf32>
    %162 = math.rsqrt %161 : vector<48x1xf32>
    %163 = vector.broadcast %162 : vector<48x1xf32> to vector<48x32xf32>
    %164 = arith.mulf %154, %163 : vector<48x32xf32>
    %165 = vector.broadcast %146 : vector<1x32xf32> to vector<48x32xf32>
    %166 = arith.mulf %164, %165 : vector<48x32xf32>
    %167 = vector.broadcast %148 : vector<1x32xf32> to vector<48x32xf32>
    %168 = arith.addf %166, %167 : vector<48x32xf32>
    %169 = arith.truncf %168 : vector<48x32xf32> to vector<48x32xbf16>
    %c0_69 = arith.constant 0 : index
    %c0_70 = arith.constant 0 : index
    %c0_71 = arith.constant 0 : index
    %170 = vector.load %arg13[%c0_69, %c0_70, %c0_71] : memref<2x32x128xbf16, #tpu.memory_space<vmem>>, vector<1x32x128xbf16>
    %171 = vector.shape_cast %170 : vector<1x32x128xbf16> to vector<32x128xbf16>
    %cst_72 = arith.constant dense<0.000000e+00> : vector<48x128xf32>
    %172 = tpu.matmul %169, %171, %cst_72 {dimension_numbers = #tpu.dot_dimension_numbers<[1], [0], [0], [1], [0, 0, 1, 1], [], []>} : vector<48x32xbf16>, vector<32x128xbf16>, vector<48x128xf32> -> vector<48x128xf32>
    %173 = vector.extract_strided_slice %172 {offsets = [0, 0], sizes = [48, 64], strides = [1, 1]} : vector<48x128xf32> to vector<48x64xf32>
    %174 = vector.extract_strided_slice %172 {offsets = [0, 64], sizes = [48, 64], strides = [1, 1]} : vector<48x128xf32> to vector<48x64xf32>
    %175 = arith.negf %173 : vector<48x64xf32>
    %176 = math.exp %175 : vector<48x64xf32>
    %cst_73 = arith.constant 1.000000e+00 : f32
    %177 = vector.broadcast %cst_73 : f32 to vector<48x64xf32>
    %178 = arith.addf %177, %176 : vector<48x64xf32>
    %179 = arith.divf %177, %178 : vector<48x64xf32>
    %180 = arith.mulf %173, %179 : vector<48x64xf32>
    %181 = arith.mulf %180, %174 : vector<48x64xf32>
    %182 = arith.truncf %181 : vector<48x64xf32> to vector<48x64xbf16>
    %c0_74 = arith.constant 0 : index
    %c0_75 = arith.constant 0 : index
    %c0_76 = arith.constant 0 : index
    %183 = vector.load %arg14[%c0_74, %c0_75, %c0_76] : memref<2x64x32xbf16, #tpu.memory_space<vmem>>, vector<1x64x32xbf16>
    %184 = vector.shape_cast %183 : vector<1x64x32xbf16> to vector<64x32xbf16>
    %cst_77 = arith.constant dense<0.000000e+00> : vector<48x32xf32>
    %185 = tpu.matmul %182, %184, %cst_77 {dimension_numbers = #tpu.dot_dimension_numbers<[1], [0], [0], [1], [0, 0, 1, 1], [], []>} : vector<48x64xbf16>, vector<64x32xbf16>, vector<48x32xf32> -> vector<48x32xf32>
    %186 = arith.addf %144, %185 : vector<48x32xf32>
    %c0_78 = arith.constant 0 : index
    %c0_79 = arith.constant 0 : index
    %c0_80 = arith.constant 0 : index
    %187 = vector.load %arg15[%c0_78, %c0_79, %c0_80] : memref<2x1x32xf32, #tpu.memory_space<vmem>>, vector<1x1x32xf32>
    %188 = vector.shape_cast %187 : vector<1x1x32xf32> to vector<1x32xf32>
    %189 = vector.broadcast %188 : vector<1x32xf32> to vector<48x32xf32>
    %190 = arith.addf %186, %189 : vector<48x32xf32>
    %c1_81 = arith.constant 1 : index
    %c0_82 = arith.constant 0 : index
    %c0_83 = arith.constant 0 : index
    %191 = vector.load %arg5[%c1_81, %c0_82, %c0_83] : memref<2x1x32xf32, #tpu.memory_space<vmem>>, vector<1x1x32xf32>
    %192 = vector.shape_cast %191 : vector<1x1x32xf32> to vector<1x32xf32>
    %c1_84 = arith.constant 1 : index
    %c0_85 = arith.constant 0 : index
    %c0_86 = arith.constant 0 : index
    %193 = vector.load %arg6[%c1_84, %c0_85, %c0_86] : memref<2x1x32xf32, #tpu.memory_space<vmem>>, vector<1x1x32xf32>
    %194 = vector.shape_cast %193 : vector<1x1x32xf32> to vector<1x32xf32>
    %cst_87 = arith.constant dense<0.000000e+00> : vector<48xf32>
    %195 = vector.multi_reduction <add>, %190, %cst_87 [1] : vector<48x32xf32> to vector<48xf32>
    %196 = vector.shape_cast %195 : vector<48xf32> to vector<48x1xf32>
    %cst_88 = arith.constant 3.200000e+01 : f32
    %197 = vector.broadcast %cst_88 : f32 to vector<48x1xf32>
    %198 = arith.divf %196, %197 : vector<48x1xf32>
    %199 = vector.broadcast %198 : vector<48x1xf32> to vector<48x32xf32>
    %200 = arith.subf %190, %199 : vector<48x32xf32>
    %201 = arith.mulf %200, %200 : vector<48x32xf32>
    %cst_89 = arith.constant dense<0.000000e+00> : vector<48xf32>
    %202 = vector.multi_reduction <add>, %201, %cst_89 [1] : vector<48x32xf32> to vector<48xf32>
    %203 = vector.shape_cast %202 : vector<48xf32> to vector<48x1xf32>
    %cst_90 = arith.constant 3.200000e+01 : f32
    %204 = vector.broadcast %cst_90 : f32 to vector<48x1xf32>
    %205 = arith.divf %203, %204 : vector<48x1xf32>
    %cst_91 = arith.constant 9.99999997E-7 : f32
    %206 = vector.broadcast %cst_91 : f32 to vector<48x1xf32>
    %207 = arith.addf %205, %206 : vector<48x1xf32>
    %208 = math.rsqrt %207 : vector<48x1xf32>
    %209 = vector.broadcast %208 : vector<48x1xf32> to vector<48x32xf32>
    %210 = arith.mulf %200, %209 : vector<48x32xf32>
    %211 = vector.broadcast %192 : vector<1x32xf32> to vector<48x32xf32>
    %212 = arith.mulf %210, %211 : vector<48x32xf32>
    %213 = vector.broadcast %194 : vector<1x32xf32> to vector<48x32xf32>
    %214 = arith.addf %212, %213 : vector<48x32xf32>
    %215 = arith.truncf %214 : vector<48x32xf32> to vector<48x32xbf16>
    %c1_92 = arith.constant 1 : index
    %c0_93 = arith.constant 0 : index
    %c0_94 = arith.constant 0 : index
    %216 = vector.load %arg7[%c1_92, %c0_93, %c0_94] : memref<2x32x96xbf16, #tpu.memory_space<vmem>>, vector<1x32x96xbf16>
    %217 = vector.shape_cast %216 : vector<1x32x96xbf16> to vector<32x96xbf16>
    %cst_95 = arith.constant dense<0.000000e+00> : vector<48x96xf32>
    %218 = tpu.matmul %215, %217, %cst_95 {dimension_numbers = #tpu.dot_dimension_numbers<[1], [0], [0], [1], [0, 0, 1, 1], [], []>} : vector<48x32xbf16>, vector<32x96xbf16>, vector<48x96xf32> -> vector<48x96xf32>
    %c1_96 = arith.constant 1 : index
    %c0_97 = arith.constant 0 : index
    %c0_98 = arith.constant 0 : index
    %219 = vector.load %arg8[%c1_96, %c0_97, %c0_98] : memref<2x1x96xf32, #tpu.memory_space<vmem>>, vector<1x1x96xf32>
    %220 = vector.shape_cast %219 : vector<1x1x96xf32> to vector<1x96xf32>
    %221 = vector.broadcast %220 : vector<1x96xf32> to vector<48x96xf32>
    %222 = arith.addf %218, %221 : vector<48x96xf32>
    %cst_99 = arith.constant 0.000000e+00 : f32
    %223 = vector.broadcast %cst_99 : f32 to vector<48x32xf32>
    %224 = vector.extract_strided_slice %222 {offsets = [0, 0], sizes = [48, 8], strides = [1, 1]} : vector<48x96xf32> to vector<48x8xf32>
    %225 = arith.truncf %224 : vector<48x8xf32> to vector<48x8xbf16>
    %226 = vector.extract_strided_slice %222 {offsets = [0, 32], sizes = [48, 8], strides = [1, 1]} : vector<48x96xf32> to vector<48x8xf32>
    %227 = arith.truncf %226 : vector<48x8xf32> to vector<48x8xbf16>
    %228 = vector.extract_strided_slice %222 {offsets = [0, 64], sizes = [48, 8], strides = [1, 1]} : vector<48x96xf32> to vector<48x8xf32>
    %229 = arith.truncf %228 : vector<48x8xf32> to vector<48x8xbf16>
    %cst_100 = arith.constant dense<0.000000e+00> : vector<48x48xf32>
    %230 = tpu.matmul %225, %227, %cst_100 {dimension_numbers = #tpu.dot_dimension_numbers<[1], [1], [0], [0], [0, 0, 1, 0], [], []>} : vector<48x8xbf16>, vector<48x8xbf16>, vector<48x48xf32> -> vector<48x48xf32>
    %231 = arith.addf %230, %6 : vector<48x48xf32>
    %cst_101 = arith.constant dense<0xFF800000> : vector<48xf32>
    %232 = vector.multi_reduction <maximumf>, %231, %cst_101 [1] : vector<48x48xf32> to vector<48xf32>
    %233 = vector.shape_cast %232 : vector<48xf32> to vector<48x1xf32>
    %234 = vector.broadcast %233 : vector<48x1xf32> to vector<48x48xf32>
    %235 = arith.subf %231, %234 : vector<48x48xf32>
    %236 = math.exp %235 : vector<48x48xf32>
    %cst_102 = arith.constant dense<0.000000e+00> : vector<48xf32>
    %237 = vector.multi_reduction <add>, %236, %cst_102 [1] : vector<48x48xf32> to vector<48xf32>
    %238 = vector.shape_cast %237 : vector<48xf32> to vector<48x1xf32>
    %239 = tpu.reciprocal %238 {approx = true} : vector<48x1xf32> -> vector<48x1xf32>
    %240 = vector.broadcast %239 : vector<48x1xf32> to vector<48x48xf32>
    %241 = arith.mulf %236, %240 : vector<48x48xf32>
    %242 = arith.truncf %241 : vector<48x48xf32> to vector<48x48xbf16>
    %cst_103 = arith.constant dense<0.000000e+00> : vector<48x8xf32>
    %243 = tpu.matmul %242, %229, %cst_103 {dimension_numbers = #tpu.dot_dimension_numbers<[1], [0], [0], [1], [0, 0, 1, 1], [], []>} : vector<48x48xbf16>, vector<48x8xbf16>, vector<48x8xf32> -> vector<48x8xf32>
    %c4 = arith.constant 4 : index
    %c0_104 = arith.constant 0 : index
    %c0_105 = arith.constant 0 : index
    %244 = vector.load %arg9[%c4, %c0_104, %c0_105] : memref<8x8x32xbf16, #tpu.memory_space<vmem>>, vector<1x8x32xbf16>
    %245 = vector.shape_cast %244 : vector<1x8x32xbf16> to vector<8x32xbf16>
    %246 = arith.truncf %243 : vector<48x8xf32> to vector<48x8xbf16>
    %cst_106 = arith.constant dense<0.000000e+00> : vector<48x32xf32>
    %247 = tpu.matmul %246, %245, %cst_106 {dimension_numbers = #tpu.dot_dimension_numbers<[1], [0], [0], [1], [0, 0, 1, 1], [], []>} : vector<48x8xbf16>, vector<8x32xbf16>, vector<48x32xf32> -> vector<48x32xf32>
    %248 = arith.addf %223, %247 : vector<48x32xf32>
    %249 = vector.extract_strided_slice %222 {offsets = [0, 8], sizes = [48, 8], strides = [1, 1]} : vector<48x96xf32> to vector<48x8xf32>
    %250 = arith.truncf %249 : vector<48x8xf32> to vector<48x8xbf16>
    %251 = vector.extract_strided_slice %222 {offsets = [0, 40], sizes = [48, 8], strides = [1, 1]} : vector<48x96xf32> to vector<48x8xf32>
    %252 = arith.truncf %251 : vector<48x8xf32> to vector<48x8xbf16>
    %253 = vector.extract_strided_slice %222 {offsets = [0, 72], sizes = [48, 8], strides = [1, 1]} : vector<48x96xf32> to vector<48x8xf32>
    %254 = arith.truncf %253 : vector<48x8xf32> to vector<48x8xbf16>
    %cst_107 = arith.constant dense<0.000000e+00> : vector<48x48xf32>
    %255 = tpu.matmul %250, %252, %cst_107 {dimension_numbers = #tpu.dot_dimension_numbers<[1], [1], [0], [0], [0, 0, 1, 0], [], []>} : vector<48x8xbf16>, vector<48x8xbf16>, vector<48x48xf32> -> vector<48x48xf32>
    %256 = arith.addf %255, %6 : vector<48x48xf32>
    %cst_108 = arith.constant dense<0xFF800000> : vector<48xf32>
    %257 = vector.multi_reduction <maximumf>, %256, %cst_108 [1] : vector<48x48xf32> to vector<48xf32>
    %258 = vector.shape_cast %257 : vector<48xf32> to vector<48x1xf32>
    %259 = vector.broadcast %258 : vector<48x1xf32> to vector<48x48xf32>
    %260 = arith.subf %256, %259 : vector<48x48xf32>
    %261 = math.exp %260 : vector<48x48xf32>
    %cst_109 = arith.constant dense<0.000000e+00> : vector<48xf32>
    %262 = vector.multi_reduction <add>, %261, %cst_109 [1] : vector<48x48xf32> to vector<48xf32>
    %263 = vector.shape_cast %262 : vector<48xf32> to vector<48x1xf32>
    %264 = tpu.reciprocal %263 {approx = true} : vector<48x1xf32> -> vector<48x1xf32>
    %265 = vector.broadcast %264 : vector<48x1xf32> to vector<48x48xf32>
    %266 = arith.mulf %261, %265 : vector<48x48xf32>
    %267 = arith.truncf %266 : vector<48x48xf32> to vector<48x48xbf16>
    %cst_110 = arith.constant dense<0.000000e+00> : vector<48x8xf32>
    %268 = tpu.matmul %267, %254, %cst_110 {dimension_numbers = #tpu.dot_dimension_numbers<[1], [0], [0], [1], [0, 0, 1, 1], [], []>} : vector<48x48xbf16>, vector<48x8xbf16>, vector<48x8xf32> -> vector<48x8xf32>
    %c5 = arith.constant 5 : index
    %c0_111 = arith.constant 0 : index
    %c0_112 = arith.constant 0 : index
    %269 = vector.load %arg9[%c5, %c0_111, %c0_112] : memref<8x8x32xbf16, #tpu.memory_space<vmem>>, vector<1x8x32xbf16>
    %270 = vector.shape_cast %269 : vector<1x8x32xbf16> to vector<8x32xbf16>
    %271 = arith.truncf %268 : vector<48x8xf32> to vector<48x8xbf16>
    %cst_113 = arith.constant dense<0.000000e+00> : vector<48x32xf32>
    %272 = tpu.matmul %271, %270, %cst_113 {dimension_numbers = #tpu.dot_dimension_numbers<[1], [0], [0], [1], [0, 0, 1, 1], [], []>} : vector<48x8xbf16>, vector<8x32xbf16>, vector<48x32xf32> -> vector<48x32xf32>
    %273 = arith.addf %248, %272 : vector<48x32xf32>
    %274 = vector.extract_strided_slice %222 {offsets = [0, 16], sizes = [48, 8], strides = [1, 1]} : vector<48x96xf32> to vector<48x8xf32>
    %275 = arith.truncf %274 : vector<48x8xf32> to vector<48x8xbf16>
    %276 = vector.extract_strided_slice %222 {offsets = [0, 48], sizes = [48, 8], strides = [1, 1]} : vector<48x96xf32> to vector<48x8xf32>
    %277 = arith.truncf %276 : vector<48x8xf32> to vector<48x8xbf16>
    %278 = vector.extract_strided_slice %222 {offsets = [0, 80], sizes = [48, 8], strides = [1, 1]} : vector<48x96xf32> to vector<48x8xf32>
    %279 = arith.truncf %278 : vector<48x8xf32> to vector<48x8xbf16>
    %cst_114 = arith.constant dense<0.000000e+00> : vector<48x48xf32>
    %280 = tpu.matmul %275, %277, %cst_114 {dimension_numbers = #tpu.dot_dimension_numbers<[1], [1], [0], [0], [0, 0, 1, 0], [], []>} : vector<48x8xbf16>, vector<48x8xbf16>, vector<48x48xf32> -> vector<48x48xf32>
    %281 = arith.addf %280, %6 : vector<48x48xf32>
    %cst_115 = arith.constant dense<0xFF800000> : vector<48xf32>
    %282 = vector.multi_reduction <maximumf>, %281, %cst_115 [1] : vector<48x48xf32> to vector<48xf32>
    %283 = vector.shape_cast %282 : vector<48xf32> to vector<48x1xf32>
    %284 = vector.broadcast %283 : vector<48x1xf32> to vector<48x48xf32>
    %285 = arith.subf %281, %284 : vector<48x48xf32>
    %286 = math.exp %285 : vector<48x48xf32>
    %cst_116 = arith.constant dense<0.000000e+00> : vector<48xf32>
    %287 = vector.multi_reduction <add>, %286, %cst_116 [1] : vector<48x48xf32> to vector<48xf32>
    %288 = vector.shape_cast %287 : vector<48xf32> to vector<48x1xf32>
    %289 = tpu.reciprocal %288 {approx = true} : vector<48x1xf32> -> vector<48x1xf32>
    %290 = vector.broadcast %289 : vector<48x1xf32> to vector<48x48xf32>
    %291 = arith.mulf %286, %290 : vector<48x48xf32>
    %292 = arith.truncf %291 : vector<48x48xf32> to vector<48x48xbf16>
    %cst_117 = arith.constant dense<0.000000e+00> : vector<48x8xf32>
    %293 = tpu.matmul %292, %279, %cst_117 {dimension_numbers = #tpu.dot_dimension_numbers<[1], [0], [0], [1], [0, 0, 1, 1], [], []>} : vector<48x48xbf16>, vector<48x8xbf16>, vector<48x8xf32> -> vector<48x8xf32>
    %c6 = arith.constant 6 : index
    %c0_118 = arith.constant 0 : index
    %c0_119 = arith.constant 0 : index
    %294 = vector.load %arg9[%c6, %c0_118, %c0_119] : memref<8x8x32xbf16, #tpu.memory_space<vmem>>, vector<1x8x32xbf16>
    %295 = vector.shape_cast %294 : vector<1x8x32xbf16> to vector<8x32xbf16>
    %296 = arith.truncf %293 : vector<48x8xf32> to vector<48x8xbf16>
    %cst_120 = arith.constant dense<0.000000e+00> : vector<48x32xf32>
    %297 = tpu.matmul %296, %295, %cst_120 {dimension_numbers = #tpu.dot_dimension_numbers<[1], [0], [0], [1], [0, 0, 1, 1], [], []>} : vector<48x8xbf16>, vector<8x32xbf16>, vector<48x32xf32> -> vector<48x32xf32>
    %298 = arith.addf %273, %297 : vector<48x32xf32>
    %299 = vector.extract_strided_slice %222 {offsets = [0, 24], sizes = [48, 8], strides = [1, 1]} : vector<48x96xf32> to vector<48x8xf32>
    %300 = arith.truncf %299 : vector<48x8xf32> to vector<48x8xbf16>
    %301 = vector.extract_strided_slice %222 {offsets = [0, 56], sizes = [48, 8], strides = [1, 1]} : vector<48x96xf32> to vector<48x8xf32>
    %302 = arith.truncf %301 : vector<48x8xf32> to vector<48x8xbf16>
    %303 = vector.extract_strided_slice %222 {offsets = [0, 88], sizes = [48, 8], strides = [1, 1]} : vector<48x96xf32> to vector<48x8xf32>
    %304 = arith.truncf %303 : vector<48x8xf32> to vector<48x8xbf16>
    %cst_121 = arith.constant dense<0.000000e+00> : vector<48x48xf32>
    %305 = tpu.matmul %300, %302, %cst_121 {dimension_numbers = #tpu.dot_dimension_numbers<[1], [1], [0], [0], [0, 0, 1, 0], [], []>} : vector<48x8xbf16>, vector<48x8xbf16>, vector<48x48xf32> -> vector<48x48xf32>
    %306 = arith.addf %305, %6 : vector<48x48xf32>
    %cst_122 = arith.constant dense<0xFF800000> : vector<48xf32>
    %307 = vector.multi_reduction <maximumf>, %306, %cst_122 [1] : vector<48x48xf32> to vector<48xf32>
    %308 = vector.shape_cast %307 : vector<48xf32> to vector<48x1xf32>
    %309 = vector.broadcast %308 : vector<48x1xf32> to vector<48x48xf32>
    %310 = arith.subf %306, %309 : vector<48x48xf32>
    %311 = math.exp %310 : vector<48x48xf32>
    %cst_123 = arith.constant dense<0.000000e+00> : vector<48xf32>
    %312 = vector.multi_reduction <add>, %311, %cst_123 [1] : vector<48x48xf32> to vector<48xf32>
    %313 = vector.shape_cast %312 : vector<48xf32> to vector<48x1xf32>
    %314 = tpu.reciprocal %313 {approx = true} : vector<48x1xf32> -> vector<48x1xf32>
    %315 = vector.broadcast %314 : vector<48x1xf32> to vector<48x48xf32>
    %316 = arith.mulf %311, %315 : vector<48x48xf32>
    %317 = arith.truncf %316 : vector<48x48xf32> to vector<48x48xbf16>
    %cst_124 = arith.constant dense<0.000000e+00> : vector<48x8xf32>
    %318 = tpu.matmul %317, %304, %cst_124 {dimension_numbers = #tpu.dot_dimension_numbers<[1], [0], [0], [1], [0, 0, 1, 1], [], []>} : vector<48x48xbf16>, vector<48x8xbf16>, vector<48x8xf32> -> vector<48x8xf32>
    %c7 = arith.constant 7 : index
    %c0_125 = arith.constant 0 : index
    %c0_126 = arith.constant 0 : index
    %319 = vector.load %arg9[%c7, %c0_125, %c0_126] : memref<8x8x32xbf16, #tpu.memory_space<vmem>>, vector<1x8x32xbf16>
    %320 = vector.shape_cast %319 : vector<1x8x32xbf16> to vector<8x32xbf16>
    %321 = arith.truncf %318 : vector<48x8xf32> to vector<48x8xbf16>
    %cst_127 = arith.constant dense<0.000000e+00> : vector<48x32xf32>
    %322 = tpu.matmul %321, %320, %cst_127 {dimension_numbers = #tpu.dot_dimension_numbers<[1], [0], [0], [1], [0, 0, 1, 1], [], []>} : vector<48x8xbf16>, vector<8x32xbf16>, vector<48x32xf32> -> vector<48x32xf32>
    %323 = arith.addf %298, %322 : vector<48x32xf32>
    %324 = arith.addf %190, %323 : vector<48x32xf32>
    %c1_128 = arith.constant 1 : index
    %c0_129 = arith.constant 0 : index
    %c0_130 = arith.constant 0 : index
    %325 = vector.load %arg10[%c1_128, %c0_129, %c0_130] : memref<2x1x32xf32, #tpu.memory_space<vmem>>, vector<1x1x32xf32>
    %326 = vector.shape_cast %325 : vector<1x1x32xf32> to vector<1x32xf32>
    %327 = vector.broadcast %326 : vector<1x32xf32> to vector<48x32xf32>
    %328 = arith.addf %324, %327 : vector<48x32xf32>
    %c1_131 = arith.constant 1 : index
    %c0_132 = arith.constant 0 : index
    %c0_133 = arith.constant 0 : index
    %329 = vector.load %arg11[%c1_131, %c0_132, %c0_133] : memref<2x1x32xf32, #tpu.memory_space<vmem>>, vector<1x1x32xf32>
    %330 = vector.shape_cast %329 : vector<1x1x32xf32> to vector<1x32xf32>
    %c1_134 = arith.constant 1 : index
    %c0_135 = arith.constant 0 : index
    %c0_136 = arith.constant 0 : index
    %331 = vector.load %arg12[%c1_134, %c0_135, %c0_136] : memref<2x1x32xf32, #tpu.memory_space<vmem>>, vector<1x1x32xf32>
    %332 = vector.shape_cast %331 : vector<1x1x32xf32> to vector<1x32xf32>
    %cst_137 = arith.constant dense<0.000000e+00> : vector<48xf32>
    %333 = vector.multi_reduction <add>, %328, %cst_137 [1] : vector<48x32xf32> to vector<48xf32>
    %334 = vector.shape_cast %333 : vector<48xf32> to vector<48x1xf32>
    %cst_138 = arith.constant 3.200000e+01 : f32
    %335 = vector.broadcast %cst_138 : f32 to vector<48x1xf32>
    %336 = arith.divf %334, %335 : vector<48x1xf32>
    %337 = vector.broadcast %336 : vector<48x1xf32> to vector<48x32xf32>
    %338 = arith.subf %328, %337 : vector<48x32xf32>
    %339 = arith.mulf %338, %338 : vector<48x32xf32>
    %cst_139 = arith.constant dense<0.000000e+00> : vector<48xf32>
    %340 = vector.multi_reduction <add>, %339, %cst_139 [1] : vector<48x32xf32> to vector<48xf32>
    %341 = vector.shape_cast %340 : vector<48xf32> to vector<48x1xf32>
    %cst_140 = arith.constant 3.200000e+01 : f32
    %342 = vector.broadcast %cst_140 : f32 to vector<48x1xf32>
    %343 = arith.divf %341, %342 : vector<48x1xf32>
    %cst_141 = arith.constant 9.99999997E-7 : f32
    %344 = vector.broadcast %cst_141 : f32 to vector<48x1xf32>
    %345 = arith.addf %343, %344 : vector<48x1xf32>
    %346 = math.rsqrt %345 : vector<48x1xf32>
    %347 = vector.broadcast %346 : vector<48x1xf32> to vector<48x32xf32>
    %348 = arith.mulf %338, %347 : vector<48x32xf32>
    %349 = vector.broadcast %330 : vector<1x32xf32> to vector<48x32xf32>
    %350 = arith.mulf %348, %349 : vector<48x32xf32>
    %351 = vector.broadcast %332 : vector<1x32xf32> to vector<48x32xf32>
    %352 = arith.addf %350, %351 : vector<48x32xf32>
    %353 = arith.truncf %352 : vector<48x32xf32> to vector<48x32xbf16>
    %c1_142 = arith.constant 1 : index
    %c0_143 = arith.constant 0 : index
    %c0_144 = arith.constant 0 : index
    %354 = vector.load %arg13[%c1_142, %c0_143, %c0_144] : memref<2x32x128xbf16, #tpu.memory_space<vmem>>, vector<1x32x128xbf16>
    %355 = vector.shape_cast %354 : vector<1x32x128xbf16> to vector<32x128xbf16>
    %cst_145 = arith.constant dense<0.000000e+00> : vector<48x128xf32>
    %356 = tpu.matmul %353, %355, %cst_145 {dimension_numbers = #tpu.dot_dimension_numbers<[1], [0], [0], [1], [0, 0, 1, 1], [], []>} : vector<48x32xbf16>, vector<32x128xbf16>, vector<48x128xf32> -> vector<48x128xf32>
    %357 = vector.extract_strided_slice %356 {offsets = [0, 0], sizes = [48, 64], strides = [1, 1]} : vector<48x128xf32> to vector<48x64xf32>
    %358 = vector.extract_strided_slice %356 {offsets = [0, 64], sizes = [48, 64], strides = [1, 1]} : vector<48x128xf32> to vector<48x64xf32>
    %359 = arith.negf %357 : vector<48x64xf32>
    %360 = math.exp %359 : vector<48x64xf32>
    %cst_146 = arith.constant 1.000000e+00 : f32
    %361 = vector.broadcast %cst_146 : f32 to vector<48x64xf32>
    %362 = arith.addf %361, %360 : vector<48x64xf32>
    %363 = arith.divf %361, %362 : vector<48x64xf32>
    %364 = arith.mulf %357, %363 : vector<48x64xf32>
    %365 = arith.mulf %364, %358 : vector<48x64xf32>
    %366 = arith.truncf %365 : vector<48x64xf32> to vector<48x64xbf16>
    %c1_147 = arith.constant 1 : index
    %c0_148 = arith.constant 0 : index
    %c0_149 = arith.constant 0 : index
    %367 = vector.load %arg14[%c1_147, %c0_148, %c0_149] : memref<2x64x32xbf16, #tpu.memory_space<vmem>>, vector<1x64x32xbf16>
    %368 = vector.shape_cast %367 : vector<1x64x32xbf16> to vector<64x32xbf16>
    %cst_150 = arith.constant dense<0.000000e+00> : vector<48x32xf32>
    %369 = tpu.matmul %366, %368, %cst_150 {dimension_numbers = #tpu.dot_dimension_numbers<[1], [0], [0], [1], [0, 0, 1, 1], [], []>} : vector<48x64xbf16>, vector<64x32xbf16>, vector<48x32xf32> -> vector<48x32xf32>
    %370 = arith.addf %328, %369 : vector<48x32xf32>
    %c1_151 = arith.constant 1 : index
    %c0_152 = arith.constant 0 : index
    %c0_153 = arith.constant 0 : index
    %371 = vector.load %arg15[%c1_151, %c0_152, %c0_153] : memref<2x1x32xf32, #tpu.memory_space<vmem>>, vector<1x1x32xf32>
    %372 = vector.shape_cast %371 : vector<1x1x32xf32> to vector<1x32xf32>
    %373 = vector.broadcast %372 : vector<1x32xf32> to vector<48x32xf32>
    %374 = arith.addf %370, %373 : vector<48x32xf32>
    %c0_154 = arith.constant 0 : index
    %c0_155 = arith.constant 0 : index
    %375 = vector.load %arg16[%c0_154, %c0_155] : memref<1x32xf32, #tpu.memory_space<vmem>>, vector<1x32xf32>
    %c0_156 = arith.constant 0 : index
    %c0_157 = arith.constant 0 : index
    %376 = vector.load %arg17[%c0_156, %c0_157] : memref<1x32xf32, #tpu.memory_space<vmem>>, vector<1x32xf32>
    %cst_158 = arith.constant dense<0.000000e+00> : vector<48xf32>
    %377 = vector.multi_reduction <add>, %374, %cst_158 [1] : vector<48x32xf32> to vector<48xf32>
    %378 = vector.shape_cast %377 : vector<48xf32> to vector<48x1xf32>
    %cst_159 = arith.constant 3.200000e+01 : f32
    %379 = vector.broadcast %cst_159 : f32 to vector<48x1xf32>
    %380 = arith.divf %378, %379 : vector<48x1xf32>
    %381 = vector.broadcast %380 : vector<48x1xf32> to vector<48x32xf32>
    %382 = arith.subf %374, %381 : vector<48x32xf32>
    %383 = arith.mulf %382, %382 : vector<48x32xf32>
    %cst_160 = arith.constant dense<0.000000e+00> : vector<48xf32>
    %384 = vector.multi_reduction <add>, %383, %cst_160 [1] : vector<48x32xf32> to vector<48xf32>
    %385 = vector.shape_cast %384 : vector<48xf32> to vector<48x1xf32>
    %cst_161 = arith.constant 3.200000e+01 : f32
    %386 = vector.broadcast %cst_161 : f32 to vector<48x1xf32>
    %387 = arith.divf %385, %386 : vector<48x1xf32>
    %cst_162 = arith.constant 9.99999997E-7 : f32
    %388 = vector.broadcast %cst_162 : f32 to vector<48x1xf32>
    %389 = arith.addf %387, %388 : vector<48x1xf32>
    %390 = math.rsqrt %389 : vector<48x1xf32>
    %391 = vector.broadcast %390 : vector<48x1xf32> to vector<48x32xf32>
    %392 = arith.mulf %382, %391 : vector<48x32xf32>
    %393 = vector.broadcast %375 : vector<1x32xf32> to vector<48x32xf32>
    %394 = arith.mulf %392, %393 : vector<48x32xf32>
    %395 = vector.broadcast %376 : vector<1x32xf32> to vector<48x32xf32>
    %396 = arith.addf %394, %395 : vector<48x32xf32>
    %397 = arith.truncf %396 : vector<48x32xf32> to vector<48x32xbf16>
    %c0_163 = arith.constant 0 : index
    %c0_164 = arith.constant 0 : index
    %398 = vector.load %arg18[%c0_163, %c0_164] : memref<32x128xbf16, #tpu.memory_space<vmem>>, vector<32x128xbf16>
    %cst_165 = arith.constant dense<0.000000e+00> : vector<48x128xf32>
    %399 = tpu.matmul %397, %398, %cst_165 {dimension_numbers = #tpu.dot_dimension_numbers<[1], [0], [0], [1], [0, 0, 1, 1], [], []>} : vector<48x32xbf16>, vector<32x128xbf16>, vector<48x128xf32> -> vector<48x128xf32>
    %c0_166 = arith.constant 0 : index
    %c0_167 = arith.constant 0 : index
    %400 = vector.load %arg19[%c0_166, %c0_167] : memref<1x128xf32, #tpu.memory_space<vmem>>, vector<1x128xf32>
    %401 = vector.broadcast %400 : vector<1x128xf32> to vector<48x128xf32>
    %402 = arith.addf %399, %401 : vector<48x128xf32>
    %403 = arith.negf %402 : vector<48x128xf32>
    %404 = math.exp %403 : vector<48x128xf32>
    %cst_168 = arith.constant 1.000000e+00 : f32
    %405 = vector.broadcast %cst_168 : f32 to vector<48x128xf32>
    %406 = arith.addf %405, %404 : vector<48x128xf32>
    %407 = arith.divf %405, %406 : vector<48x128xf32>
    %c0_169 = arith.constant 0 : index
    %c0_170 = arith.constant 0 : index
    %408 = vector.load %arg20[%c0_169, %c0_170] : memref<48x128xf32, #tpu.memory_space<vmem>>, vector<48x128xf32>
    tpu.vector_store %arg20[%c0_169, %c0_170], %407 {strides = array<i32>} : memref<48x128xf32, #tpu.memory_space<vmem>>, vector<48x128xf32>,
    return
  }
  func.func @transform_0(%arg0: i32) -> (i32, i32) {
    %c0_i32 = arith.constant 0 : i32
    %c0_i32_0 = arith.constant 0 : i32
    %c0_i32_1 = arith.constant 0 : i32
    return %c0_i32, %c0_i32_0 : i32, i32
  }
  func.func @transform_1(%arg0: i32) -> (i32, i32) {
    %c0_i32 = arith.constant 0 : i32
    %c0_i32_0 = arith.constant 0 : i32
    %c0_i32_1 = arith.constant 0 : i32
    return %c0_i32, %c0_i32_0 : i32, i32
  }
  func.func @transform_2(%arg0: i32) -> (i32, i32) {
    %c0_i32 = arith.constant 0 : i32
    %c0_i32_0 = arith.constant 0 : i32
    %c0_i32_1 = arith.constant 0 : i32
    return %c0_i32, %c0_i32_0 : i32, i32
  }
  func.func @transform_3(%arg0: i32) -> (i32, i32) {
    %c0_i32 = arith.constant 0 : i32
    %c0_i32_0 = arith.constant 0 : i32
    %c0_i32_1 = arith.constant 0 : i32
    return %c0_i32, %c0_i32_0 : i32, i32
  }
  func.func @transform_4(%arg0: i32) -> (i32, i32, i32) {
    %c0_i32 = arith.constant 0 : i32
    %c0_i32_0 = arith.constant 0 : i32
    %c0_i32_1 = arith.constant 0 : i32
    %c0_i32_2 = arith.constant 0 : i32
    return %c0_i32, %c0_i32_0, %c0_i32_1 : i32, i32, i32
  }
  func.func @transform_5(%arg0: i32) -> (i32, i32, i32) {
    %c0_i32 = arith.constant 0 : i32
    %c0_i32_0 = arith.constant 0 : i32
    %c0_i32_1 = arith.constant 0 : i32
    %c0_i32_2 = arith.constant 0 : i32
    return %c0_i32, %c0_i32_0, %c0_i32_1 : i32, i32, i32
  }
  func.func @transform_6(%arg0: i32) -> (i32, i32, i32) {
    %c0_i32 = arith.constant 0 : i32
    %c0_i32_0 = arith.constant 0 : i32
    %c0_i32_1 = arith.constant 0 : i32
    %c0_i32_2 = arith.constant 0 : i32
    return %c0_i32, %c0_i32_0, %c0_i32_1 : i32, i32, i32
  }
  func.func @transform_7(%arg0: i32) -> (i32, i32, i32) {
    %c0_i32 = arith.constant 0 : i32
    %c0_i32_0 = arith.constant 0 : i32
    %c0_i32_1 = arith.constant 0 : i32
    %c0_i32_2 = arith.constant 0 : i32
    return %c0_i32, %c0_i32_0, %c0_i32_1 : i32, i32, i32
  }
  func.func @transform_8(%arg0: i32) -> (i32, i32, i32) {
    %c0_i32 = arith.constant 0 : i32
    %c0_i32_0 = arith.constant 0 : i32
    %c0_i32_1 = arith.constant 0 : i32
    %c0_i32_2 = arith.constant 0 : i32
    return %c0_i32, %c0_i32_0, %c0_i32_1 : i32, i32, i32
  }
  func.func @transform_9(%arg0: i32) -> (i32, i32, i32) {
    %c0_i32 = arith.constant 0 : i32
    %c0_i32_0 = arith.constant 0 : i32
    %c0_i32_1 = arith.constant 0 : i32
    %c0_i32_2 = arith.constant 0 : i32
    return %c0_i32, %c0_i32_0, %c0_i32_1 : i32, i32, i32
  }
  func.func @transform_10(%arg0: i32) -> (i32, i32, i32) {
    %c0_i32 = arith.constant 0 : i32
    %c0_i32_0 = arith.constant 0 : i32
    %c0_i32_1 = arith.constant 0 : i32
    %c0_i32_2 = arith.constant 0 : i32
    return %c0_i32, %c0_i32_0, %c0_i32_1 : i32, i32, i32
  }
  func.func @transform_11(%arg0: i32) -> (i32, i32, i32) {
    %c0_i32 = arith.constant 0 : i32
    %c0_i32_0 = arith.constant 0 : i32
    %c0_i32_1 = arith.constant 0 : i32
    %c0_i32_2 = arith.constant 0 : i32
    return %c0_i32, %c0_i32_0, %c0_i32_1 : i32, i32, i32
  }
  func.func @transform_12(%arg0: i32) -> (i32, i32, i32) {
    %c0_i32 = arith.constant 0 : i32
    %c0_i32_0 = arith.constant 0 : i32
    %c0_i32_1 = arith.constant 0 : i32
    %c0_i32_2 = arith.constant 0 : i32
    return %c0_i32, %c0_i32_0, %c0_i32_1 : i32, i32, i32
  }
  func.func @transform_13(%arg0: i32) -> (i32, i32, i32) {
    %c0_i32 = arith.constant 0 : i32
    %c0_i32_0 = arith.constant 0 : i32
    %c0_i32_1 = arith.constant 0 : i32
    %c0_i32_2 = arith.constant 0 : i32
    return %c0_i32, %c0_i32_0, %c0_i32_1 : i32, i32, i32
  }
  func.func @transform_14(%arg0: i32) -> (i32, i32, i32) {
    %c0_i32 = arith.constant 0 : i32
    %c0_i32_0 = arith.constant 0 : i32
    %c0_i32_1 = arith.constant 0 : i32
    %c0_i32_2 = arith.constant 0 : i32
    return %c0_i32, %c0_i32_0, %c0_i32_1 : i32, i32, i32
  }
  func.func @transform_15(%arg0: i32) -> (i32, i32) {
    %c0_i32 = arith.constant 0 : i32
    %c0_i32_0 = arith.constant 0 : i32
    %c0_i32_1 = arith.constant 0 : i32
    return %c0_i32, %c0_i32_0 : i32, i32
  }
  func.func @transform_16(%arg0: i32) -> (i32, i32) {
    %c0_i32 = arith.constant 0 : i32
    %c0_i32_0 = arith.constant 0 : i32
    %c0_i32_1 = arith.constant 0 : i32
    return %c0_i32, %c0_i32_0 : i32, i32
  }
  func.func @transform_17(%arg0: i32) -> (i32, i32) {
    %c0_i32 = arith.constant 0 : i32
    %c0_i32_0 = arith.constant 0 : i32
    %c0_i32_1 = arith.constant 0 : i32
    return %c0_i32, %c0_i32_0 : i32, i32
  }
  func.func @transform_18(%arg0: i32) -> (i32, i32) {
    %c0_i32 = arith.constant 0 : i32
    %c0_i32_0 = arith.constant 0 : i32
    %c0_i32_1 = arith.constant 0 : i32
    return %c0_i32, %c0_i32_0 : i32, i32
  }
  func.func @transform_19(%arg0: i32) -> (i32, i32) {
    %c0_i32 = arith.constant 0 : i32
    %c0_i32_0 = arith.constant 0 : i32
    %c0_i32_1 = arith.constant 0 : i32
    return %c0_i32, %c0_i32_0 : i32, i32
  }
}

</mosaic_0001>

<llo_original>
// kernel: isic_forward.1
$region0: #{isic_forward.1}
  #allocation0 [shape = 'u32[]', space=smem, size = 0x4, offset = 0x4, fixed_abs, tag = 'smem constant byte address 0x4 - core index']
  #allocation1 [shape = 'u32[144,128]{1,0:T(1,128)}', space=vmem, size = 0x12000, scoped, tag = 'internal scratch']
  %s0 = inlined_call_operand.vmem [shape: f32[48,48], index: 0, kind: input, shape index: {}]
  %s1 = inlined_call_operand.vmem [shape: bf16[48,32], index: 1, kind: input, shape index: {}]
  %s2 = inlined_call_operand.vmem [shape: f32[48,32], index: 2, kind: input, shape index: {}]
  %s3 = inlined_call_operand.vmem [shape: f32[48,48], index: 3, kind: input, shape index: {}]
  %s4 = inlined_call_operand.vmem [shape: f32[2,1,32], index: 4, kind: input, shape index: {}]
  %s5 = inlined_call_operand.vmem [shape: f32[2,1,32], index: 5, kind: input, shape index: {}]
  %s6 = inlined_call_operand.vmem [shape: bf16[2,32,96], index: 6, kind: input, shape index: {}]
  %s7 = inlined_call_operand.vmem [shape: f32[2,1,96], index: 7, kind: input, shape index: {}]
  %s8 = inlined_call_operand.vmem [shape: bf16[8,8,32], index: 8, kind: input, shape index: {}]
  %s9 = inlined_call_operand.vmem [shape: f32[2,1,32], index: 9, kind: input, shape index: {}]
  %s10 = inlined_call_operand.vmem [shape: f32[2,1,32], index: 10, kind: input, shape index: {}]
  %s11 = inlined_call_operand.vmem [shape: f32[2,1,32], index: 11, kind: input, shape index: {}]
  %s12 = inlined_call_operand.vmem [shape: bf16[2,32,128], index: 12, kind: input, shape index: {}]
  %s13 = inlined_call_operand.vmem [shape: bf16[2,64,32], index: 13, kind: input, shape index: {}]
  %s14 = inlined_call_operand.vmem [shape: f32[2,1,32], index: 14, kind: input, shape index: {}]
  %s15 = inlined_call_operand.vmem [shape: f32[1,32], index: 15, kind: input, shape index: {}]
  %s16 = inlined_call_operand.vmem [shape: f32[1,32], index: 16, kind: input, shape index: {}]
  %s17 = inlined_call_operand.vmem [shape: bf16[32,128], index: 17, kind: input, shape index: {}]
  %s18 = inlined_call_operand.vmem [shape: f32[1,128], index: 18, kind: input, shape index: {}]
  %s19 = inlined_call_operand.vmem [shape: f32[48,128], index: 19, kind: output, shape index: {}]
  %s20 = sld [smem:[#allocation0]]
  $region86: #{isic_forward.1} parent=0
    _
  %s22 = ssub.s32 1, %s20
  %s23 = scalar_select 0, %s22, %s20
  // Predicated region
  $region2: #{isic_forward.1} parent=0 // pred_check
    _
  $region3: #{isic_forward.1} parent=0 // pred_check_branch
    %25 = sbr.rel (0) target = $region5
  $region4: #{isic_forward.1} parent=0 // pred_region
    _
  $region5: #{isic_forward.1} parent=0 // pred_fallthru
    _
  // Predicated region
  $region6: #{isic_forward.1} parent=0 // pred_check
    _
  $region7: #{isic_forward.1} parent=0 // pred_check_branch
    %27 = sbr.rel (0) target = $region9
  $region8: #{isic_forward.1} parent=0 // pred_region
    _
  $region9: #{isic_forward.1} parent=0 // pred_fallthru
    _
  // Predicated region
  $region10: #{isic_forward.1} parent=0 // pred_check
    _
  $region11: #{isic_forward.1} parent=0 // pred_check_branch
    %29 = sbr.rel (0) target = $region13
  $region12: #{isic_forward.1} parent=0 // pred_region
    _
  $region13: #{isic_forward.1} parent=0 // pred_fallthru
    _
  // Predicated region
  $region14: #{isic_forward.1} parent=0 // pred_check
    _
  $region15: #{isic_forward.1} parent=0 // pred_check_branch
    %31 = sbr.rel (0) target = $region17
  $region16: #{isic_forward.1} parent=0 // pred_region
    _
  $region17: #{isic_forward.1} parent=0 // pred_fallthru
    _
  // Predicated region
  $region18: #{isic_forward.1} parent=0 // pred_check
    _
  $region19: #{isic_forward.1} parent=0 // pred_check_branch
    %33 = sbr.rel (0) target = $region21
  $region20: #{isic_forward.1} parent=0 // pred_region
    _
  $region21: #{isic_forward.1} parent=0 // pred_fallthru
    _
  // Predicated region
  $region22: #{isic_forward.1} parent=0 // pred_check
    _
  $region23: #{isic_forward.1} parent=0 // pred_check_branch
    %35 = sbr.rel (0) target = $region25
  $region24: #{isic_forward.1} parent=0 // pred_region
    _
  $region25: #{isic_forward.1} parent=0 // pred_fallthru
    _
  // Predicated region
  $region26: #{isic_forward.1} parent=0 // pred_check
    _
  $region27: #{isic_forward.1} parent=0 // pred_check_branch
    %37 = sbr.rel (0) target = $region29
  $region28: #{isic_forward.1} parent=0 // pred_region
    _
  $region29: #{isic_forward.1} parent=0 // pred_fallthru
    _
  // Predicated region
  $region30: #{isic_forward.1} parent=0 // pred_check
    _
  $region31: #{isic_forward.1} parent=0 // pred_check_branch
    %39 = sbr.rel (0) target = $region33
  $region32: #{isic_forward.1} parent=0 // pred_region
    _
  $region33: #{isic_forward.1} parent=0 // pred_fallthru
    _
  // Predicated region
  $region34: #{isic_forward.1} parent=0 // pred_check
    _
  $region35: #{isic_forward.1} parent=0 // pred_check_branch
    %41 = sbr.rel (0) target = $region37
  $region36: #{isic_forward.1} parent=0 // pred_region
    _
  $region37: #{isic_forward.1} parent=0 // pred_fallthru
    _
  // Predicated region
  $region38: #{isic_forward.1} parent=0 // pred_check
    _
  $region39: #{isic_forward.1} parent=0 // pred_check_branch
    %43 = sbr.rel (0) target = $region41
  $region40: #{isic_forward.1} parent=0 // pred_region
    _
  $region41: #{isic_forward.1} parent=0 // pred_fallthru
    _
  // Predicated region
  $region42: #{isic_forward.1} parent=0 // pred_check
    _
  $region43: #{isic_forward.1} parent=0 // pred_check_branch
    %45 = sbr.rel (0) target = $region45
  $region44: #{isic_forward.1} parent=0 // pred_region
    _
  $region45: #{isic_forward.1} parent=0 // pred_fallthru
    _
  // Predicated region
  $region46: #{isic_forward.1} parent=0 // pred_check
    _
  $region47: #{isic_forward.1} parent=0 // pred_check_branch
    %47 = sbr.rel (0) target = $region49
  $region48: #{isic_forward.1} parent=0 // pred_region
    _
  $region49: #{isic_forward.1} parent=0 // pred_fallthru
    _
  // Predicated region
  $region50: #{isic_forward.1} parent=0 // pred_check
    _
  $region51: #{isic_forward.1} parent=0 // pred_check_branch
    %49 = sbr.rel (0) target = $region53
  $region52: #{isic_forward.1} parent=0 // pred_region
    _
  $region53: #{isic_forward.1} parent=0 // pred_fallthru
    _
  // Predicated region
  $region54: #{isic_forward.1} parent=0 // pred_check
    _
  $region55: #{isic_forward.1} parent=0 // pred_check_branch
    %51 = sbr.rel (0) target = $region57
  $region56: #{isic_forward.1} parent=0 // pred_region
    _
  $region57: #{isic_forward.1} parent=0 // pred_fallthru
    _
  // Predicated region
  $region58: #{isic_forward.1} parent=0 // pred_check
    _
  $region59: #{isic_forward.1} parent=0 // pred_check_branch
    %53 = sbr.rel (0) target = $region61
  $region60: #{isic_forward.1} parent=0 // pred_region
    _
  $region61: #{isic_forward.1} parent=0 // pred_fallthru
    _
  // Predicated region
  $region62: #{isic_forward.1} parent=0 // pred_check
    _
  $region63: #{isic_forward.1} parent=0 // pred_check_branch
    %55 = sbr.rel (0) target = $region65
  $region64: #{isic_forward.1} parent=0 // pred_region
    _
  $region65: #{isic_forward.1} parent=0 // pred_fallthru
    _
  // Predicated region
  $region66: #{isic_forward.1} parent=0 // pred_check
    _
  $region67: #{isic_forward.1} parent=0 // pred_check_branch
    %57 = sbr.rel (0) target = $region69
  $region68: #{isic_forward.1} parent=0 // pred_region
    _
  $region69: #{isic_forward.1} parent=0 // pred_fallthru
    _
  // Predicated region
  $region70: #{isic_forward.1} parent=0 // pred_check
    _
  $region71: #{isic_forward.1} parent=0 // pred_check_branch
    %59 = sbr.rel (0) target = $region73
  $region72: #{isic_forward.1} parent=0 // pred_region
    _
  $region73: #{isic_forward.1} parent=0 // pred_fallthru
    _
  // Predicated region
  $region74: #{isic_forward.1} parent=0 // pred_check
    _
  $region75: #{isic_forward.1} parent=0 // pred_check_branch
    %61 = sbr.rel (0) target = $region77
  $region76: #{isic_forward.1} parent=0 // pred_region
    _
  $region77: #{isic_forward.1} parent=0 // pred_fallthru
    _
  %v63 = vld [vmem:[%s0] sm:$0xff]
  %v64 = vld [vmem:[%s0 + $0x8] sm:$0xff]
  %v65 = vld [vmem:[%s0 + $0x10] sm:$0xff]
  %v66 = vld [vmem:[%s0 + $0x18] sm:$0xff]
  %v67 = vld [vmem:[%s0 + $0x20] sm:$0xff]
  %v68 = vld [vmem:[%s0 + $0x28] sm:$0xff]
  %v69 = vpack.c.bf16 %v64, %v63
  %v70 = vpack.c.bf16 %v66, %v65
  %v71 = vpack.c.bf16 %v68, %v67
  %v72 = vld [vmem:[%s1] sm:$0xf]
  %v73 = vld [vmem:[%s1 + $0x4] sm:$0xf]
  %v74 = vld [vmem:[%s1 + $0x8] sm:$0xf]
  %v75 = vld [vmem:[%s1 + $0xc] sm:$0xf]
  %v76 = vld [vmem:[%s1 + $0x10] sm:$0xf]
  %v77 = vld [vmem:[%s1 + $0x14] sm:$0xf]
  %v78 = vld [vmem:[%s2] sm:$0xff]
  %v79 = vld [vmem:[%s2 + $0x8] sm:$0xff]
  %v80 = vld [vmem:[%s2 + $0x10] sm:$0xff]
  %v81 = vld [vmem:[%s2 + $0x18] sm:$0xff]
  %v82 = vld [vmem:[%s2 + $0x20] sm:$0xff]
  %v83 = vld [vmem:[%s2 + $0x28] sm:$0xff]
  %v90 = vunpack.c.l.b16 %v72
  %v91 = vunpack.c.l.b16 %v73
  %v92 = vunpack.c.l.b16 %v74
  %v93 = vunpack.c.l.b16 %v75
  %v94 = vunpack.c.l.b16 %v76
  %v95 = vunpack.c.l.b16 %v77
  %v96 = vpack.c.b16 %v91, %v90
  %v97 = vpack.c.b16 %v93, %v92
  %v98 = vpack.c.b16 %v95, %v94
  %vm102 = vcmask 392192
  %v104 = vsel %vm102, %v69, 0
  %v107 = vsel %vm102, %v70, 0
  %v110 = vsel %vm102, %v71, 0
  %112 = vmatprep.subr.bf16.mxu0 0
  %113 = vmatpush1.bf16.msra.mxu0 %v96
  %114 = vmatprep.subr.bf16.mxu0 0
  %115 = vmatpush1.bf16.msra.mxu0 %v97
  %116 = vmatprep.subr.bf16.mxu0 0
  %117 = vmatpush1.bf16.msra.mxu0 %v98
  %118 = vmatprep.subr.bf16.mxu0 0
  %119 = vmatpush1.bf16.msra.mxu0 0
  %120 = vmatprep.subr.bf16.mxu0 0
  %121 = vmatpush1.bf16.msra.mxu0 0
  %122 = vmatprep.subr.bf16.mxu0 0
  %123 = vmatpush1.bf16.msra.mxu0 0
  %124 = vmatprep.subr.bf16.mxu0 0
  %125 = vmatpush1.bf16.msra.mxu0 0
  %126 = vmatprep.subr.bf16.mxu0 0
  %127 = vmatpush1.bf16.msra.mxu0 0
  %128 = vmatprep.subr.bf16.mxu0 0
  %129 = vmatpush1.bf16.msra.mxu0 0
  %130 = vmatprep.subr.bf16.mxu0 0
  %131 = vmatpush1.bf16.msra.mxu0 0
  %132 = vmatprep.subr.bf16.mxu0 0
  %133 = vmatpush1.bf16.msra.mxu0 0
  %134 = vmatprep.subr.bf16.mxu0 0
  %135 = vmatpush1.bf16.msra.mxu0 0
  %136 = vmatprep.subr.bf16.mxu0 0
  %137 = vmatpush1.bf16.msra.mxu0 0
  %138 = vmatprep.subr.bf16.mxu0 0
  %139 = vmatpush1.bf16.msra.mxu0 0
  %140 = vmatprep.subr.bf16.mxu0 0
  %141 = vmatpush1.bf16.msra.mxu0 0
  %142 = vmatprep.subr.bf16.mxu0 0
  %143 = vmatpush1.bf16.msra.mxu0 0
  %144 = vmatprep.mubr.bf16.mxu0 0
  %145 = vmatmul.mubr.bf16.gmra.mrb[0].mxu0 %v104
  %v146 = vpop.f32.mrb[0].mxu0
  %v147 = vadd.f32 %v78, %v146
  %v148 = vpop.f32.mrb[0].mxu0
  %v149 = vpop.f32.mrb[0].mxu0
  %v150 = vadd.f32 %v79, %v149
  %v151 = vpop.f32.mrb[0].mxu0
  %152 = vmatprep.mubr.bf16.mxu0 0
  %153 = vmatmul.mubr.bf16.gmra.mrb[0].mxu0 %v107
  %v154 = vpop.f32.mrb[0].mxu0
  %v155 = vadd.f32 %v80, %v154
  %v156 = vpop.f32.mrb[0].mxu0
  %v157 = vpop.f32.mrb[0].mxu0
  %v158 = vadd.f32 %v81, %v157
  %v159 = vpop.f32.mrb[0].mxu0
  %160 = vmatprep.mubr.bf16.mxu0 0
  %161 = vmatmul.mubr.bf16.gmra.mrb[0].mxu0 %v110
  %v162 = vpop.f32.mrb[0].mxu0
  %v163 = vadd.f32 %v82, %v162
  %v164 = vpop.f32.mrb[0].mxu0
  %v165 = vpop.f32.mrb[0].mxu0
  %v166 = vadd.f32 %v83, %v165
  %v167 = vpop.f32.mrb[0].mxu0
  %168 = vdwg.mxu0
  %v169 = vld [vmem:[%s3] sm:$0xff]
  %v170 = vld [vmem:[%s3 + $0x8] sm:$0xff]
  %v171 = vld [vmem:[%s3 + $0x10] sm:$0xff]
  %v172 = vld [vmem:[%s3 + $0x18] sm:$0xff]
  %v173 = vld [vmem:[%s3 + $0x20] sm:$0xff]
  %v174 = vld [vmem:[%s3 + $0x28] sm:$0xff]
  %v175 = vld [vmem:[%s4] sm:$0x1]
  %v176 = vld [vmem:[%s5] sm:$0x1]
  %vm177 = vcmask 261120
  %v178 = vsel %vm177, %v147, 0.0
  %179 = vadd.xlane.f32.xlu0 %v178
  %v180 = vpop.xlane.xlu0 %179
  %v181 = vsel %vm177, %v150, 0.0
  %182 = vadd.xlane.f32.xlu0 %v181
  %v183 = vpop.xlane.xlu0 %182
  %v184 = vsel %vm177, %v155, 0.0
  %185 = vadd.xlane.f32.xlu0 %v184
  %v186 = vpop.xlane.xlu0 %185
  %v187 = vsel %vm177, %v158, 0.0
  %188 = vadd.xlane.f32.xlu0 %v187
  %v189 = vpop.xlane.xlu0 %188
  %v190 = vsel %vm177, %v163, 0.0
  %191 = vadd.xlane.f32.xlu0 %v190
  %v192 = vpop.xlane.xlu0 %191
  %v193 = vsel %vm177, %v166, 0.0
  %194 = vadd.xlane.f32.xlu0 %v193
  %v195 = vpop.xlane.xlu0 %194
  %v196 = vrcp.pop 32.0
  %v197 = vmul.f32 %v180, %v196
  %v198 = vmul.f32 %v183, %v196
  %v199 = vmul.f32 %v186, %v196
  %v200 = vmul.f32 %v189, %v196
  %v201 = vmul.f32 %v192, %v196
  %v202 = vmul.f32 %v195, %v196
  %v203 = vsub.f32 %v147, %v197
  %v204 = vsub.f32 %v150, %v198
  %v205 = vsub.f32 %v155, %v199
  %v206 = vsub.f32 %v158, %v200
  %v207 = vsub.f32 %v163, %v201
  %v208 = vsub.f32 %v166, %v202
  %v209 = vmul.f32 %v203, %v203
  %v210 = vmul.f32 %v204, %v204
  %v211 = vmul.f32 %v205, %v205
  %v212 = vmul.f32 %v206, %v206
  %v213 = vmul.f32 %v207, %v207
  %v214 = vmul.f32 %v208, %v208
  %v215 = vsel %vm177, %v209, 0.0
  %216 = vadd.xlane.f32.xlu0 %v215
  %v217 = vpop.xlane.xlu0 %216
  %v218 = vsel %vm177, %v210, 0.0
  %219 = vadd.xlane.f32.xlu0 %v218
  %v220 = vpop.xlane.xlu0 %219
  %v221 = vsel %vm177, %v211, 0.0
  %222 = vadd.xlane.f32.xlu0 %v221
  %v223 = vpop.xlane.xlu0 %222
  %v224 = vsel %vm177, %v212, 0.0
  %225 = vadd.xlane.f32.xlu0 %v224
  %v226 = vpop.xlane.xlu0 %225
  %v227 = vsel %vm177, %v213, 0.0
  %228 = vadd.xlane.f32.xlu0 %v227
  %v229 = vpop.xlane.xlu0 %228
  %v230 = vsel %vm177, %v214, 0.0
  %231 = vadd.xlane.f32.xlu0 %v230
  %v232 = vpop.xlane.xlu0 %231
  %v233 = vmul.f32 %v217, %v196
  %v234 = vmul.f32 %v220, %v196
  %v235 = vmul.f32 %v223, %v196
  %v236 = vmul.f32 %v226, %v196
  %v237 = vmul.f32 %v229, %v196
  %v238 = vmul.f32 %v232, %v196
  %v239 = vadd.f32 %v233, 1e-06
  %v240 = vadd.f32 %v234, 1e-06
  %v241 = vadd.f32 %v235, 1e-06
  %v242 = vadd.f32 %v236, 1e-06
  %v243 = vadd.f32 %v237, 1e-06
  %v244 = vadd.f32 %v238, 1e-06
  %v245 = vrsqrt.pop %v239
  %v246 = vrsqrt.pop %v240
  %v247 = vrsqrt.pop %v241
  %v248 = vrsqrt.pop %v242
  %v249 = vrsqrt.pop %v243
  %v250 = vrsqrt.pop %v244
  %v251 = vmul.f32 %v203, %v245
  %v252 = vmul.f32 %v204, %v246
  %v253 = vmul.f32 %v205, %v247
  %v254 = vmul.f32 %v206, %v248
  %v255 = vmul.f32 %v207, %v249
  %v256 = vmul.f32 %v208, %v250
  %v258 = vlaneseq
  %v259 = vshrl.u32 %v258, 7
  %v260 = vsub.s32 0, %v259
  %v261 = vrot.slane %v175, %v260
  %v263 = vmul.f32 %v251, %v261
  %v264 = vmul.f32 %v252, %v261
  %v265 = vmul.f32 %v253, %v261
  %v266 = vmul.f32 %v254, %v261
  %v267 = vmul.f32 %v255, %v261
  %v268 = vmul.f32 %v256, %v261
  %v270 = vlaneseq
  %v271 = vshrl.u32 %v270, 7
  %v272 = vsub.s32 0, %v271
  %v273 = vrot.slane %v176, %v272
  %v275 = vadd.f32 %v263, %v273
  %v276 = vadd.f32 %v264, %v273
  %v277 = vadd.f32 %v265, %v273
  %v278 = vadd.f32 %v266, %v273
  %v279 = vadd.f32 %v267, %v273
  %v280 = vadd.f32 %v268, %v273
  %v281 = vpack.c.bf16 %v276, %v275
  %v282 = vpack.c.bf16 %v278, %v277
  %v283 = vpack.c.bf16 %v280, %v279
  %v284 = vld [vmem:[%s6] sm:$0xf]
  %v285 = vld [vmem:[%s6 + $0x4] sm:$0xf]
  %v286 = vld [vmem:[%s6 + $0x8] sm:$0xf]
  %v287 = vld [vmem:[%s6 + $0xc] sm:$0xf]
  %v288 = vld [vmem:[%s7] sm:$0x1]
  %v290 = vlaneseq
  %v291 = vshrl.u32 %v290, 7
  %v292 = vsub.s32 0, %v291
  %v293 = vrot.slane %v288, %v292
  %v299 = vunpack.c.l.b16 %v284
  %v300 = vunpack.c.l.b16 %v285
  %v301 = vunpack.c.l.b16 %v286
  %v302 = vunpack.c.l.b16 %v287
  %v303 = vpack.c.b16 %v300, %v299
  %v304 = vpack.c.b16 %v302, %v301
  %v308 = vsel %vm177, %v281, 0
  %v311 = vsel %vm177, %v282, 0
  %v314 = vsel %vm177, %v283, 0
  %316 = vmatprep.subr.bf16.mxu0 0
  %317 = vmatpush1.bf16.msra.mxu0 %v303
  %318 = vmatprep.subr.bf16.mxu0 0
  %319 = vmatpush1.bf16.msra.mxu0 %v304
  %320 = vmatprep.subr.bf16.mxu0 0
  %321 = vmatpush1.bf16.msra.mxu0 0
  %322 = vmatprep.subr.bf16.mxu0 0
  %323 = vmatpush1.bf16.msra.mxu0 0
  %324 = vmatprep.subr.bf16.mxu0 0
  %325 = vmatpush1.bf16.msra.mxu0 0
  %326 = vmatprep.subr.bf16.mxu0 0
  %327 = vmatpush1.bf16.msra.mxu0 0
  %328 = vmatprep.subr.bf16.mxu0 0
  %329 = vmatpush1.bf16.msra.mxu0 0
  %330 = vmatprep.subr.bf16.mxu0 0
  %331 = vmatpush1.bf16.msra.mxu0 0
  %332 = vmatprep.subr.bf16.mxu0 0
  %333 = vmatpush1.bf16.msra.mxu0 0
  %334 = vmatprep.subr.bf16.mxu0 0
  %335 = vmatpush1.bf16.msra.mxu0 0
  %336 = vmatprep.subr.bf16.mxu0 0
  %337 = vmatpush1.bf16.msra.mxu0 0
  %338 = vmatprep.subr.bf16.mxu0 0
  %339 = vmatpush1.bf16.msra.mxu0 0
  %340 = vmatprep.subr.bf16.mxu0 0
  %341 = vmatpush1.bf16.msra.mxu0 0
  %342 = vmatprep.subr.bf16.mxu0 0
  %343 = vmatpush1.bf16.msra.mxu0 0
  %344 = vmatprep.subr.bf16.mxu0 0
  %345 = vmatpush1.bf16.msra.mxu0 0
  %346 = vmatprep.subr.bf16.mxu0 0
  %347 = vmatpush1.bf16.msra.mxu0 0
  %348 = vmatprep.mubr.bf16.mxu0 0
  %349 = vmatmul.mubr.bf16.gmra.mrb[0].mxu0 %v308
  %v350 = vpop.f32.mrb[0].mxu0
  %v351 = vadd.f32 %v293, %v350
  %v352 = vpop.f32.mrb[0].mxu0
  %v353 = vpop.f32.mrb[0].mxu0
  %v354 = vadd.f32 %v293, %v353
  %v355 = vpop.f32.mrb[0].mxu0
  %356 = vmatprep.mubr.bf16.mxu0 0
  %357 = vmatmul.mubr.bf16.gmra.mrb[0].mxu0 %v311
  %v358 = vpop.f32.mrb[0].mxu0
  %v359 = vadd.f32 %v293, %v358
  %v360 = vpop.f32.mrb[0].mxu0
  %v361 = vpop.f32.mrb[0].mxu0
  %v362 = vadd.f32 %v293, %v361
  %v363 = vpop.f32.mrb[0].mxu0
  %364 = vmatprep.mubr.bf16.mxu0 0
  %365 = vmatmul.mubr.bf16.gmra.mrb[0].mxu0 %v314
  %v366 = vpop.f32.mrb[0].mxu0
  %v367 = vadd.f32 %v293, %v366
  %v368 = vpop.f32.mrb[0].mxu0
  %v369 = vpop.f32.mrb[0].mxu0
  %v370 = vadd.f32 %v293, %v369
  %v371 = vpop.f32.mrb[0].mxu0
  %372 = vdwg.mxu0
  %v373 = vpack.c.bf16 %v354, %v351
  %v374 = vpack.c.bf16 %v362, %v359
  %v375 = vpack.c.bf16 %v370, %v367
  %379 = vrot.lane.b32.xlu0 %v373, 96
  %v380 = vpop.permute.xlu0 %379
  %381 = vrot.lane.b32.xlu0 %v374, 96
  %v382 = vpop.permute.xlu0 %381
  %383 = vrot.lane.b32.xlu0 %v375, 96
  %v384 = vpop.permute.xlu0 %383
  %vm385 = vcmask 64512
  %v387 = vsel %vm385, %v373, 0
  %v390 = vsel %vm385, %v374, 0
  %v393 = vsel %vm385, %v375, 0
  %v396 = vsel %vm385, %v380, 0
  %v399 = vsel %vm385, %v382, 0
  %v402 = vsel %vm385, %v384, 0
  %404 = vmatprep.subr.bf16.mxu0 0
  %405 = vmatpush1.bf16.xpose.msra.mxu0 %v396
  %406 = vmatprep.subr.bf16.mxu0 0
  %407 = vmatpush1.bf16.xpose.msra.mxu0 %v399
  %408 = vmatprep.subr.bf16.mxu0 0
  %409 = vmatpush1.bf16.xpose.msra.mxu0 %v402
  %410 = vmatprep.subr.bf16.mxu0 0
  %411 = vmatpush1.bf16.xpose.msra.mxu0 0
  %412 = vmatprep.subr.bf16.mxu0 0
  %413 = vmatpush1.bf16.xpose.msra.mxu0 0
  %414 = vmatprep.subr.bf16.mxu0 0
  %415 = vmatpush1.bf16.xpose.msra.mxu0 0
  %416 = vmatprep.subr.bf16.mxu0 0
  %417 = vmatpush1.bf16.xpose.msra.mxu0 0
  %418 = vmatprep.subr.bf16.mxu0 0
  %419 = vmatpush1.bf16.xpose.msra.mxu0 0
  %420 = vmatprep.subr.bf16.mxu0 0
  %421 = vmatpush1.bf16.xpose.msra.mxu0 0
  %422 = vmatprep.subr.bf16.mxu0 0
  %423 = vmatpush1.bf16.xpose.msra.mxu0 0
  %424 = vmatprep.subr.bf16.mxu0 0
  %425 = vmatpush1.bf16.xpose.msra.mxu0 0
  %426 = vmatprep.subr.bf16.mxu0 0
  %427 = vmatpush1.bf16.xpose.msra.mxu0 0
  %428 = vmatprep.subr.bf16.mxu0 0
  %429 = vmatpush1.bf16.xpose.msra.mxu0 0
  %430 = vmatprep.subr.bf16.mxu0 0
  %431 = vmatpush1.bf16.xpose.msra.mxu0 0
  %432 = vmatprep.subr.bf16.mxu0 0
  %433 = vmatpush1.bf16.xpose.msra.mxu0 0
  %434 = vmatprep.subr.bf16.mxu0 0
  %435 = vmatpush1.bf16.xpose.msra.mxu0 0
  %436 = vmatprep.mubr.bf16.mxu0 0
  %437 = vmatmul.mubr.bf16.gmra.mrb[0].mxu0 %v387
  %v438 = vpop.f32.mrb[0].mxu0
  %v439 = vadd.f32 %v169, %v438
  %v440 = vpop.f32.mrb[0].mxu0
  %v441 = vpop.f32.mrb[0].mxu0
  %v442 = vadd.f32 %v170, %v441
  %v443 = vpop.f32.mrb[0].mxu0
  %444 = vmatprep.mubr.bf16.mxu0 0
  %445 = vmatmul.mubr.bf16.gmra.mrb[0].mxu0 %v390
  %v446 = vpop.f32.mrb[0].mxu0
  %v447 = vadd.f32 %v171, %v446
  %v448 = vpop.f32.mrb[0].mxu0
  %v449 = vpop.f32.mrb[0].mxu0
  %v450 = vadd.f32 %v172, %v449
  %v451 = vpop.f32.mrb[0].mxu0
  %452 = vmatprep.mubr.bf16.mxu0 0
  %453 = vmatmul.mubr.bf16.gmra.mrb[0].mxu0 %v393
  %v454 = vpop.f32.mrb[0].mxu0
  %v455 = vadd.f32 %v173, %v454
  %v456 = vpop.f32.mrb[0].mxu0
  %v457 = vpop.f32.mrb[0].mxu0
  %v458 = vadd.f32 %v174, %v457
  %v459 = vpop.f32.mrb[0].mxu0
  %460 = vdwg.mxu0
  %v461 = vsel %vm102, %v439, -inf
  %462 = vmax.xlane.f32.xlu0 %v461
  %v463 = vpop.xlane.xlu0 %462
  %v464 = vsel %vm102, %v442, -inf
  %465 = vmax.xlane.f32.xlu0 %v464
  %v466 = vpop.xlane.xlu0 %465
  %v467 = vsel %vm102, %v447, -inf
  %468 = vmax.xlane.f32.xlu0 %v467
  %v469 = vpop.xlane.xlu0 %468
  %v470 = vsel %vm102, %v450, -inf
  %471 = vmax.xlane.f32.xlu0 %v470
  %v472 = vpop.xlane.xlu0 %471
  %v473 = vsel %vm102, %v455, -inf
  %474 = vmax.xlane.f32.xlu0 %v473
  %v475 = vpop.xlane.xlu0 %474
  %v476 = vsel %vm102, %v458, -inf
  %477 = vmax.xlane.f32.xlu0 %v476
  %v478 = vpop.xlane.xlu0 %477
  %v479 = vsub.f32 %v439, %v463
  %v480 = vsub.f32 %v442, %v466
  %v481 = vsub.f32 %v447, %v469
  %v482 = vsub.f32 %v450, %v472
  %v483 = vsub.f32 %v455, %v475
  %v484 = vsub.f32 %v458, %v478
  %v485 = vmul.f32 %v479, 1.442695
  %v486 = vpow.pop %v485
  %v487 = vmul.f32 %v480, 1.442695
  %v488 = vpow.pop %v487
  %v489 = vmul.f32 %v481, 1.442695
  %v490 = vpow.pop %v489
  %v491 = vmul.f32 %v482, 1.442695
  %v492 = vpow.pop %v491
  %v493 = vmul.f32 %v483, 1.442695
  %v494 = vpow.pop %v493
  %v495 = vmul.f32 %v484, 1.442695
  %v496 = vpow.pop %v495
  %v497 = vsel %vm102, %v486, 0.0
  %498 = vadd.xlane.f32.xlu0 %v497
  %v499 = vpop.xlane.xlu0 %498
  %v500 = vsel %vm102, %v488, 0.0
  %501 = vadd.xlane.f32.xlu0 %v500
  %v502 = vpop.xlane.xlu0 %501
  %v503 = vsel %vm102, %v490, 0.0
  %504 = vadd.xlane.f32.xlu0 %v503
  %v505 = vpop.xlane.xlu0 %504
  %v506 = vsel %vm102, %v492, 0.0
  %507 = vadd.xlane.f32.xlu0 %v506
  %v508 = vpop.xlane.xlu0 %507
  %v509 = vsel %vm102, %v494, 0.0
  %510 = vadd.xlane.f32.xlu0 %v509
  %v511 = vpop.xlane.xlu0 %510
  %v512 = vsel %vm102, %v496, 0.0
  %513 = vadd.xlane.f32.xlu0 %v512
  %v514 = vpop.xlane.xlu0 %513
  %v515 = vrcp.pop %v499
  %v516 = vrcp.pop %v502
  %v517 = vrcp.pop %v505
  %v518 = vrcp.pop %v508
  %v519 = vrcp.pop %v511
  %v520 = vrcp.pop %v514
  %v521 = vmul.f32 %v486, %v515
  %v522 = vmul.f32 %v488, %v516
  %v523 = vmul.f32 %v490, %v517
  %v524 = vmul.f32 %v492, %v518
  %v525 = vmul.f32 %v494, %v519
  %v526 = vmul.f32 %v496, %v520
  %v527 = vpack.c.bf16 %v522, %v521
  %v528 = vpack.c.bf16 %v524, %v523
  %v529 = vpack.c.bf16 %v526, %v525
  %530 = vrot.lane.b32.xlu0 %v373, 64
  %v531 = vpop.permute.xlu0 %530
  %532 = vrot.lane.b32.xlu0 %v374, 64
  %v533 = vpop.permute.xlu0 %532
  %534 = vrot.lane.b32.xlu0 %v375, 64
  %v535 = vpop.permute.xlu0 %534
  %v540 = vsel %vm102, %v527, 0
  %v543 = vsel %vm102, %v528, 0
  %v546 = vsel %vm102, %v529, 0
  %548 = vmatprep.subr.bf16.mxu0 0
  %549 = vmatpush1.bf16.msra.mxu0 %v531
  %550 = vmatprep.subr.bf16.mxu0 0
  %551 = vmatpush1.bf16.msra.mxu0 %v533
  %552 = vmatprep.subr.bf16.mxu0 0
  %553 = vmatpush1.bf16.msra.mxu0 %v535
  %554 = vmatprep.subr.bf16.mxu0 0
  %555 = vmatpush1.bf16.msra.mxu0 0
  %556 = vmatprep.subr.bf16.mxu0 0
  %557 = vmatpush1.bf16.msra.mxu0 0
  %558 = vmatprep.subr.bf16.mxu0 0
  %559 = vmatpush1.bf16.msra.mxu0 0
  %560 = vmatprep.subr.bf16.mxu0 0
  %561 = vmatpush1.bf16.msra.mxu0 0
  %562 = vmatprep.subr.bf16.mxu0 0
  %563 = vmatpush1.bf16.msra.mxu0 0
  %564 = vmatprep.subr.bf16.mxu0 0
  %565 = vmatpush1.bf16.msra.mxu0 0
  %566 = vmatprep.subr.bf16.mxu0 0
  %567 = vmatpush1.bf16.msra.mxu0 0
  %568 = vmatprep.subr.bf16.mxu0 0
  %569 = vmatpush1.bf16.msra.mxu0 0
  %570 = vmatprep.subr.bf16.mxu0 0
  %571 = vmatpush1.bf16.msra.mxu0 0
  %572 = vmatprep.subr.bf16.mxu0 0
  %573 = vmatpush1.bf16.msra.mxu0 0
  %574 = vmatprep.subr.bf16.mxu0 0
  %575 = vmatpush1.bf16.msra.mxu0 0
  %576 = vmatprep.subr.bf16.mxu0 0
  %577 = vmatpush1.bf16.msra.mxu0 0
  %578 = vmatprep.subr.bf16.mxu0 0
  %579 = vmatpush1.bf16.msra.mxu0 0
  %580 = vmatprep.mubr.bf16.mxu0 0
  %581 = vmatmul.mubr.bf16.gmra.mrb[0].mxu0 %v540
  %v582 = vpop.f32.mrb[0].mxu0
  %v583 = vadd.f32 0.0, %v582
  %v584 = vpop.f32.mrb[0].mxu0
  %v585 = vpop.f32.mrb[0].mxu0
  %v586 = vadd.f32 0.0, %v585
  %v587 = vpop.f32.mrb[0].mxu0
  %588 = vmatprep.mubr.bf16.mxu0 0
  %589 = vmatmul.mubr.bf16.gmra.mrb[0].mxu0 %v543
  %v590 = vpop.f32.mrb[0].mxu0
  %v591 = vadd.f32 0.0, %v590
  %v592 = vpop.f32.mrb[0].mxu0
  %v593 = vpop.f32.mrb[0].mxu0
  %v594 = vadd.f32 0.0, %v593
  %v595 = vpop.f32.mrb[0].mxu0
  %596 = vmatprep.mubr.bf16.mxu0 0
  %597 = vmatmul.mubr.bf16.gmra.mrb[0].mxu0 %v546
  %v598 = vpop.f32.mrb[0].mxu0
  %v599 = vadd.f32 0.0, %v598
  %v600 = vpop.f32.mrb[0].mxu0
  %v601 = vpop.f32.mrb[0].mxu0
  %v602 = vadd.f32 0.0, %v601
  %v603 = vpop.f32.mrb[0].mxu0
  %604 = vdwg.mxu0
  %v605 = vld [vmem:[%s8] sm:$0xf]
  %v606 = vpack.c.bf16 %v586, %v583
  %v607 = vpack.c.bf16 %v594, %v591
  %v608 = vpack.c.bf16 %v602, %v599
  %609 = vrot.lane.b32.xlu0 %v373, 120
  %v610 = vpop.permute.xlu0 %609
  %611 = vrot.lane.b32.xlu0 %v374, 120
  %v612 = vpop.permute.xlu0 %611
  %613 = vrot.lane.b32.xlu0 %v375, 120
  %v614 = vpop.permute.xlu0 %613
  %615 = vrot.lane.b32.xlu0 %v373, 88
  %v616 = vpop.permute.xlu0 %615
  %617 = vrot.lane.b32.xlu0 %v374, 88
  %v618 = vpop.permute.xlu0 %617
  %619 = vrot.lane.b32.xlu0 %v375, 88
  %v620 = vpop.permute.xlu0 %619
  %v622 = vsel %vm385, %v610, 0
  %v625 = vsel %vm385, %v612, 0
  %v628 = vsel %vm385, %v614, 0
  %v631 = vsel %vm385, %v616, 0
  %v634 = vsel %vm385, %v618, 0
  %v637 = vsel %vm385, %v620, 0
  %639 = vmatprep.subr.bf16.mxu0 0
  %640 = vmatpush1.bf16.xpose.msra.mxu0 %v631
  %641 = vmatprep.subr.bf16.mxu0 0
  %642 = vmatpush1.bf16.xpose.msra.mxu0 %v634
  %643 = vmatprep.subr.bf16.mxu0 0
  %644 = vmatpush1.bf16.xpose.msra.mxu0 %v637
  %645 = vmatprep.subr.bf16.mxu0 0
  %646 = vmatpush1.bf16.xpose.msra.mxu0 0
  %647 = vmatprep.subr.bf16.mxu0 0
  %648 = vmatpush1.bf16.xpose.msra.mxu0 0
  %649 = vmatprep.subr.bf16.mxu0 0
  %650 = vmatpush1.bf16.xpose.msra.mxu0 0
  %651 = vmatprep.subr.bf16.mxu0 0
  %652 = vmatpush1.bf16.xpose.msra.mxu0 0
  %653 = vmatprep.subr.bf16.mxu0 0
  %654 = vmatpush1.bf16.xpose.msra.mxu0 0
  %655 = vmatprep.subr.bf16.mxu0 0
  %656 = vmatpush1.bf16.xpose.msra.mxu0 0
  %657 = vmatprep.subr.bf16.mxu0 0
  %658 = vmatpush1.bf16.xpose.msra.mxu0 0
  %659 = vmatprep.subr.bf16.mxu0 0
  %660 = vmatpush1.bf16.xpose.msra.mxu0 0
  %661 = vmatprep.subr.bf16.mxu0 0
  %662 = vmatpush1.bf16.xpose.msra.mxu0 0
  %663 = vmatprep.subr.bf16.mxu0 0
  %664 = vmatpush1.bf16.xpose.msra.mxu0 0
  %665 = vmatprep.subr.bf16.mxu0 0
  %666 = vmatpush1.bf16.xpose.msra.mxu0 0
  %667 = vmatprep.subr.bf16.mxu0 0
  %668 = vmatpush1.bf16.xpose.msra.mxu0 0
  %669 = vmatprep.subr.bf16.mxu0 0
  %670 = vmatpush1.bf16.xpose.msra.mxu0 0
  %671 = vmatprep.mubr.bf16.mxu0 0
  %672 = vmatmul.mubr.bf16.gmra.mrb[0].mxu0 %v622
  %v673 = vpop.f32.mrb[0].mxu0
  %v674 = vadd.f32 %v169, %v673
  %v675 = vpop.f32.mrb[0].mxu0
  %v676 = vpop.f32.mrb[0].mxu0
  %v677 = vadd.f32 %v170, %v676
  %v678 = vpop.f32.mrb[0].mxu0
  %679 = vmatprep.mubr.bf16.mxu0 0
  %680 = vmatmul.mubr.bf16.gmra.mrb[0].mxu0 %v625
  %v681 = vpop.f32.mrb[0].mxu0
  %v682 = vadd.f32 %v171, %v681
  %v683 = vpop.f32.mrb[0].mxu0
  %v684 = vpop.f32.mrb[0].mxu0
  %v685 = vadd.f32 %v172, %v684
  %v686 = vpop.f32.mrb[0].mxu0
  %687 = vmatprep.mubr.bf16.mxu0 0
  %688 = vmatmul.mubr.bf16.gmra.mrb[0].mxu0 %v628
  %v689 = vpop.f32.mrb[0].mxu0
  %v690 = vadd.f32 %v173, %v689
  %v691 = vpop.f32.mrb[0].mxu0
  %v692 = vpop.f32.mrb[0].mxu0
  %v693 = vadd.f32 %v174, %v692
  %v694 = vpop.f32.mrb[0].mxu0
  %695 = vdwg.mxu0
  %v696 = vsel %vm102, %v674, -inf
  %697 = vmax.xlane.f32.xlu0 %v696
  %v698 = vpop.xlane.xlu0 %697
  %v699 = vsel %vm102, %v677, -inf
  %700 = vmax.xlane.f32.xlu0 %v699
  %v701 = vpop.xlane.xlu0 %700
  %v702 = vsel %vm102, %v682, -inf
  %703 = vmax.xlane.f32.xlu0 %v702
  %v704 = vpop.xlane.xlu0 %703
  %v705 = vsel %vm102, %v685, -inf
  %706 = vmax.xlane.f32.xlu0 %v705
  %v707 = vpop.xlane.xlu0 %706
  %v708 = vsel %vm102, %v690, -inf
  %709 = vmax.xlane.f32.xlu0 %v708
  %v710 = vpop.xlane.xlu0 %709
  %v711 = vsel %vm102, %v693, -inf
  %712 = vmax.xlane.f32.xlu0 %v711
  %v713 = vpop.xlane.xlu0 %712
  %v714 = vsub.f32 %v674, %v698
  %v715 = vsub.f32 %v677, %v701
  %v716 = vsub.f32 %v682, %v704
  %v717 = vsub.f32 %v685, %v707
  %v718 = vsub.f32 %v690, %v710
  %v719 = vsub.f32 %v693, %v713
  %v720 = vmul.f32 %v714, 1.442695
  %v721 = vpow.pop %v720
  %v722 = vmul.f32 %v715, 1.442695
  %v723 = vpow.pop %v722
  %v724 = vmul.f32 %v716, 1.442695
  %v725 = vpow.pop %v724
  %v726 = vmul.f32 %v717, 1.442695
  %v727 = vpow.pop %v726
  %v728 = vmul.f32 %v718, 1.442695
  %v729 = vpow.pop %v728
  %v730 = vmul.f32 %v719, 1.442695
  %v731 = vpow.pop %v730
  %v732 = vsel %vm102, %v721, 0.0
  %733 = vadd.xlane.f32.xlu0 %v732
  %v734 = vpop.xlane.xlu0 %733
  %v735 = vsel %vm102, %v723, 0.0
  %736 = vadd.xlane.f32.xlu0 %v735
  %v737 = vpop.xlane.xlu0 %736
  %v738 = vsel %vm102, %v725, 0.0
  %739 = vadd.xlane.f32.xlu0 %v738
  %v740 = vpop.xlane.xlu0 %739
  %v741 = vsel %vm102, %v727, 0.0
  %742 = vadd.xlane.f32.xlu0 %v741
  %v743 = vpop.xlane.xlu0 %742
  %v744 = vsel %vm102, %v729, 0.0
  %745 = vadd.xlane.f32.xlu0 %v744
  %v746 = vpop.xlane.xlu0 %745
  %v747 = vsel %vm102, %v731, 0.0
  %748 = vadd.xlane.f32.xlu0 %v747
  %v749 = vpop.xlane.xlu0 %748
  %v750 = vrcp.pop %v734
  %v751 = vrcp.pop %v737
  %v752 = vrcp.pop %v740
  %v753 = vrcp.pop %v743
  %v754 = vrcp.pop %v746
  %v755 = vrcp.pop %v749
  %v756 = vmul.f32 %v721, %v750
  %v757 = vmul.f32 %v723, %v751
  %v758 = vmul.f32 %v725, %v752
  %v759 = vmul.f32 %v727, %v753
  %v760 = vmul.f32 %v729, %v754
  %v761 = vmul.f32 %v731, %v755
  %v762 = vpack.c.bf16 %v757, %v756
  %v763 = vpack.c.bf16 %v759, %v758
  %v764 = vpack.c.bf16 %v761, %v760
  %765 = vrot.lane.b32.xlu0 %v373, 56
  %v766 = vpop.permute.xlu0 %765
  %767 = vrot.lane.b32.xlu0 %v374, 56
  %v768 = vpop.permute.xlu0 %767
  %769 = vrot.lane.b32.xlu0 %v375, 56
  %v770 = vpop.permute.xlu0 %769
  %v775 = vsel %vm102, %v762, 0
  %v778 = vsel %vm102, %v763, 0
  %v781 = vsel %vm102, %v764, 0
  %783 = vmatprep.subr.bf16.mxu0 0
  %784 = vmatpush1.bf16.msra.mxu0 %v766
  %785 = vmatprep.subr.bf16.mxu0 0
  %786 = vmatpush1.bf16.msra.mxu0 %v768
  %787 = vmatprep.subr.bf16.mxu0 0
  %788 = vmatpush1.bf16.msra.mxu0 %v770
  %789 = vmatprep.subr.bf16.mxu0 0
  %790 = vmatpush1.bf16.msra.mxu0 0
  %791 = vmatprep.subr.bf16.mxu0 0
  %792 = vmatpush1.bf16.msra.mxu0 0
  %793 = vmatprep.subr.bf16.mxu0 0
  %794 = vmatpush1.bf16.msra.mxu0 0
  %795 = vmatprep.subr.bf16.mxu0 0
  %796 = vmatpush1.bf16.msra.mxu0 0
  %797 = vmatprep.subr.bf16.mxu0 0
  %798 = vmatpush1.bf16.msra.mxu0 0
  %799 = vmatprep.subr.bf16.mxu0 0
  %800 = vmatpush1.bf16.msra.mxu0 0
  %801 = vmatprep.subr.bf16.mxu0 0
  %802 = vmatpush1.bf16.msra.mxu0 0
  %803 = vmatprep.subr.bf16.mxu0 0
  %804 = vmatpush1.bf16.msra.mxu0 0
  %805 = vmatprep.subr.bf16.mxu0 0
  %806 = vmatpush1.bf16.msra.mxu0 0
  %807 = vmatprep.subr.bf16.mxu0 0
  %808 = vmatpush1.bf16.msra.mxu0 0
  %809 = vmatprep.subr.bf16.mxu0 0
  %810 = vmatpush1.bf16.msra.mxu0 0
  %811 = vmatprep.subr.bf16.mxu0 0
  %812 = vmatpush1.bf16.msra.mxu0 0
  %813 = vmatprep.subr.bf16.mxu0 0
  %814 = vmatpush1.bf16.msra.mxu0 0
  %815 = vmatprep.mubr.bf16.mxu0 0
  %816 = vmatmul.mubr.bf16.gmra.mrb[0].mxu0 %v775
  %v817 = vpop.f32.mrb[0].mxu0
  %v818 = vadd.f32 0.0, %v817
  %v819 = vpop.f32.mrb[0].mxu0
  %v820 = vpop.f32.mrb[0].mxu0
  %v821 = vadd.f32 0.0, %v820
  %v822 = vpop.f32.mrb[0].mxu0
  %823 = vmatprep.mubr.bf16.mxu0 0
  %824 = vmatmul.mubr.bf16.gmra.mrb[0].mxu0 %v778
  %v825 = vpop.f32.mrb[0].mxu0
  %v826 = vadd.f32 0.0, %v825
  %v827 = vpop.f32.mrb[0].mxu0
  %v828 = vpop.f32.mrb[0].mxu0
  %v829 = vadd.f32 0.0, %v828
  %v830 = vpop.f32.mrb[0].mxu0
  %831 = vmatprep.mubr.bf16.mxu0 0
  %832 = vmatmul.mubr.bf16.gmra.mrb[0].mxu0 %v781
  %v833 = vpop.f32.mrb[0].mxu0
  %v834 = vadd.f32 0.0, %v833
  %v835 = vpop.f32.mrb[0].mxu0
  %v836 = vpop.f32.mrb[0].mxu0
  %v837 = vadd.f32 0.0, %v836
  %v838 = vpop.f32.mrb[0].mxu0
  %839 = vdwg.mxu0
  %s840 = scalar_lea.vmem %s8, 4
  %v841 = vld [vmem:[%s840] sm:$0xf]
  %v842 = vpack.c.bf16 %v821, %v818
  %v843 = vpack.c.bf16 %v829, %v826
  %v844 = vpack.c.bf16 %v837, %v834
  %v846 = vsel %vm385, %v842, 0
  %v849 = vsel %vm385, %v843, 0
  %v852 = vsel %vm385, %v844, 0
  %vm854 = vcmask 1043456
  %v856 = vsel %vm854, %v841, 0
  %858 = vmatprep.subr.bf16.mxu0 0
  %859 = vmatpush1.bf16.msra.mxu0 %v856
  %860 = vmatprep.subr.bf16.mxu0 0
  %861 = vmatpush1.bf16.msra.mxu0 0
  %862 = vmatprep.subr.bf16.mxu0 0
  %863 = vmatpush1.bf16.msra.mxu0 0
  %864 = vmatprep.subr.bf16.mxu0 0
  %865 = vmatpush1.bf16.msra.mxu0 0
  %866 = vmatprep.subr.bf16.mxu0 0
  %867 = vmatpush1.bf16.msra.mxu0 0
  %868 = vmatprep.subr.bf16.mxu0 0
  %869 = vmatpush1.bf16.msra.mxu0 0
  %870 = vmatprep.subr.bf16.mxu0 0
  %871 = vmatpush1.bf16.msra.mxu0 0
  %872 = vmatprep.subr.bf16.mxu0 0
  %873 = vmatpush1.bf16.msra.mxu0 0
  %874 = vmatprep.subr.bf16.mxu0 0
  %875 = vmatpush1.bf16.msra.mxu0 0
  %876 = vmatprep.subr.bf16.mxu0 0
  %877 = vmatpush1.bf16.msra.mxu0 0
  %878 = vmatprep.subr.bf16.mxu0 0
  %879 = vmatpush1.bf16.msra.mxu0 0
  %880 = vmatprep.subr.bf16.mxu0 0
  %881 = vmatpush1.bf16.msra.mxu0 0
  %882 = vmatprep.subr.bf16.mxu0 0
  %883 = vmatpush1.bf16.msra.mxu0 0
  %884 = vmatprep.subr.bf16.mxu0 0
  %885 = vmatpush1.bf16.msra.mxu0 0
  %886 = vmatprep.subr.bf16.mxu0 0
  %887 = vmatpush1.bf16.msra.mxu0 0
  %888 = vmatprep.subr.bf16.mxu0 0
  %889 = vmatpush1.bf16.msra.mxu0 0
  %890 = vmatprep.mubr.bf16.mxu0 0
  %891 = vmatmul.mubr.bf16.gmra.mrb[0].mxu0 %v846
  %v892 = vpop.f32.mrb[0].mxu0
  %v893 = vadd.f32 0.0, %v892
  %v894 = vpop.f32.mrb[0].mxu0
  %v895 = vpop.f32.mrb[0].mxu0
  %v896 = vadd.f32 0.0, %v895
  %v897 = vpop.f32.mrb[0].mxu0
  %898 = vmatprep.mubr.bf16.mxu0 0
  %899 = vmatmul.mubr.bf16.gmra.mrb[0].mxu0 %v849
  %v900 = vpop.f32.mrb[0].mxu0
  %v901 = vadd.f32 0.0, %v900
  %v902 = vpop.f32.mrb[0].mxu0
  %v903 = vpop.f32.mrb[0].mxu0
  %v904 = vadd.f32 0.0, %v903
  %v905 = vpop.f32.mrb[0].mxu0
  %906 = vmatprep.mubr.bf16.mxu0 0
  %907 = vmatmul.mubr.bf16.gmra.mrb[0].mxu0 %v852
  %v908 = vpop.f32.mrb[0].mxu0
  %v909 = vadd.f32 0.0, %v908
  %v910 = vpop.f32.mrb[0].mxu0
  %v911 = vpop.f32.mrb[0].mxu0
  %v912 = vadd.f32 0.0, %v911
  %v913 = vpop.f32.mrb[0].mxu0
  %914 = vdwg.mxu0
  %v916 = vsel %vm385, %v606, 0
  %v919 = vsel %vm385, %v607, 0
  %v922 = vsel %vm385, %v608, 0
  %v925 = vsel %vm854, %v605, 0
  %927 = vmatprep.subr.bf16.mxu0 0
  %928 = vmatpush1.bf16.msra.mxu0 %v925
  %929 = vmatprep.subr.bf16.mxu0 0
  %930 = vmatpush1.bf16.msra.mxu0 0
  %931 = vmatprep.subr.bf16.mxu0 0
  %932 = vmatpush1.bf16.msra.mxu0 0
  %933 = vmatprep.subr.bf16.mxu0 0
  %934 = vmatpush1.bf16.msra.mxu0 0
  %935 = vmatprep.subr.bf16.mxu0 0
  %936 = vmatpush1.bf16.msra.mxu0 0
  %937 = vmatprep.subr.bf16.mxu0 0
  %938 = vmatpush1.bf16.msra.mxu0 0
  %939 = vmatprep.subr.bf16.mxu0 0
  %940 = vmatpush1.bf16.msra.mxu0 0
  %941 = vmatprep.subr.bf16.mxu0 0
  %942 = vmatpush1.bf16.msra.mxu0 0
  %943 = vmatprep.subr.bf16.mxu0 0
  %944 = vmatpush1.bf16.msra.mxu0 0
  %945 = vmatprep.subr.bf16.mxu0 0
  %946 = vmatpush1.bf16.msra.mxu0 0
  %947 = vmatprep.subr.bf16.mxu0 0
  %948 = vmatpush1.bf16.msra.mxu0 0
  %949 = vmatprep.subr.bf16.mxu0 0
  %950 = vmatpush1.bf16.msra.mxu0 0
  %951 = vmatprep.subr.bf16.mxu0 0
  %952 = vmatpush1.bf16.msra.mxu0 0
  %953 = vmatprep.subr.bf16.mxu0 0
  %954 = vmatpush1.bf16.msra.mxu0 0
  %955 = vmatprep.subr.bf16.mxu0 0
  %956 = vmatpush1.bf16.msra.mxu0 0
  %957 = vmatprep.subr.bf16.mxu0 0
  %958 = vmatpush1.bf16.msra.mxu0 0
  %959 = vmatprep.mubr.bf16.mxu0 0
  %960 = vmatmul.mubr.bf16.gmra.mrb[0].mxu0 %v916
  %v961 = vpop.f32.mrb[0].mxu0
  %v962 = vadd.f32 %v893, %v961
  %v963 = vpop.f32.mrb[0].mxu0
  %v964 = vpop.f32.mrb[0].mxu0
  %v965 = vadd.f32 %v896, %v964
  %v966 = vpop.f32.mrb[0].mxu0
  %967 = vmatprep.mubr.bf16.mxu0 0
  %968 = vmatmul.mubr.bf16.gmra.mrb[0].mxu0 %v919
  %v969 = vpop.f32.mrb[0].mxu0
  %v970 = vadd.f32 %v901, %v969
  %v971 = vpop.f32.mrb[0].mxu0
  %v972 = vpop.f32.mrb[0].mxu0
  %v973 = vadd.f32 %v904, %v972
  %v974 = vpop.f32.mrb[0].mxu0
  %975 = vmatprep.mubr.bf16.mxu0 0
  %976 = vmatmul.mubr.bf16.gmra.mrb[0].mxu0 %v922
  %v977 = vpop.f32.mrb[0].mxu0
  %v978 = vadd.f32 %v909, %v977
  %v979 = vpop.f32.mrb[0].mxu0
  %v980 = vpop.f32.mrb[0].mxu0
  %v981 = vadd.f32 %v912, %v980
  %v982 = vpop.f32.mrb[0].mxu0
  %983 = vdwg.mxu0
  %984 = vrot.lane.b32.xlu0 %v373, 112
  %v985 = vpop.permute.xlu0 %984
  %986 = vrot.lane.b32.xlu0 %v374, 112
  %v987 = vpop.permute.xlu0 %986
  %988 = vrot.lane.b32.xlu0 %v375, 112
  %v989 = vpop.permute.xlu0 %988
  %990 = vrot.lane.b32.xlu0 %v373, 80
  %v991 = vpop.permute.xlu0 %990
  %992 = vrot.lane.b32.xlu0 %v374, 80
  %v993 = vpop.permute.xlu0 %992
  %994 = vrot.lane.b32.xlu0 %v375, 80
  %v995 = vpop.permute.xlu0 %994
  %v997 = vsel %vm385, %v985, 0
  %v1000 = vsel %vm385, %v987, 0
  %v1003 = vsel %vm385, %v989, 0
  %v1006 = vsel %vm385, %v991, 0
  %v1009 = vsel %vm385, %v993, 0
  %v1012 = vsel %vm385, %v995, 0
  %1014 = vmatprep.subr.bf16.mxu0 0
  %1015 = vmatpush1.bf16.xpose.msra.mxu0 %v1006
  %1016 = vmatprep.subr.bf16.mxu0 0
  %1017 = vmatpush1.bf16.xpose.msra.mxu0 %v1009
  %1018 = vmatprep.subr.bf16.mxu0 0
  %1019 = vmatpush1.bf16.xpose.msra.mxu0 %v1012
  %1020 = vmatprep.subr.bf16.mxu0 0
  %1021 = vmatpush1.bf16.xpose.msra.mxu0 0
  %1022 = vmatprep.subr.bf16.mxu0 0
  %1023 = vmatpush1.bf16.xpose.msra.mxu0 0
  %1024 = vmatprep.subr.bf16.mxu0 0
  %1025 = vmatpush1.bf16.xpose.msra.mxu0 0
  %1026 = vmatprep.subr.bf16.mxu0 0
  %1027 = vmatpush1.bf16.xpose.msra.mxu0 0
  %1028 = vmatprep.subr.bf16.mxu0 0
  %1029 = vmatpush1.bf16.xpose.msra.mxu0 0
  %1030 = vmatprep.subr.bf16.mxu0 0
  %1031 = vmatpush1.bf16.xpose.msra.mxu0 0
  %1032 = vmatprep.subr.bf16.mxu0 0
  %1033 = vmatpush1.bf16.xpose.msra.mxu0 0
  %1034 = vmatprep.subr.bf16.mxu0 0
  %1035 = vmatpush1.bf16.xpose.msra.mxu0 0
  %1036 = vmatprep.subr.bf16.mxu0 0
  %1037 = vmatpush1.bf16.xpose.msra.mxu0 0
  %1038 = vmatprep.subr.bf16.mxu0 0
  %1039 = vmatpush1.bf16.xpose.msra.mxu0 0
  %1040 = vmatprep.subr.bf16.mxu0 0
  %1041 = vmatpush1.bf16.xpose.msra.mxu0 0
  %1042 = vmatprep.subr.bf16.mxu0 0
  %1043 = vmatpush1.bf16.xpose.msra.mxu0 0
  %1044 = vmatprep.subr.bf16.mxu0 0
  %1045 = vmatpush1.bf16.xpose.msra.mxu0 0
  %1046 = vmatprep.mubr.bf16.mxu0 0
  %1047 = vmatmul.mubr.bf16.gmra.mrb[0].mxu0 %v997
  %v1048 = vpop.f32.mrb[0].mxu0
  %v1049 = vadd.f32 %v169, %v1048
  %v1050 = vpop.f32.mrb[0].mxu0
  %v1051 = vpop.f32.mrb[0].mxu0
  %v1052 = vadd.f32 %v170, %v1051
  %v1053 = vpop.f32.mrb[0].mxu0
  %1054 = vmatprep.mubr.bf16.mxu0 0
  %1055 = vmatmul.mubr.bf16.gmra.mrb[0].mxu0 %v1000
  %v1056 = vpop.f32.mrb[0].mxu0
  %v1057 = vadd.f32 %v171, %v1056
  %v1058 = vpop.f32.mrb[0].mxu0
  %v1059 = vpop.f32.mrb[0].mxu0
  %v1060 = vadd.f32 %v172, %v1059
  %v1061 = vpop.f32.mrb[0].mxu0
  %1062 = vmatprep.mubr.bf16.mxu0 0
  %1063 = vmatmul.mubr.bf16.gmra.mrb[0].mxu0 %v1003
  %v1064 = vpop.f32.mrb[0].mxu0
  %v1065 = vadd.f32 %v173, %v1064
  %v1066 = vpop.f32.mrb[0].mxu0
  %v1067 = vpop.f32.mrb[0].mxu0
  %v1068 = vadd.f32 %v174, %v1067
  %v1069 = vpop.f32.mrb[0].mxu0
  %1070 = vdwg.mxu0
  %v1071 = vsel %vm102, %v1049, -inf
  %1072 = vmax.xlane.f32.xlu0 %v1071
  %v1073 = vpop.xlane.xlu0 %1072
  %v1074 = vsel %vm102, %v1052, -inf
  %1075 = vmax.xlane.f32.xlu0 %v1074
  %v1076 = vpop.xlane.xlu0 %1075
  %v1077 = vsel %vm102, %v1057, -inf
  %1078 = vmax.xlane.f32.xlu0 %v1077
  %v1079 = vpop.xlane.xlu0 %1078
  %v1080 = vsel %vm102, %v1060, -inf
  %1081 = vmax.xlane.f32.xlu0 %v1080
  %v1082 = vpop.xlane.xlu0 %1081
  %v1083 = vsel %vm102, %v1065, -inf
  %1084 = vmax.xlane.f32.xlu0 %v1083
  %v1085 = vpop.xlane.xlu0 %1084
  %v1086 = vsel %vm102, %v1068, -inf
  %1087 = vmax.xlane.f32.xlu0 %v1086
  %v1088 = vpop.xlane.xlu0 %1087
  %v1089 = vsub.f32 %v1049, %v1073
  %v1090 = vsub.f32 %v1052, %v1076
  %v1091 = vsub.f32 %v1057, %v1079
  %v1092 = vsub.f32 %v1060, %v1082
  %v1093 = vsub.f32 %v1065, %v1085
  %v1094 = vsub.f32 %v1068, %v1088
  %v1095 = vmul.f32 %v1089, 1.442695
  %v1096 = vpow.pop %v1095
  %v1097 = vmul.f32 %v1090, 1.442695
  %v1098 = vpow.pop %v1097
  %v1099 = vmul.f32 %v1091, 1.442695
  %v1100 = vpow.pop %v1099
  %v1101 = vmul.f32 %v1092, 1.442695
  %v1102 = vpow.pop %v1101
  %v1103 = vmul.f32 %v1093, 1.442695
  %v1104 = vpow.pop %v1103
  %v1105 = vmul.f32 %v1094, 1.442695
  %v1106 = vpow.pop %v1105
  %v1107 = vsel %vm102, %v1096, 0.0
  %1108 = vadd.xlane.f32.xlu0 %v1107
  %v1109 = vpop.xlane.xlu0 %1108
  %v1110 = vsel %vm102, %v1098, 0.0
  %1111 = vadd.xlane.f32.xlu0 %v1110
  %v1112 = vpop.xlane.xlu0 %1111
  %v1113 = vsel %vm102, %v1100, 0.0
  %1114 = vadd.xlane.f32.xlu0 %v1113
  %v1115 = vpop.xlane.xlu0 %1114
  %v1116 = vsel %vm102, %v1102, 0.0
  %1117 = vadd.xlane.f32.xlu0 %v1116
  %v1118 = vpop.xlane.xlu0 %1117
  %v1119 = vsel %vm102, %v1104, 0.0
  %1120 = vadd.xlane.f32.xlu0 %v1119
  %v1121 = vpop.xlane.xlu0 %1120
  %v1122 = vsel %vm102, %v1106, 0.0
  %1123 = vadd.xlane.f32.xlu0 %v1122
  %v1124 = vpop.xlane.xlu0 %1123
  %v1125 = vrcp.pop %v1109
  %v1126 = vrcp.pop %v1112
  %v1127 = vrcp.pop %v1115
  %v1128 = vrcp.pop %v1118
  %v1129 = vrcp.pop %v1121
  %v1130 = vrcp.pop %v1124
  %v1131 = vmul.f32 %v1096, %v1125
  %v1132 = vmul.f32 %v1098, %v1126
  %v1133 = vmul.f32 %v1100, %v1127
  %v1134 = vmul.f32 %v1102, %v1128
  %v1135 = vmul.f32 %v1104, %v1129
  %v1136 = vmul.f32 %v1106, %v1130
  %v1137 = vpack.c.bf16 %v1132, %v1131
  %v1138 = vpack.c.bf16 %v1134, %v1133
  %v1139 = vpack.c.bf16 %v1136, %v1135
  %1140 = vrot.lane.b32.xlu0 %v373, 48
  %v1141 = vpop.permute.xlu0 %1140
  %1142 = vrot.lane.b32.xlu0 %v374, 48
  %v1143 = vpop.permute.xlu0 %1142
  %1144 = vrot.lane.b32.xlu0 %v375, 48
  %v1145 = vpop.permute.xlu0 %1144
  %v1150 = vsel %vm102, %v1137, 0
  %v1153 = vsel %vm102, %v1138, 0
  %v1156 = vsel %vm102, %v1139, 0
  %1158 = vmatprep.subr.bf16.mxu0 0
  %1159 = vmatpush1.bf16.msra.mxu0 %v1141
  %1160 = vmatprep.subr.bf16.mxu0 0
  %1161 = vmatpush1.bf16.msra.mxu0 %v1143
  %1162 = vmatprep.subr.bf16.mxu0 0
  %1163 = vmatpush1.bf16.msra.mxu0 %v1145
  %1164 = vmatprep.subr.bf16.mxu0 0
  %1165 = vmatpush1.bf16.msra.mxu0 0
  %1166 = vmatprep.subr.bf16.mxu0 0
  %1167 = vmatpush1.bf16.msra.mxu0 0
  %1168 = vmatprep.subr.bf16.mxu0 0
  %1169 = vmatpush1.bf16.msra.mxu0 0
  %1170 = vmatprep.subr.bf16.mxu0 0
  %1171 = vmatpush1.bf16.msra.mxu0 0
  %1172 = vmatprep.subr.bf16.mxu0 0
  %1173 = vmatpush1.bf16.msra.mxu0 0
  %1174 = vmatprep.subr.bf16.mxu0 0
  %1175 = vmatpush1.bf16.msra.mxu0 0
  %1176 = vmatprep.subr.bf16.mxu0 0
  %1177 = vmatpush1.bf16.msra.mxu0 0
  %1178 = vmatprep.subr.bf16.mxu0 0
  %1179 = vmatpush1.bf16.msra.mxu0 0
  %1180 = vmatprep.subr.bf16.mxu0 0
  %1181 = vmatpush1.bf16.msra.mxu0 0
  %1182 = vmatprep.subr.bf16.mxu0 0
  %1183 = vmatpush1.bf16.msra.mxu0 0
  %1184 = vmatprep.subr.bf16.mxu0 0
  %1185 = vmatpush1.bf16.msra.mxu0 0
  %1186 = vmatprep.subr.bf16.mxu0 0
  %1187 = vmatpush1.bf16.msra.mxu0 0
  %1188 = vmatprep.subr.bf16.mxu0 0
  %1189 = vmatpush1.bf16.msra.mxu0 0
  %1190 = vmatprep.mubr.bf16.mxu0 0
  %1191 = vmatmul.mubr.bf16.gmra.mrb[0].mxu0 %v1150
  %v1192 = vpop.f32.mrb[0].mxu0
  %v1193 = vadd.f32 0.0, %v1192
  %v1194 = vpop.f32.mrb[0].mxu0
  %v1195 = vpop.f32.mrb[0].mxu0
  %v1196 = vadd.f32 0.0, %v1195
  %v1197 = vpop.f32.mrb[0].mxu0
  %1198 = vmatprep.mubr.bf16.mxu0 0
  %1199 = vmatmul.mubr.bf16.gmra.mrb[0].mxu0 %v1153
  %v1200 = vpop.f32.mrb[0].mxu0
  %v1201 = vadd.f32 0.0, %v1200
  %v1202 = vpop.f32.mrb[0].mxu0
  %v1203 = vpop.f32.mrb[0].mxu0
  %v1204 = vadd.f32 0.0, %v1203
  %v1205 = vpop.f32.mrb[0].mxu0
  %1206 = vmatprep.mubr.bf16.mxu0 0
  %1207 = vmatmul.mubr.bf16.gmra.mrb[0].mxu0 %v1156
  %v1208 = vpop.f32.mrb[0].mxu0
  %v1209 = vadd.f32 0.0, %v1208
  %v1210 = vpop.f32.mrb[0].mxu0
  %v1211 = vpop.f32.mrb[0].mxu0
  %v1212 = vadd.f32 0.0, %v1211
  %v1213 = vpop.f32.mrb[0].mxu0
  %1214 = vdwg.mxu0
  %s1215 = scalar_lea.vmem %s8, 8
  %v1216 = vld [vmem:[%s1215] sm:$0xf]
  %v1217 = vpack.c.bf16 %v1196, %v1193
  %v1218 = vpack.c.bf16 %v1204, %v1201
  %v1219 = vpack.c.bf16 %v1212, %v1209
  %v1221 = vsel %vm385, %v1217, 0
  %v1224 = vsel %vm385, %v1218, 0
  %v1227 = vsel %vm385, %v1219, 0
  %v1230 = vsel %vm854, %v1216, 0
  %1232 = vmatprep.subr.bf16.mxu0 0
  %1233 = vmatpush1.bf16.msra.mxu0 %v1230
  %1234 = vmatprep.subr.bf16.mxu0 0
  %1235 = vmatpush1.bf16.msra.mxu0 0
  %1236 = vmatprep.subr.bf16.mxu0 0
  %1237 = vmatpush1.bf16.msra.mxu0 0
  %1238 = vmatprep.subr.bf16.mxu0 0
  %1239 = vmatpush1.bf16.msra.mxu0 0
  %1240 = vmatprep.subr.bf16.mxu0 0
  %1241 = vmatpush1.bf16.msra.mxu0 0
  %1242 = vmatprep.subr.bf16.mxu0 0
  %1243 = vmatpush1.bf16.msra.mxu0 0
  %1244 = vmatprep.subr.bf16.mxu0 0
  %1245 = vmatpush1.bf16.msra.mxu0 0
  %1246 = vmatprep.subr.bf16.mxu0 0
  %1247 = vmatpush1.bf16.msra.mxu0 0
  %1248 = vmatprep.subr.bf16.mxu0 0
  %1249 = vmatpush1.bf16.msra.mxu0 0
  %1250 = vmatprep.subr.bf16.mxu0 0
  %1251 = vmatpush1.bf16.msra.mxu0 0
  %1252 = vmatprep.subr.bf16.mxu0 0
  %1253 = vmatpush1.bf16.msra.mxu0 0
  %1254 = vmatprep.subr.bf16.mxu0 0
  %1255 = vmatpush1.bf16.msra.mxu0 0
  %1256 = vmatprep.subr.bf16.mxu0 0
  %1257 = vmatpush1.bf16.msra.mxu0 0
  %1258 = vmatprep.subr.bf16.mxu0 0
  %1259 = vmatpush1.bf16.msra.mxu0 0
  %1260 = vmatprep.subr.bf16.mxu0 0
  %1261 = vmatpush1.bf16.msra.mxu0 0
  %1262 = vmatprep.subr.bf16.mxu0 0
  %1263 = vmatpush1.bf16.msra.mxu0 0
  %1264 = vmatprep.mubr.bf16.mxu0 0
  %1265 = vmatmul.mubr.bf16.gmra.mrb[0].mxu0 %v1221
  %v1266 = vpop.f32.mrb[0].mxu0
  %v1267 = vadd.f32 0.0, %v1266
  %v1268 = vpop.f32.mrb[0].mxu0
  %v1269 = vpop.f32.mrb[0].mxu0
  %v1270 = vadd.f32 0.0, %v1269
  %v1271 = vpop.f32.mrb[0].mxu0
  %1272 = vmatprep.mubr.bf16.mxu0 0
  %1273 = vmatmul.mubr.bf16.gmra.mrb[0].mxu0 %v1224
  %v1274 = vpop.f32.mrb[0].mxu0
  %v1275 = vadd.f32 0.0, %v1274
  %v1276 = vpop.f32.mrb[0].mxu0
  %v1277 = vpop.f32.mrb[0].mxu0
  %v1278 = vadd.f32 0.0, %v1277
  %v1279 = vpop.f32.mrb[0].mxu0
  %1280 = vmatprep.mubr.bf16.mxu0 0
  %1281 = vmatmul.mubr.bf16.gmra.mrb[0].mxu0 %v1227
  %v1282 = vpop.f32.mrb[0].mxu0
  %v1283 = vadd.f32 0.0, %v1282
  %v1284 = vpop.f32.mrb[0].mxu0
  %v1285 = vpop.f32.mrb[0].mxu0
  %v1286 = vadd.f32 0.0, %v1285
  %v1287 = vpop.f32.mrb[0].mxu0
  %1288 = vdwg.mxu0
  %v1289 = vadd.f32 %v962, %v1267
  %v1290 = vadd.f32 %v965, %v1270
  %v1291 = vadd.f32 %v970, %v1275
  %v1292 = vadd.f32 %v973, %v1278
  %v1293 = vadd.f32 %v978, %v1283
  %v1294 = vadd.f32 %v981, %v1286
  %1295 = vrot.lane.b32.xlu0 %v373, 104
  %v1296 = vpop.permute.xlu0 %1295
  %1297 = vrot.lane.b32.xlu0 %v374, 104
  %v1298 = vpop.permute.xlu0 %1297
  %1299 = vrot.lane.b32.xlu0 %v375, 104
  %v1300 = vpop.permute.xlu0 %1299
  %1301 = vrot.lane.b32.xlu0 %v373, 72
  %v1302 = vpop.permute.xlu0 %1301
  %1303 = vrot.lane.b32.xlu0 %v374, 72
  %v1304 = vpop.permute.xlu0 %1303
  %1305 = vrot.lane.b32.xlu0 %v375, 72
  %v1306 = vpop.permute.xlu0 %1305
  %v1308 = vsel %vm385, %v1296, 0
  %v1311 = vsel %vm385, %v1298, 0
  %v1314 = vsel %vm385, %v1300, 0
  %v1317 = vsel %vm385, %v1302, 0
  %v1320 = vsel %vm385, %v1304, 0
  %v1323 = vsel %vm385, %v1306, 0
  %1325 = vmatprep.subr.bf16.mxu0 0
  %1326 = vmatpush1.bf16.xpose.msra.mxu0 %v1317
  %1327 = vmatprep.subr.bf16.mxu0 0
  %1328 = vmatpush1.bf16.xpose.msra.mxu0 %v1320
  %1329 = vmatprep.subr.bf16.mxu0 0
  %1330 = vmatpush1.bf16.xpose.msra.mxu0 %v1323
  %1331 = vmatprep.subr.bf16.mxu0 0
  %1332 = vmatpush1.bf16.xpose.msra.mxu0 0
  %1333 = vmatprep.subr.bf16.mxu0 0
  %1334 = vmatpush1.bf16.xpose.msra.mxu0 0
  %1335 = vmatprep.subr.bf16.mxu0 0
  %1336 = vmatpush1.bf16.xpose.msra.mxu0 0
  %1337 = vmatprep.subr.bf16.mxu0 0
  %1338 = vmatpush1.bf16.xpose.msra.mxu0 0
  %1339 = vmatprep.subr.bf16.mxu0 0
  %1340 = vmatpush1.bf16.xpose.msra.mxu0 0
  %1341 = vmatprep.subr.bf16.mxu0 0
  %1342 = vmatpush1.bf16.xpose.msra.mxu0 0
  %1343 = vmatprep.subr.bf16.mxu0 0
  %1344 = vmatpush1.bf16.xpose.msra.mxu0 0
  %1345 = vmatprep.subr.bf16.mxu0 0
  %1346 = vmatpush1.bf16.xpose.msra.mxu0 0
  %1347 = vmatprep.subr.bf16.mxu0 0
  %1348 = vmatpush1.bf16.xpose.msra.mxu0 0
  %1349 = vmatprep.subr.bf16.mxu0 0
  %1350 = vmatpush1.bf16.xpose.msra.mxu0 0
  %1351 = vmatprep.subr.bf16.mxu0 0
  %1352 = vmatpush1.bf16.xpose.msra.mxu0 0
  %1353 = vmatprep.subr.bf16.mxu0 0
  %1354 = vmatpush1.bf16.xpose.msra.mxu0 0
  %1355 = vmatprep.subr.bf16.mxu0 0
  %1356 = vmatpush1.bf16.xpose.msra.mxu0 0
  %1357 = vmatprep.mubr.bf16.mxu0 0
  %1358 = vmatmul.mubr.bf16.gmra.mrb[0].mxu0 %v1308
  %v1359 = vpop.f32.mrb[0].mxu0
  %v1360 = vadd.f32 %v169, %v1359
  %v1361 = vpop.f32.mrb[0].mxu0
  %v1362 = vpop.f32.mrb[0].mxu0
  %v1363 = vadd.f32 %v170, %v1362
  %v1364 = vpop.f32.mrb[0].mxu0
  %1365 = vmatprep.mubr.bf16.mxu0 0
  %1366 = vmatmul.mubr.bf16.gmra.mrb[0].mxu0 %v1311
  %v1367 = vpop.f32.mrb[0].mxu0
  %v1368 = vadd.f32 %v171, %v1367
  %v1369 = vpop.f32.mrb[0].mxu0
  %v1370 = vpop.f32.mrb[0].mxu0
  %v1371 = vadd.f32 %v172, %v1370
  %v1372 = vpop.f32.mrb[0].mxu0
  %1373 = vmatprep.mubr.bf16.mxu0 0
  %1374 = vmatmul.mubr.bf16.gmra.mrb[0].mxu0 %v1314
  %v1375 = vpop.f32.mrb[0].mxu0
  %v1376 = vadd.f32 %v173, %v1375
  %v1377 = vpop.f32.mrb[0].mxu0
  %v1378 = vpop.f32.mrb[0].mxu0
  %v1379 = vadd.f32 %v174, %v1378
  %v1380 = vpop.f32.mrb[0].mxu0
  %1381 = vdwg.mxu0
  %v1382 = vsel %vm102, %v1360, -inf
  %1383 = vmax.xlane.f32.xlu0 %v1382
  %v1384 = vpop.xlane.xlu0 %1383
  %v1385 = vsel %vm102, %v1363, -inf
  %1386 = vmax.xlane.f32.xlu0 %v1385
  %v1387 = vpop.xlane.xlu0 %1386
  %v1388 = vsel %vm102, %v1368, -inf
  %1389 = vmax.xlane.f32.xlu0 %v1388
  %v1390 = vpop.xlane.xlu0 %1389
  %v1391 = vsel %vm102, %v1371, -inf
  %1392 = vmax.xlane.f32.xlu0 %v1391
  %v1393 = vpop.xlane.xlu0 %1392
  %v1394 = vsel %vm102, %v1376, -inf
  %1395 = vmax.xlane.f32.xlu0 %v1394
  %v1396 = vpop.xlane.xlu0 %1395
  %v1397 = vsel %vm102, %v1379, -inf
  %1398 = vmax.xlane.f32.xlu0 %v1397
  %v1399 = vpop.xlane.xlu0 %1398
  %v1400 = vsub.f32 %v1360, %v1384
  %v1401 = vsub.f32 %v1363, %v1387
  %v1402 = vsub.f32 %v1368, %v1390
  %v1403 = vsub.f32 %v1371, %v1393
  %v1404 = vsub.f32 %v1376, %v1396
  %v1405 = vsub.f32 %v1379, %v1399
  %v1406 = vmul.f32 %v1400, 1.442695
  %v1407 = vpow.pop %v1406
  %v1408 = vmul.f32 %v1401, 1.442695
  %v1409 = vpow.pop %v1408
  %v1410 = vmul.f32 %v1402, 1.442695
  %v1411 = vpow.pop %v1410
  %v1412 = vmul.f32 %v1403, 1.442695
  %v1413 = vpow.pop %v1412
  %v1414 = vmul.f32 %v1404, 1.442695
  %v1415 = vpow.pop %v1414
  %v1416 = vmul.f32 %v1405, 1.442695
  %v1417 = vpow.pop %v1416
  %v1418 = vsel %vm102, %v1407, 0.0
  %1419 = vadd.xlane.f32.xlu0 %v1418
  %v1420 = vpop.xlane.xlu0 %1419
  %v1421 = vsel %vm102, %v1409, 0.0
  %1422 = vadd.xlane.f32.xlu0 %v1421
  %v1423 = vpop.xlane.xlu0 %1422
  %v1424 = vsel %vm102, %v1411, 0.0
  %1425 = vadd.xlane.f32.xlu0 %v1424
  %v1426 = vpop.xlane.xlu0 %1425
  %v1427 = vsel %vm102, %v1413, 0.0
  %1428 = vadd.xlane.f32.xlu0 %v1427
  %v1429 = vpop.xlane.xlu0 %1428
  %v1430 = vsel %vm102, %v1415, 0.0
  %1431 = vadd.xlane.f32.xlu0 %v1430
  %v1432 = vpop.xlane.xlu0 %1431
  %v1433 = vsel %vm102, %v1417, 0.0
  %1434 = vadd.xlane.f32.xlu0 %v1433
  %v1435 = vpop.xlane.xlu0 %1434
  %v1436 = vrcp.pop %v1420
  %v1437 = vrcp.pop %v1423
  %v1438 = vrcp.pop %v1426
  %v1439 = vrcp.pop %v1429
  %v1440 = vrcp.pop %v1432
  %v1441 = vrcp.pop %v1435
  %v1442 = vmul.f32 %v1407, %v1436
  %v1443 = vmul.f32 %v1409, %v1437
  %v1444 = vmul.f32 %v1411, %v1438
  %v1445 = vmul.f32 %v1413, %v1439
  %v1446 = vmul.f32 %v1415, %v1440
  %v1447 = vmul.f32 %v1417, %v1441
  %v1448 = vpack.c.bf16 %v1443, %v1442
  %v1449 = vpack.c.bf16 %v1445, %v1444
  %v1450 = vpack.c.bf16 %v1447, %v1446
  %1451 = vrot.lane.b32.xlu0 %v373, 40
  %v1452 = vpop.permute.xlu0 %1451
  %1453 = vrot.lane.b32.xlu0 %v374, 40
  %v1454 = vpop.permute.xlu0 %1453
  %1455 = vrot.lane.b32.xlu0 %v375, 40
  %v1456 = vpop.permute.xlu0 %1455
  %v1461 = vsel %vm102, %v1448, 0
  %v1464 = vsel %vm102, %v1449, 0
  %v1467 = vsel %vm102, %v1450, 0
  %1469 = vmatprep.subr.bf16.mxu0 0
  %1470 = vmatpush1.bf16.msra.mxu0 %v1452
  %1471 = vmatprep.subr.bf16.mxu0 0
  %1472 = vmatpush1.bf16.msra.mxu0 %v1454
  %1473 = vmatprep.subr.bf16.mxu0 0
  %1474 = vmatpush1.bf16.msra.mxu0 %v1456
  %1475 = vmatprep.subr.bf16.mxu0 0
  %1476 = vmatpush1.bf16.msra.mxu0 0
  %1477 = vmatprep.subr.bf16.mxu0 0
  %1478 = vmatpush1.bf16.msra.mxu0 0
  %1479 = vmatprep.subr.bf16.mxu0 0
  %1480 = vmatpush1.bf16.msra.mxu0 0
  %1481 = vmatprep.subr.bf16.mxu0 0
  %1482 = vmatpush1.bf16.msra.mxu0 0
  %1483 = vmatprep.subr.bf16.mxu0 0
  %1484 = vmatpush1.bf16.msra.mxu0 0
  %1485 = vmatprep.subr.bf16.mxu0 0
  %1486 = vmatpush1.bf16.msra.mxu0 0
  %1487 = vmatprep.subr.bf16.mxu0 0
  %1488 = vmatpush1.bf16.msra.mxu0 0
  %1489 = vmatprep.subr.bf16.mxu0 0
  %1490 = vmatpush1.bf16.msra.mxu0 0
  %1491 = vmatprep.subr.bf16.mxu0 0
  %1492 = vmatpush1.bf16.msra.mxu0 0
  %1493 = vmatprep.subr.bf16.mxu0 0
  %1494 = vmatpush1.bf16.msra.mxu0 0
  %1495 = vmatprep.subr.bf16.mxu0 0
  %1496 = vmatpush1.bf16.msra.mxu0 0
  %1497 = vmatprep.subr.bf16.mxu0 0
  %1498 = vmatpush1.bf16.msra.mxu0 0
  %1499 = vmatprep.subr.bf16.mxu0 0
  %1500 = vmatpush1.bf16.msra.mxu0 0
  %1501 = vmatprep.mubr.bf16.mxu0 0
  %1502 = vmatmul.mubr.bf16.gmra.mrb[0].mxu0 %v1461
  %v1503 = vpop.f32.mrb[0].mxu0
  %v1504 = vadd.f32 0.0, %v1503
  %v1505 = vpop.f32.mrb[0].mxu0
  %v1506 = vpop.f32.mrb[0].mxu0
  %v1507 = vadd.f32 0.0, %v1506
  %v1508 = vpop.f32.mrb[0].mxu0
  %1509 = vmatprep.mubr.bf16.mxu0 0
  %1510 = vmatmul.mubr.bf16.gmra.mrb[0].mxu0 %v1464
  %v1511 = vpop.f32.mrb[0].mxu0
  %v1512 = vadd.f32 0.0, %v1511
  %v1513 = vpop.f32.mrb[0].mxu0
  %v1514 = vpop.f32.mrb[0].mxu0
  %v1515 = vadd.f32 0.0, %v1514
  %v1516 = vpop.f32.mrb[0].mxu0
  %1517 = vmatprep.mubr.bf16.mxu0 0
  %1518 = vmatmul.mubr.bf16.gmra.mrb[0].mxu0 %v1467
  %v1519 = vpop.f32.mrb[0].mxu0
  %v1520 = vadd.f32 0.0, %v1519
  %v1521 = vpop.f32.mrb[0].mxu0
  %v1522 = vpop.f32.mrb[0].mxu0
  %v1523 = vadd.f32 0.0, %v1522
  %v1524 = vpop.f32.mrb[0].mxu0
  %1525 = vdwg.mxu0
  %s1526 = scalar_lea.vmem %s8, 12
  %v1527 = vld [vmem:[%s1526] sm:$0xf]
  %v1528 = vpack.c.bf16 %v1507, %v1504
  %v1529 = vpack.c.bf16 %v1515, %v1512
  %v1530 = vpack.c.bf16 %v1523, %v1520
  %v1532 = vsel %vm385, %v1528, 0
  %v1535 = vsel %vm385, %v1529, 0
  %v1538 = vsel %vm385, %v1530, 0
  %v1541 = vsel %vm854, %v1527, 0
  %1543 = vmatprep.subr.bf16.mxu0 0
  %1544 = vmatpush1.bf16.msra.mxu0 %v1541
  %1545 = vmatprep.subr.bf16.mxu0 0
  %1546 = vmatpush1.bf16.msra.mxu0 0
  %1547 = vmatprep.subr.bf16.mxu0 0
  %1548 = vmatpush1.bf16.msra.mxu0 0
  %1549 = vmatprep.subr.bf16.mxu0 0
  %1550 = vmatpush1.bf16.msra.mxu0 0
  %1551 = vmatprep.subr.bf16.mxu0 0
  %1552 = vmatpush1.bf16.msra.mxu0 0
  %1553 = vmatprep.subr.bf16.mxu0 0
  %1554 = vmatpush1.bf16.msra.mxu0 0
  %1555 = vmatprep.subr.bf16.mxu0 0
  %1556 = vmatpush1.bf16.msra.mxu0 0
  %1557 = vmatprep.subr.bf16.mxu0 0
  %1558 = vmatpush1.bf16.msra.mxu0 0
  %1559 = vmatprep.subr.bf16.mxu0 0
  %1560 = vmatpush1.bf16.msra.mxu0 0
  %1561 = vmatprep.subr.bf16.mxu0 0
  %1562 = vmatpush1.bf16.msra.mxu0 0
  %1563 = vmatprep.subr.bf16.mxu0 0
  %1564 = vmatpush1.bf16.msra.mxu0 0
  %1565 = vmatprep.subr.bf16.mxu0 0
  %1566 = vmatpush1.bf16.msra.mxu0 0
  %1567 = vmatprep.subr.bf16.mxu0 0
  %1568 = vmatpush1.bf16.msra.mxu0 0
  %1569 = vmatprep.subr.bf16.mxu0 0
  %1570 = vmatpush1.bf16.msra.mxu0 0
  %1571 = vmatprep.subr.bf16.mxu0 0
  %1572 = vmatpush1.bf16.msra.mxu0 0
  %1573 = vmatprep.subr.bf16.mxu0 0
  %1574 = vmatpush1.bf16.msra.mxu0 0
  %1575 = vmatprep.mubr.bf16.mxu0 0
  %1576 = vmatmul.mubr.bf16.gmra.mrb[0].mxu0 %v1532
  %v1577 = vpop.f32.mrb[0].mxu0
  %v1578 = vadd.f32 0.0, %v1577
  %v1579 = vpop.f32.mrb[0].mxu0
  %v1580 = vpop.f32.mrb[0].mxu0
  %v1581 = vadd.f32 0.0, %v1580
  %v1582 = vpop.f32.mrb[0].mxu0
  %1583 = vmatprep.mubr.bf16.mxu0 0
  %1584 = vmatmul.mubr.bf16.gmra.mrb[0].mxu0 %v1535
  %v1585 = vpop.f32.mrb[0].mxu0
  %v1586 = vadd.f32 0.0, %v1585
  %v1587 = vpop.f32.mrb[0].mxu0
  %v1588 = vpop.f32.mrb[0].mxu0
  %v1589 = vadd.f32 0.0, %v1588
  %v1590 = vpop.f32.mrb[0].mxu0
  %1591 = vmatprep.mubr.bf16.mxu0 0
  %1592 = vmatmul.mubr.bf16.gmra.mrb[0].mxu0 %v1538
  %v1593 = vpop.f32.mrb[0].mxu0
  %v1594 = vadd.f32 0.0, %v1593
  %v1595 = vpop.f32.mrb[0].mxu0
  %v1596 = vpop.f32.mrb[0].mxu0
  %v1597 = vadd.f32 0.0, %v1596
  %v1598 = vpop.f32.mrb[0].mxu0
  %1599 = vdwg.mxu0
  %v1600 = vadd.f32 %v1289, %v1578
  %v1601 = vadd.f32 %v1290, %v1581
  %v1602 = vadd.f32 %v1291, %v1586
  %v1603 = vadd.f32 %v1292, %v1589
  %v1604 = vadd.f32 %v1293, %v1594
  %v1605 = vadd.f32 %v1294, %v1597
  %v1606 = vadd.f32 %v147, %v1600
  %v1607 = vadd.f32 %v150, %v1601
  %v1608 = vadd.f32 %v155, %v1602
  %v1609 = vadd.f32 %v158, %v1603
  %v1610 = vadd.f32 %v163, %v1604
  %v1611 = vadd.f32 %v166, %v1605
  %v1612 = vld [vmem:[%s9] sm:$0x1]
  %v1614 = vlaneseq
  %v1615 = vshrl.u32 %v1614, 7
  %v1616 = vsub.s32 0, %v1615
  %v1617 = vrot.slane %v1612, %v1616
  %v1619 = vadd.f32 %v1606, %v1617
  %v1620 = vadd.f32 %v1607, %v1617
  %v1621 = vadd.f32 %v1608, %v1617
  %v1622 = vadd.f32 %v1609, %v1617
  %v1623 = vadd.f32 %v1610, %v1617
  %v1624 = vadd.f32 %v1611, %v1617
  %v1625 = vld [vmem:[%s10] sm:$0x1]
  %v1626 = vld [vmem:[%s11] sm:$0x1]
  %v1627 = vsel %vm177, %v1619, 0.0
  %1628 = vadd.xlane.f32.xlu0 %v1627
  %v1629 = vpop.xlane.xlu0 %1628
  %v1630 = vsel %vm177, %v1620, 0.0
  %1631 = vadd.xlane.f32.xlu0 %v1630
  %v1632 = vpop.xlane.xlu0 %1631
  %v1633 = vsel %vm177, %v1621, 0.0
  %1634 = vadd.xlane.f32.xlu0 %v1633
  %v1635 = vpop.xlane.xlu0 %1634
  %v1636 = vsel %vm177, %v1622, 0.0
  %1637 = vadd.xlane.f32.xlu0 %v1636
  %v1638 = vpop.xlane.xlu0 %1637
  %v1639 = vsel %vm177, %v1623, 0.0
  %1640 = vadd.xlane.f32.xlu0 %v1639
  %v1641 = vpop.xlane.xlu0 %1640
  %v1642 = vsel %vm177, %v1624, 0.0
  %1643 = vadd.xlane.f32.xlu0 %v1642
  %v1644 = vpop.xlane.xlu0 %1643
  %v1645 = vmul.f32 %v1629, %v196
  %v1646 = vmul.f32 %v1632, %v196
  %v1647 = vmul.f32 %v1635, %v196
  %v1648 = vmul.f32 %v1638, %v196
  %v1649 = vmul.f32 %v1641, %v196
  %v1650 = vmul.f32 %v1644, %v196
  %v1651 = vsub.f32 %v1619, %v1645
  %v1652 = vsub.f32 %v1620, %v1646
  %v1653 = vsub.f32 %v1621, %v1647
  %v1654 = vsub.f32 %v1622, %v1648
  %v1655 = vsub.f32 %v1623, %v1649
  %v1656 = vsub.f32 %v1624, %v1650
  %v1657 = vmul.f32 %v1651, %v1651
  %v1658 = vmul.f32 %v1652, %v1652
  %v1659 = vmul.f32 %v1653, %v1653
  %v1660 = vmul.f32 %v1654, %v1654
  %v1661 = vmul.f32 %v1655, %v1655
  %v1662 = vmul.f32 %v1656, %v1656
  %v1663 = vsel %vm177, %v1657, 0.0
  %1664 = vadd.xlane.f32.xlu0 %v1663
  %v1665 = vpop.xlane.xlu0 %1664
  %v1666 = vsel %vm177, %v1658, 0.0
  %1667 = vadd.xlane.f32.xlu0 %v1666
  %v1668 = vpop.xlane.xlu0 %1667
  %v1669 = vsel %vm177, %v1659, 0.0
  %1670 = vadd.xlane.f32.xlu0 %v1669
  %v1671 = vpop.xlane.xlu0 %1670
  %v1672 = vsel %vm177, %v1660, 0.0
  %1673 = vadd.xlane.f32.xlu0 %v1672
  %v1674 = vpop.xlane.xlu0 %1673
  %v1675 = vsel %vm177, %v1661, 0.0
  %1676 = vadd.xlane.f32.xlu0 %v1675
  %v1677 = vpop.xlane.xlu0 %1676
  %v1678 = vsel %vm177, %v1662, 0.0
  %1679 = vadd.xlane.f32.xlu0 %v1678
  %v1680 = vpop.xlane.xlu0 %1679
  %v1681 = vmul.f32 %v1665, %v196
  %v1682 = vmul.f32 %v1668, %v196
  %v1683 = vmul.f32 %v1671, %v196
  %v1684 = vmul.f32 %v1674, %v196
  %v1685 = vmul.f32 %v1677, %v196
  %v1686 = vmul.f32 %v1680, %v196
  %v1687 = vadd.f32 %v1681, 1e-06
  %v1688 = vadd.f32 %v1682, 1e-06
  %v1689 = vadd.f32 %v1683, 1e-06
  %v1690 = vadd.f32 %v1684, 1e-06
  %v1691 = vadd.f32 %v1685, 1e-06
  %v1692 = vadd.f32 %v1686, 1e-06
  %v1693 = vrsqrt.pop %v1687
  %v1694 = vrsqrt.pop %v1688
  %v1695 = vrsqrt.pop %v1689
  %v1696 = vrsqrt.pop %v1690
  %v1697 = vrsqrt.pop %v1691
  %v1698 = vrsqrt.pop %v1692
  %v1699 = vmul.f32 %v1651, %v1693
  %v1700 = vmul.f32 %v1652, %v1694
  %v1701 = vmul.f32 %v1653, %v1695
  %v1702 = vmul.f32 %v1654, %v1696
  %v1703 = vmul.f32 %v1655, %v1697
  %v1704 = vmul.f32 %v1656, %v1698
  %v1706 = vlaneseq
  %v1707 = vshrl.u32 %v1706, 7
  %v1708 = vsub.s32 0, %v1707
  %v1709 = vrot.slane %v1625, %v1708
  %v1711 = vmul.f32 %v1699, %v1709
  %v1712 = vmul.f32 %v1700, %v1709
  %v1713 = vmul.f32 %v1701, %v1709
  %v1714 = vmul.f32 %v1702, %v1709
  %v1715 = vmul.f32 %v1703, %v1709
  %v1716 = vmul.f32 %v1704, %v1709
  %v1718 = vlaneseq
  %v1719 = vshrl.u32 %v1718, 7
  %v1720 = vsub.s32 0, %v1719
  %v1721 = vrot.slane %v1626, %v1720
  %v1723 = vadd.f32 %v1711, %v1721
  %v1724 = vadd.f32 %v1712, %v1721
  %v1725 = vadd.f32 %v1713, %v1721
  %v1726 = vadd.f32 %v1714, %v1721
  %v1727 = vadd.f32 %v1715, %v1721
  %v1728 = vadd.f32 %v1716, %v1721
  %v1729 = vpack.c.bf16 %v1724, %v1723
  %v1730 = vpack.c.bf16 %v1726, %v1725
  %v1731 = vpack.c.bf16 %v1728, %v1727
  %v1732 = vld [vmem:[%s12] sm:$0xf]
  %v1733 = vld [vmem:[%s12 + $0x4] sm:$0xf]
  %v1734 = vld [vmem:[%s12 + $0x8] sm:$0xf]
  %v1735 = vld [vmem:[%s12 + $0xc] sm:$0xf]
  %v1740 = vunpack.c.l.b16 %v1732
  %v1741 = vunpack.c.l.b16 %v1733
  %v1742 = vunpack.c.l.b16 %v1734
  %v1743 = vunpack.c.l.b16 %v1735
  %v1744 = vpack.c.b16 %v1741, %v1740
  %v1745 = vpack.c.b16 %v1743, %v1742
  %v1749 = vsel %vm177, %v1729, 0
  %v1752 = vsel %vm177, %v1730, 0
  %v1755 = vsel %vm177, %v1731, 0
  %1757 = vmatprep.subr.bf16.mxu0 0
  %1758 = vmatpush1.bf16.msra.mxu0 %v1744
  %1759 = vmatprep.subr.bf16.mxu0 0
  %1760 = vmatpush1.bf16.msra.mxu0 %v1745
  %1761 = vmatprep.subr.bf16.mxu0 0
  %1762 = vmatpush1.bf16.msra.mxu0 0
  %1763 = vmatprep.subr.bf16.mxu0 0
  %1764 = vmatpush1.bf16.msra.mxu0 0
  %1765 = vmatprep.subr.bf16.mxu0 0
  %1766 = vmatpush1.bf16.msra.mxu0 0
  %1767 = vmatprep.subr.bf16.mxu0 0
  %1768 = vmatpush1.bf16.msra.mxu0 0
  %1769 = vmatprep.subr.bf16.mxu0 0
  %1770 = vmatpush1.bf16.msra.mxu0 0
  %1771 = vmatprep.subr.bf16.mxu0 0
  %1772 = vmatpush1.bf16.msra.mxu0 0
  %1773 = vmatprep.subr.bf16.mxu0 0
  %1774 = vmatpush1.bf16.msra.mxu0 0
  %1775 = vmatprep.subr.bf16.mxu0 0
  %1776 = vmatpush1.bf16.msra.mxu0 0
  %1777 = vmatprep.subr.bf16.mxu0 0
  %1778 = vmatpush1.bf16.msra.mxu0 0
  %1779 = vmatprep.subr.bf16.mxu0 0
  %1780 = vmatpush1.bf16.msra.mxu0 0
  %1781 = vmatprep.subr.bf16.mxu0 0
  %1782 = vmatpush1.bf16.msra.mxu0 0
  %1783 = vmatprep.subr.bf16.mxu0 0
  %1784 = vmatpush1.bf16.msra.mxu0 0
  %1785 = vmatprep.subr.bf16.mxu0 0
  %1786 = vmatpush1.bf16.msra.mxu0 0
  %1787 = vmatprep.subr.bf16.mxu0 0
  %1788 = vmatpush1.bf16.msra.mxu0 0
  %1789 = vmatprep.mubr.bf16.mxu0 0
  %1790 = vmatmul.mubr.bf16.gmra.mrb[0].mxu0 %v1749
  %v1791 = vpop.f32.mrb[0].mxu0
  %v1792 = vadd.f32 0.0, %v1791
  %v1793 = vpop.f32.mrb[0].mxu0
  %v1794 = vpop.f32.mrb[0].mxu0
  %v1795 = vadd.f32 0.0, %v1794
  %v1796 = vpop.f32.mrb[0].mxu0
  %1797 = vmatprep.mubr.bf16.mxu0 0
  %1798 = vmatmul.mubr.bf16.gmra.mrb[0].mxu0 %v1752
  %v1799 = vpop.f32.mrb[0].mxu0
  %v1800 = vadd.f32 0.0, %v1799
  %v1801 = vpop.f32.mrb[0].mxu0
  %v1802 = vpop.f32.mrb[0].mxu0
  %v1803 = vadd.f32 0.0, %v1802
  %v1804 = vpop.f32.mrb[0].mxu0
  %1805 = vmatprep.mubr.bf16.mxu0 0
  %1806 = vmatmul.mubr.bf16.gmra.mrb[0].mxu0 %v1755
  %v1807 = vpop.f32.mrb[0].mxu0
  %v1808 = vadd.f32 0.0, %v1807
  %v1809 = vpop.f32.mrb[0].mxu0
  %v1810 = vpop.f32.mrb[0].mxu0
  %v1811 = vadd.f32 0.0, %v1810
  %v1812 = vpop.f32.mrb[0].mxu0
  %1813 = vdwg.mxu0
  %v1814 = vxor.u32 %v1792, 2147483648
  %v1815 = vxor.u32 %v1795, 2147483648
  %v1816 = vxor.u32 %v1800, 2147483648
  %v1817 = vxor.u32 %v1803, 2147483648
  %v1818 = vxor.u32 %v1808, 2147483648
  %v1819 = vxor.u32 %v1811, 2147483648
  %v1820 = vmul.f32 %v1814, 1.442695
  %v1821 = vpow.pop %v1820
  %v1822 = vmul.f32 %v1815, 1.442695
  %v1823 = vpow.pop %v1822
  %v1824 = vmul.f32 %v1816, 1.442695
  %v1825 = vpow.pop %v1824
  %v1826 = vmul.f32 %v1817, 1.442695
  %v1827 = vpow.pop %v1826
  %v1828 = vmul.f32 %v1818, 1.442695
  %v1829 = vpow.pop %v1828
  %v1830 = vmul.f32 %v1819, 1.442695
  %v1831 = vpow.pop %v1830
  %v1832 = vadd.f32 %v1821, 1.0
  %v1833 = vadd.f32 %v1823, 1.0
  %v1834 = vadd.f32 %v1825, 1.0
  %v1835 = vadd.f32 %v1827, 1.0
  %v1836 = vadd.f32 %v1829, 1.0
  %v1837 = vadd.f32 %v1831, 1.0
  %v1838 = vrcp.pop %v1832
  %v1839 = vmul.f32 1.0, %v1838
  %v1840 = vrcp.pop %v1833
  %v1841 = vmul.f32 1.0, %v1840
  %v1842 = vrcp.pop %v1834
  %v1843 = vmul.f32 1.0, %v1842
  %v1844 = vrcp.pop %v1835
  %v1845 = vmul.f32 1.0, %v1844
  %v1846 = vrcp.pop %v1836
  %v1847 = vmul.f32 1.0, %v1846
  %v1848 = vrcp.pop %v1837
  %v1849 = vmul.f32 1.0, %v1848
  %v1850 = vmul.f32 %v1792, %v1839
  %v1851 = vmul.f32 %v1795, %v1841
  %v1852 = vmul.f32 %v1800, %v1843
  %v1853 = vmul.f32 %v1803, %v1845
  %v1854 = vmul.f32 %v1808, %v1847
  %v1855 = vmul.f32 %v1811, %v1849
  %1862 = vrot.lane.b32.xlu0 %v1792, 64
  %v1863 = vpop.permute.xlu0 %1862
  %1864 = vrot.lane.b32.xlu0 %v1795, 64
  %v1865 = vpop.permute.xlu0 %1864
  %1866 = vrot.lane.b32.xlu0 %v1800, 64
  %v1867 = vpop.permute.xlu0 %1866
  %1868 = vrot.lane.b32.xlu0 %v1803, 64
  %v1869 = vpop.permute.xlu0 %1868
  %1870 = vrot.lane.b32.xlu0 %v1808, 64
  %v1871 = vpop.permute.xlu0 %1870
  %1872 = vrot.lane.b32.xlu0 %v1811, 64
  %v1873 = vpop.permute.xlu0 %1872
  %v1880 = vmul.f32 %v1850, %v1863
  %v1881 = vmul.f32 %v1851, %v1865
  %v1882 = vmul.f32 %v1852, %v1867
  %v1883 = vmul.f32 %v1853, %v1869
  %v1884 = vmul.f32 %v1854, %v1871
  %v1885 = vmul.f32 %v1855, %v1873
  %v1886 = vpack.c.bf16 %v1881, %v1880
  %v1887 = vpack.c.bf16 %v1883, %v1882
  %v1888 = vpack.c.bf16 %v1885, %v1884
  %v1889 = vld [vmem:[%s13] sm:$0xf]
  %v1890 = vld [vmem:[%s13 + $0x4] sm:$0xf]
  %v1891 = vld [vmem:[%s13 + $0x8] sm:$0xf]
  %v1892 = vld [vmem:[%s13 + $0xc] sm:$0xf]
  %v1893 = vld [vmem:[%s13 + $0x10] sm:$0xf]
  %v1894 = vld [vmem:[%s13 + $0x14] sm:$0xf]
  %v1895 = vld [vmem:[%s13 + $0x18] sm:$0xf]
  %v1896 = vld [vmem:[%s13 + $0x1c] sm:$0xf]
  %v1905 = vunpack.c.l.b16 %v1889
  %v1906 = vunpack.c.l.b16 %v1890
  %v1907 = vunpack.c.l.b16 %v1891
  %v1908 = vunpack.c.l.b16 %v1892
  %v1909 = vunpack.c.l.b16 %v1893
  %v1910 = vunpack.c.l.b16 %v1894
  %v1911 = vunpack.c.l.b16 %v1895
  %v1912 = vunpack.c.l.b16 %v1896
  %v1913 = vpack.c.b16 %v1906, %v1905
  %v1914 = vpack.c.b16 %v1908, %v1907
  %v1915 = vpack.c.b16 %v1910, %v1909
  %v1916 = vpack.c.b16 %v1912, %v1911
  %vm1921 = vcmask 523264
  %v1923 = vsel %vm1921, %v1886, 0
  %v1926 = vsel %vm1921, %v1887, 0
  %v1929 = vsel %vm1921, %v1888, 0
  %1931 = vmatprep.subr.bf16.mxu0 0
  %1932 = vmatpush1.bf16.msra.mxu0 %v1913
  %1933 = vmatprep.subr.bf16.mxu0 0
  %1934 = vmatpush1.bf16.msra.mxu0 %v1914
  %1935 = vmatprep.subr.bf16.mxu0 0
  %1936 = vmatpush1.bf16.msra.mxu0 %v1915
  %1937 = vmatprep.subr.bf16.mxu0 0
  %1938 = vmatpush1.bf16.msra.mxu0 %v1916
  %1939 = vmatprep.subr.bf16.mxu0 0
  %1940 = vmatpush1.bf16.msra.mxu0 0
  %1941 = vmatprep.subr.bf16.mxu0 0
  %1942 = vmatpush1.bf16.msra.mxu0 0
  %1943 = vmatprep.subr.bf16.mxu0 0
  %1944 = vmatpush1.bf16.msra.mxu0 0
  %1945 = vmatprep.subr.bf16.mxu0 0
  %1946 = vmatpush1.bf16.msra.mxu0 0
  %1947 = vmatprep.subr.bf16.mxu0 0
  %1948 = vmatpush1.bf16.msra.mxu0 0
  %1949 = vmatprep.subr.bf16.mxu0 0
  %1950 = vmatpush1.bf16.msra.mxu0 0
  %1951 = vmatprep.subr.bf16.mxu0 0
  %1952 = vmatpush1.bf16.msra.mxu0 0
  %1953 = vmatprep.subr.bf16.mxu0 0
  %1954 = vmatpush1.bf16.msra.mxu0 0
  %1955 = vmatprep.subr.bf16.mxu0 0
  %1956 = vmatpush1.bf16.msra.mxu0 0
  %1957 = vmatprep.subr.bf16.mxu0 0
  %1958 = vmatpush1.bf16.msra.mxu0 0
  %1959 = vmatprep.subr.bf16.mxu0 0
  %1960 = vmatpush1.bf16.msra.mxu0 0
  %1961 = vmatprep.subr.bf16.mxu0 0
  %1962 = vmatpush1.bf16.msra.mxu0 0
  %1963 = vmatprep.mubr.bf16.mxu0 0
  %1964 = vmatmul.mubr.bf16.gmra.mrb[0].mxu0 %v1923
  %v1965 = vpop.f32.mrb[0].mxu0
  %v1966 = vadd.f32 0.0, %v1965
  %v1967 = vpop.f32.mrb[0].mxu0
  %v1968 = vpop.f32.mrb[0].mxu0
  %v1969 = vadd.f32 0.0, %v1968
  %v1970 = vpop.f32.mrb[0].mxu0
  %1971 = vmatprep.mubr.bf16.mxu0 0
  %1972 = vmatmul.mubr.bf16.gmra.mrb[0].mxu0 %v1926
  %v1973 = vpop.f32.mrb[0].mxu0
  %v1974 = vadd.f32 0.0, %v1973
  %v1975 = vpop.f32.mrb[0].mxu0
  %v1976 = vpop.f32.mrb[0].mxu0
  %v1977 = vadd.f32 0.0, %v1976
  %v1978 = vpop.f32.mrb[0].mxu0
  %1979 = vmatprep.mubr.bf16.mxu0 0
  %1980 = vmatmul.mubr.bf16.gmra.mrb[0].mxu0 %v1929
  %v1981 = vpop.f32.mrb[0].mxu0
  %v1982 = vadd.f32 0.0, %v1981
  %v1983 = vpop.f32.mrb[0].mxu0
  %v1984 = vpop.f32.mrb[0].mxu0
  %v1985 = vadd.f32 0.0, %v1984
  %v1986 = vpop.f32.mrb[0].mxu0
  %1987 = vdwg.mxu0
  %v1988 = vadd.f32 %v1619, %v1966
  %v1989 = vadd.f32 %v1620, %v1969
  %v1990 = vadd.f32 %v1621, %v1974
  %v1991 = vadd.f32 %v1622, %v1977
  %v1992 = vadd.f32 %v1623, %v1982
  %v1993 = vadd.f32 %v1624, %v1985
  %v1994 = vld [vmem:[%s14] sm:$0x1]
  %v1996 = vlaneseq
  %v1997 = vshrl.u32 %v1996, 7
  %v1998 = vsub.s32 0, %v1997
  %v1999 = vrot.slane %v1994, %v1998
  %v2001 = vadd.f32 %v1988, %v1999
  %v2002 = vadd.f32 %v1989, %v1999
  %v2003 = vadd.f32 %v1990, %v1999
  %v2004 = vadd.f32 %v1991, %v1999
  %v2005 = vadd.f32 %v1992, %v1999
  %v2006 = vadd.f32 %v1993, %v1999
  %s2007 = scalar_lea.vmem %s4, 1
  %v2008 = vld [vmem:[%s2007] sm:$0x1]
  %s2009 = scalar_lea.vmem %s5, 1
  %v2010 = vld [vmem:[%s2009] sm:$0x1]
  %v2011 = vsel %vm177, %v2001, 0.0
  %2012 = vadd.xlane.f32.xlu0 %v2011
  %v2013 = vpop.xlane.xlu0 %2012
  %v2014 = vsel %vm177, %v2002, 0.0
  %2015 = vadd.xlane.f32.xlu0 %v2014
  %v2016 = vpop.xlane.xlu0 %2015
  %v2017 = vsel %vm177, %v2003, 0.0
  %2018 = vadd.xlane.f32.xlu0 %v2017
  %v2019 = vpop.xlane.xlu0 %2018
  %v2020 = vsel %vm177, %v2004, 0.0
  %2021 = vadd.xlane.f32.xlu0 %v2020
  %v2022 = vpop.xlane.xlu0 %2021
  %v2023 = vsel %vm177, %v2005, 0.0
  %2024 = vadd.xlane.f32.xlu0 %v2023
  %v2025 = vpop.xlane.xlu0 %2024
  %v2026 = vsel %vm177, %v2006, 0.0
  %2027 = vadd.xlane.f32.xlu0 %v2026
  %v2028 = vpop.xlane.xlu0 %2027
  %v2029 = vmul.f32 %v2013, %v196
  %v2030 = vmul.f32 %v2016, %v196
  %v2031 = vmul.f32 %v2019, %v196
  %v2032 = vmul.f32 %v2022, %v196
  %v2033 = vmul.f32 %v2025, %v196
  %v2034 = vmul.f32 %v2028, %v196
  %v2035 = vsub.f32 %v2001, %v2029
  %v2036 = vsub.f32 %v2002, %v2030
  %v2037 = vsub.f32 %v2003, %v2031
  %v2038 = vsub.f32 %v2004, %v2032
  %v2039 = vsub.f32 %v2005, %v2033
  %v2040 = vsub.f32 %v2006, %v2034
  %v2041 = vmul.f32 %v2035, %v2035
  %v2042 = vmul.f32 %v2036, %v2036
  %v2043 = vmul.f32 %v2037, %v2037
  %v2044 = vmul.f32 %v2038, %v2038
  %v2045 = vmul.f32 %v2039, %v2039
  %v2046 = vmul.f32 %v2040, %v2040
  %v2047 = vsel %vm177, %v2041, 0.0
  %2048 = vadd.xlane.f32.xlu0 %v2047
  %v2049 = vpop.xlane.xlu0 %2048
  %v2050 = vsel %vm177, %v2042, 0.0
  %2051 = vadd.xlane.f32.xlu0 %v2050
  %v2052 = vpop.xlane.xlu0 %2051
  %v2053 = vsel %vm177, %v2043, 0.0
  %2054 = vadd.xlane.f32.xlu0 %v2053
  %v2055 = vpop.xlane.xlu0 %2054
  %v2056 = vsel %vm177, %v2044, 0.0
  %2057 = vadd.xlane.f32.xlu0 %v2056
  %v2058 = vpop.xlane.xlu0 %2057
  %v2059 = vsel %vm177, %v2045, 0.0
  %2060 = vadd.xlane.f32.xlu0 %v2059
  %v2061 = vpop.xlane.xlu0 %2060
  %v2062 = vsel %vm177, %v2046, 0.0
  %2063 = vadd.xlane.f32.xlu0 %v2062
  %v2064 = vpop.xlane.xlu0 %2063
  %v2065 = vmul.f32 %v2049, %v196
  %v2066 = vmul.f32 %v2052, %v196
  %v2067 = vmul.f32 %v2055, %v196
  %v2068 = vmul.f32 %v2058, %v196
  %v2069 = vmul.f32 %v2061, %v196
  %v2070 = vmul.f32 %v2064, %v196
  %v2071 = vadd.f32 %v2065, 1e-06
  %v2072 = vadd.f32 %v2066, 1e-06
  %v2073 = vadd.f32 %v2067, 1e-06
  %v2074 = vadd.f32 %v2068, 1e-06
  %v2075 = vadd.f32 %v2069, 1e-06
  %v2076 = vadd.f32 %v2070, 1e-06
  %v2077 = vrsqrt.pop %v2071
  %v2078 = vrsqrt.pop %v2072
  %v2079 = vrsqrt.pop %v2073
  %v2080 = vrsqrt.pop %v2074
  %v2081 = vrsqrt.pop %v2075
  %v2082 = vrsqrt.pop %v2076
  %v2083 = vmul.f32 %v2035, %v2077
  %v2084 = vmul.f32 %v2036, %v2078
  %v2085 = vmul.f32 %v2037, %v2079
  %v2086 = vmul.f32 %v2038, %v2080
  %v2087 = vmul.f32 %v2039, %v2081
  %v2088 = vmul.f32 %v2040, %v2082
  %v2090 = vlaneseq
  %v2091 = vshrl.u32 %v2090, 7
  %v2092 = vsub.s32 0, %v2091
  %v2093 = vrot.slane %v2008, %v2092
  %v2095 = vmul.f32 %v2083, %v2093
  %v2096 = vmul.f32 %v2084, %v2093
  %v2097 = vmul.f32 %v2085, %v2093
  %v2098 = vmul.f32 %v2086, %v2093
  %v2099 = vmul.f32 %v2087, %v2093
  %v2100 = vmul.f32 %v2088, %v2093
  %v2102 = vlaneseq
  %v2103 = vshrl.u32 %v2102, 7
  %v2104 = vsub.s32 0, %v2103
  %v2105 = vrot.slane %v2010, %v2104
  %v2107 = vadd.f32 %v2095, %v2105
  %v2108 = vadd.f32 %v2096, %v2105
  %v2109 = vadd.f32 %v2097, %v2105
  %v2110 = vadd.f32 %v2098, %v2105
  %v2111 = vadd.f32 %v2099, %v2105
  %v2112 = vadd.f32 %v2100, %v2105
  %v2113 = vpack.c.bf16 %v2108, %v2107
  %v2114 = vpack.c.bf16 %v2110, %v2109
  %v2115 = vpack.c.bf16 %v2112, %v2111
  %s2116 = scalar_lea.vmem %s6, 16
  %v2117 = vld [vmem:[%s2116] sm:$0xf]
  %v2118 = vld [vmem:[%s2116 + $0x4] sm:$0xf]
  %v2119 = vld [vmem:[%s2116 + $0x8] sm:$0xf]
  %v2120 = vld [vmem:[%s2116 + $0xc] sm:$0xf]
  %s2121 = scalar_lea.vmem %s7, 1
  %v2122 = vld [vmem:[%s2121] sm:$0x1]
  %v2124 = vlaneseq
  %v2125 = vshrl.u32 %v2124, 7
  %v2126 = vsub.s32 0, %v2125
  %v2127 = vrot.slane %v2122, %v2126
  %v2133 = vunpack.c.l.b16 %v2117
  %v2134 = vunpack.c.l.b16 %v2118
  %v2135 = vunpack.c.l.b16 %v2119
  %v2136 = vunpack.c.l.b16 %v2120
  %v2137 = vpack.c.b16 %v2134, %v2133
  %v2138 = vpack.c.b16 %v2136, %v2135
  %v2142 = vsel %vm177, %v2113, 0
  %v2145 = vsel %vm177, %v2114, 0
  %v2148 = vsel %vm177, %v2115, 0
  %2150 = vmatprep.subr.bf16.mxu0 0
  %2151 = vmatpush1.bf16.msra.mxu0 %v2137
  %2152 = vmatprep.subr.bf16.mxu0 0
  %2153 = vmatpush1.bf16.msra.mxu0 %v2138
  %2154 = vmatprep.subr.bf16.mxu0 0
  %2155 = vmatpush1.bf16.msra.mxu0 0
  %2156 = vmatprep.subr.bf16.mxu0 0
  %2157 = vmatpush1.bf16.msra.mxu0 0
  %2158 = vmatprep.subr.bf16.mxu0 0
  %2159 = vmatpush1.bf16.msra.mxu0 0
  %2160 = vmatprep.subr.bf16.mxu0 0
  %2161 = vmatpush1.bf16.msra.mxu0 0
  %2162 = vmatprep.subr.bf16.mxu0 0
  %2163 = vmatpush1.bf16.msra.mxu0 0
  %2164 = vmatprep.subr.bf16.mxu0 0
  %2165 = vmatpush1.bf16.msra.mxu0 0
  %2166 = vmatprep.subr.bf16.mxu0 0
  %2167 = vmatpush1.bf16.msra.mxu0 0
  %2168 = vmatprep.subr.bf16.mxu0 0
  %2169 = vmatpush1.bf16.msra.mxu0 0
  %2170 = vmatprep.subr.bf16.mxu0 0
  %2171 = vmatpush1.bf16.msra.mxu0 0
  %2172 = vmatprep.subr.bf16.mxu0 0
  %2173 = vmatpush1.bf16.msra.mxu0 0
  %2174 = vmatprep.subr.bf16.mxu0 0
  %2175 = vmatpush1.bf16.msra.mxu0 0
  %2176 = vmatprep.subr.bf16.mxu0 0
  %2177 = vmatpush1.bf16.msra.mxu0 0
  %2178 = vmatprep.subr.bf16.mxu0 0
  %2179 = vmatpush1.bf16.msra.mxu0 0
  %2180 = vmatprep.subr.bf16.mxu0 0
  %2181 = vmatpush1.bf16.msra.mxu0 0
  %2182 = vmatprep.mubr.bf16.mxu0 0
  %2183 = vmatmul.mubr.bf16.gmra.mrb[0].mxu0 %v2142
  %v2184 = vpop.f32.mrb[0].mxu0
  %v2185 = vadd.f32 %v2127, %v2184
  %v2186 = vpop.f32.mrb[0].mxu0
  %v2187 = vpop.f32.mrb[0].mxu0
  %v2188 = vadd.f32 %v2127, %v2187
  %v2189 = vpop.f32.mrb[0].mxu0
  %2190 = vmatprep.mubr.bf16.mxu0 0
  %2191 = vmatmul.mubr.bf16.gmra.mrb[0].mxu0 %v2145
  %v2192 = vpop.f32.mrb[0].mxu0
  %v2193 = vadd.f32 %v2127, %v2192
  %v2194 = vpop.f32.mrb[0].mxu0
  %v2195 = vpop.f32.mrb[0].mxu0
  %v2196 = vadd.f32 %v2127, %v2195
  %v2197 = vpop.f32.mrb[0].mxu0
  %2198 = vmatprep.mubr.bf16.mxu0 0
  %2199 = vmatmul.mubr.bf16.gmra.mrb[0].mxu0 %v2148
  %v2200 = vpop.f32.mrb[0].mxu0
  %v2201 = vadd.f32 %v2127, %v2200
  %v2202 = vpop.f32.mrb[0].mxu0
  %v2203 = vpop.f32.mrb[0].mxu0
  %v2204 = vadd.f32 %v2127, %v2203
  %v2205 = vpop.f32.mrb[0].mxu0
  %2206 = vdwg.mxu0
  %v2207 = vpack.c.bf16 %v2188, %v2185
  %v2208 = vpack.c.bf16 %v2196, %v2193
  %v2209 = vpack.c.bf16 %v2204, %v2201
  %2213 = vrot.lane.b32.xlu0 %v2207, 96
  %v2214 = vpop.permute.xlu0 %2213
  %2215 = vrot.lane.b32.xlu0 %v2208, 96
  %v2216 = vpop.permute.xlu0 %2215
  %2217 = vrot.lane.b32.xlu0 %v2209, 96
  %v2218 = vpop.permute.xlu0 %2217
  %v2220 = vsel %vm385, %v2207, 0
  %v2223 = vsel %vm385, %v2208, 0
  %v2226 = vsel %vm385, %v2209, 0
  %v2229 = vsel %vm385, %v2214, 0
  %v2232 = vsel %vm385, %v2216, 0
  %v2235 = vsel %vm385, %v2218, 0
  %2237 = vmatprep.subr.bf16.mxu0 0
  %2238 = vmatpush1.bf16.xpose.msra.mxu0 %v2229
  %2239 = vmatprep.subr.bf16.mxu0 0
  %2240 = vmatpush1.bf16.xpose.msra.mxu0 %v2232
  %2241 = vmatprep.subr.bf16.mxu0 0
  %2242 = vmatpush1.bf16.xpose.msra.mxu0 %v2235
  %2243 = vmatprep.subr.bf16.mxu0 0
  %2244 = vmatpush1.bf16.xpose.msra.mxu0 0
  %2245 = vmatprep.subr.bf16.mxu0 0
  %2246 = vmatpush1.bf16.xpose.msra.mxu0 0
  %2247 = vmatprep.subr.bf16.mxu0 0
  %2248 = vmatpush1.bf16.xpose.msra.mxu0 0
  %2249 = vmatprep.subr.bf16.mxu0 0
  %2250 = vmatpush1.bf16.xpose.msra.mxu0 0
  %2251 = vmatprep.subr.bf16.mxu0 0
  %2252 = vmatpush1.bf16.xpose.msra.mxu0 0
  %2253 = vmatprep.subr.bf16.mxu0 0
  %2254 = vmatpush1.bf16.xpose.msra.mxu0 0
  %2255 = vmatprep.subr.bf16.mxu0 0
  %2256 = vmatpush1.bf16.xpose.msra.mxu0 0
  %2257 = vmatprep.subr.bf16.mxu0 0
  %2258 = vmatpush1.bf16.xpose.msra.mxu0 0
  %2259 = vmatprep.subr.bf16.mxu0 0
  %2260 = vmatpush1.bf16.xpose.msra.mxu0 0
  %2261 = vmatprep.subr.bf16.mxu0 0
  %2262 = vmatpush1.bf16.xpose.msra.mxu0 0
  %2263 = vmatprep.subr.bf16.mxu0 0
  %2264 = vmatpush1.bf16.xpose.msra.mxu0 0
  %2265 = vmatprep.subr.bf16.mxu0 0
  %2266 = vmatpush1.bf16.xpose.msra.mxu0 0
  %2267 = vmatprep.subr.bf16.mxu0 0
  %2268 = vmatpush1.bf16.xpose.msra.mxu0 0
  %2269 = vmatprep.mubr.bf16.mxu0 0
  %2270 = vmatmul.mubr.bf16.gmra.mrb[0].mxu0 %v2220
  %v2271 = vpop.f32.mrb[0].mxu0
  %v2272 = vadd.f32 %v169, %v2271
  %v2273 = vpop.f32.mrb[0].mxu0
  %v2274 = vpop.f32.mrb[0].mxu0
  %v2275 = vadd.f32 %v170, %v2274
  %v2276 = vpop.f32.mrb[0].mxu0
  %2277 = vmatprep.mubr.bf16.mxu0 0
  %2278 = vmatmul.mubr.bf16.gmra.mrb[0].mxu0 %v2223
  %v2279 = vpop.f32.mrb[0].mxu0
  %v2280 = vadd.f32 %v171, %v2279
  %v2281 = vpop.f32.mrb[0].mxu0
  %v2282 = vpop.f32.mrb[0].mxu0
  %v2283 = vadd.f32 %v172, %v2282
  %v2284 = vpop.f32.mrb[0].mxu0
  %2285 = vmatprep.mubr.bf16.mxu0 0
  %2286 = vmatmul.mubr.bf16.gmra.mrb[0].mxu0 %v2226
  %v2287 = vpop.f32.mrb[0].mxu0
  %v2288 = vadd.f32 %v173, %v2287
  %v2289 = vpop.f32.mrb[0].mxu0
  %v2290 = vpop.f32.mrb[0].mxu0
  %v2291 = vadd.f32 %v174, %v2290
  %v2292 = vpop.f32.mrb[0].mxu0
  %2293 = vdwg.mxu0
  %v2294 = vsel %vm102, %v2272, -inf
  %2295 = vmax.xlane.f32.xlu0 %v2294
  %v2296 = vpop.xlane.xlu0 %2295
  %v2297 = vsel %vm102, %v2275, -inf
  %2298 = vmax.xlane.f32.xlu0 %v2297
  %v2299 = vpop.xlane.xlu0 %2298
  %v2300 = vsel %vm102, %v2280, -inf
  %2301 = vmax.xlane.f32.xlu0 %v2300
  %v2302 = vpop.xlane.xlu0 %2301
  %v2303 = vsel %vm102, %v2283, -inf
  %2304 = vmax.xlane.f32.xlu0 %v2303
  %v2305 = vpop.xlane.xlu0 %2304
  %v2306 = vsel %vm102, %v2288, -inf
  %2307 = vmax.xlane.f32.xlu0 %v2306
  %v2308 = vpop.xlane.xlu0 %2307
  %v2309 = vsel %vm102, %v2291, -inf
  %2310 = vmax.xlane.f32.xlu0 %v2309
  %v2311 = vpop.xlane.xlu0 %2310
  %v2312 = vsub.f32 %v2272, %v2296
  %v2313 = vsub.f32 %v2275, %v2299
  %v2314 = vsub.f32 %v2280, %v2302
  %v2315 = vsub.f32 %v2283, %v2305
  %v2316 = vsub.f32 %v2288, %v2308
  %v2317 = vsub.f32 %v2291, %v2311
  %v2318 = vmul.f32 %v2312, 1.442695
  %v2319 = vpow.pop %v2318
  %v2320 = vmul.f32 %v2313, 1.442695
  %v2321 = vpow.pop %v2320
  %v2322 = vmul.f32 %v2314, 1.442695
  %v2323 = vpow.pop %v2322
  %v2324 = vmul.f32 %v2315, 1.442695
  %v2325 = vpow.pop %v2324
  %v2326 = vmul.f32 %v2316, 1.442695
  %v2327 = vpow.pop %v2326
  %v2328 = vmul.f32 %v2317, 1.442695
  %v2329 = vpow.pop %v2328
  %v2330 = vsel %vm102, %v2319, 0.0
  %2331 = vadd.xlane.f32.xlu0 %v2330
  %v2332 = vpop.xlane.xlu0 %2331
  %v2333 = vsel %vm102, %v2321, 0.0
  %2334 = vadd.xlane.f32.xlu0 %v2333
  %v2335 = vpop.xlane.xlu0 %2334
  %v2336 = vsel %vm102, %v2323, 0.0
  %2337 = vadd.xlane.f32.xlu0 %v2336
  %v2338 = vpop.xlane.xlu0 %2337
  %v2339 = vsel %vm102, %v2325, 0.0
  %2340 = vadd.xlane.f32.xlu0 %v2339
  %v2341 = vpop.xlane.xlu0 %2340
  %v2342 = vsel %vm102, %v2327, 0.0
  %2343 = vadd.xlane.f32.xlu0 %v2342
  %v2344 = vpop.xlane.xlu0 %2343
  %v2345 = vsel %vm102, %v2329, 0.0
  %2346 = vadd.xlane.f32.xlu0 %v2345
  %v2347 = vpop.xlane.xlu0 %2346
  %v2348 = vrcp.pop %v2332
  %v2349 = vrcp.pop %v2335
  %v2350 = vrcp.pop %v2338
  %v2351 = vrcp.pop %v2341
  %v2352 = vrcp.pop %v2344
  %v2353 = vrcp.pop %v2347
  %v2354 = vmul.f32 %v2319, %v2348
  %v2355 = vmul.f32 %v2321, %v2349
  %v2356 = vmul.f32 %v2323, %v2350
  %v2357 = vmul.f32 %v2325, %v2351
  %v2358 = vmul.f32 %v2327, %v2352
  %v2359 = vmul.f32 %v2329, %v2353
  %v2360 = vpack.c.bf16 %v2355, %v2354
  %v2361 = vpack.c.bf16 %v2357, %v2356
  %v2362 = vpack.c.bf16 %v2359, %v2358
  %2363 = vrot.lane.b32.xlu0 %v2207, 64
  %v2364 = vpop.permute.xlu0 %2363
  %2365 = vrot.lane.b32.xlu0 %v2208, 64
  %v2366 = vpop.permute.xlu0 %2365
  %2367 = vrot.lane.b32.xlu0 %v2209, 64
  %v2368 = vpop.permute.xlu0 %2367
  %v2373 = vsel %vm102, %v2360, 0
  %v2376 = vsel %vm102, %v2361, 0
  %v2379 = vsel %vm102, %v2362, 0
  %2381 = vmatprep.subr.bf16.mxu0 0
  %2382 = vmatpush1.bf16.msra.mxu0 %v2364
  %2383 = vmatprep.subr.bf16.mxu0 0
  %2384 = vmatpush1.bf16.msra.mxu0 %v2366
  %2385 = vmatprep.subr.bf16.mxu0 0
  %2386 = vmatpush1.bf16.msra.mxu0 %v2368
  %2387 = vmatprep.subr.bf16.mxu0 0
  %2388 = vmatpush1.bf16.msra.mxu0 0
  %2389 = vmatprep.subr.bf16.mxu0 0
  %2390 = vmatpush1.bf16.msra.mxu0 0
  %2391 = vmatprep.subr.bf16.mxu0 0
  %2392 = vmatpush1.bf16.msra.mxu0 0
  %2393 = vmatprep.subr.bf16.mxu0 0
  %2394 = vmatpush1.bf16.msra.mxu0 0
  %2395 = vmatprep.subr.bf16.mxu0 0
  %2396 = vmatpush1.bf16.msra.mxu0 0
  %2397 = vmatprep.subr.bf16.mxu0 0
  %2398 = vmatpush1.bf16.msra.mxu0 0
  %2399 = vmatprep.subr.bf16.mxu0 0
  %2400 = vmatpush1.bf16.msra.mxu0 0
  %2401 = vmatprep.subr.bf16.mxu0 0
  %2402 = vmatpush1.bf16.msra.mxu0 0
  %2403 = vmatprep.subr.bf16.mxu0 0
  %2404 = vmatpush1.bf16.msra.mxu0 0
  %2405 = vmatprep.subr.bf16.mxu0 0
  %2406 = vmatpush1.bf16.msra.mxu0 0
  %2407 = vmatprep.subr.bf16.mxu0 0
  %2408 = vmatpush1.bf16.msra.mxu0 0
  %2409 = vmatprep.subr.bf16.mxu0 0
  %2410 = vmatpush1.bf16.msra.mxu0 0
  %2411 = vmatprep.subr.bf16.mxu0 0
  %2412 = vmatpush1.bf16.msra.mxu0 0
  %2413 = vmatprep.mubr.bf16.mxu0 0
  %2414 = vmatmul.mubr.bf16.gmra.mrb[0].mxu0 %v2373
  %v2415 = vpop.f32.mrb[0].mxu0
  %v2416 = vadd.f32 0.0, %v2415
  %v2417 = vpop.f32.mrb[0].mxu0
  %v2418 = vpop.f32.mrb[0].mxu0
  %v2419 = vadd.f32 0.0, %v2418
  %v2420 = vpop.f32.mrb[0].mxu0
  %2421 = vmatprep.mubr.bf16.mxu0 0
  %2422 = vmatmul.mubr.bf16.gmra.mrb[0].mxu0 %v2376
  %v2423 = vpop.f32.mrb[0].mxu0
  %v2424 = vadd.f32 0.0, %v2423
  %v2425 = vpop.f32.mrb[0].mxu0
  %v2426 = vpop.f32.mrb[0].mxu0
  %v2427 = vadd.f32 0.0, %v2426
  %v2428 = vpop.f32.mrb[0].mxu0
  %2429 = vmatprep.mubr.bf16.mxu0 0
  %2430 = vmatmul.mubr.bf16.gmra.mrb[0].mxu0 %v2379
  %v2431 = vpop.f32.mrb[0].mxu0
  %v2432 = vadd.f32 0.0, %v2431
  %v2433 = vpop.f32.mrb[0].mxu0
  %v2434 = vpop.f32.mrb[0].mxu0
  %v2435 = vadd.f32 0.0, %v2434
  %v2436 = vpop.f32.mrb[0].mxu0
  %2437 = vdwg.mxu0
  %s2438 = scalar_lea.vmem %s8, 16
  %v2439 = vld [vmem:[%s2438] sm:$0xf]
  %v2440 = vpack.c.bf16 %v2419, %v2416
  %v2441 = vpack.c.bf16 %v2427, %v2424
  %v2442 = vpack.c.bf16 %v2435, %v2432
  %2443 = vrot.lane.b32.xlu0 %v2207, 120
  %v2444 = vpop.permute.xlu0 %2443
  %2445 = vrot.lane.b32.xlu0 %v2208, 120
  %v2446 = vpop.permute.xlu0 %2445
  %2447 = vrot.lane.b32.xlu0 %v2209, 120
  %v2448 = vpop.permute.xlu0 %2447
  %2449 = vrot.lane.b32.xlu0 %v2207, 88
  %v2450 = vpop.permute.xlu0 %2449
  %2451 = vrot.lane.b32.xlu0 %v2208, 88
  %v2452 = vpop.permute.xlu0 %2451
  %2453 = vrot.lane.b32.xlu0 %v2209, 88
  %v2454 = vpop.permute.xlu0 %2453
  %v2456 = vsel %vm385, %v2444, 0
  %v2459 = vsel %vm385, %v2446, 0
  %v2462 = vsel %vm385, %v2448, 0
  %v2465 = vsel %vm385, %v2450, 0
  %v2468 = vsel %vm385, %v2452, 0
  %v2471 = vsel %vm385, %v2454, 0
  %2473 = vmatprep.subr.bf16.mxu0 0
  %2474 = vmatpush1.bf16.xpose.msra.mxu0 %v2465
  %2475 = vmatprep.subr.bf16.mxu0 0
  %2476 = vmatpush1.bf16.xpose.msra.mxu0 %v2468
  %2477 = vmatprep.subr.bf16.mxu0 0
  %2478 = vmatpush1.bf16.xpose.msra.mxu0 %v2471
  %2479 = vmatprep.subr.bf16.mxu0 0
  %2480 = vmatpush1.bf16.xpose.msra.mxu0 0
  %2481 = vmatprep.subr.bf16.mxu0 0
  %2482 = vmatpush1.bf16.xpose.msra.mxu0 0
  %2483 = vmatprep.subr.bf16.mxu0 0
  %2484 = vmatpush1.bf16.xpose.msra.mxu0 0
  %2485 = vmatprep.subr.bf16.mxu0 0
  %2486 = vmatpush1.bf16.xpose.msra.mxu0 0
  %2487 = vmatprep.subr.bf16.mxu0 0
  %2488 = vmatpush1.bf16.xpose.msra.mxu0 0
  %2489 = vmatprep.subr.bf16.mxu0 0
  %2490 = vmatpush1.bf16.xpose.msra.mxu0 0
  %2491 = vmatprep.subr.bf16.mxu0 0
  %2492 = vmatpush1.bf16.xpose.msra.mxu0 0
  %2493 = vmatprep.subr.bf16.mxu0 0
  %2494 = vmatpush1.bf16.xpose.msra.mxu0 0
  %2495 = vmatprep.subr.bf16.mxu0 0
  %2496 = vmatpush1.bf16.xpose.msra.mxu0 0
  %2497 = vmatprep.subr.bf16.mxu0 0
  %2498 = vmatpush1.bf16.xpose.msra.mxu0 0
  %2499 = vmatprep.subr.bf16.mxu0 0
  %2500 = vmatpush1.bf16.xpose.msra.mxu0 0
  %2501 = vmatprep.subr.bf16.mxu0 0
  %2502 = vmatpush1.bf16.xpose.msra.mxu0 0
  %2503 = vmatprep.subr.bf16.mxu0 0
  %2504 = vmatpush1.bf16.xpose.msra.mxu0 0
  %2505 = vmatprep.mubr.bf16.mxu0 0
  %2506 = vmatmul.mubr.bf16.gmra.mrb[0].mxu0 %v2456
  %v2507 = vpop.f32.mrb[0].mxu0
  %v2508 = vadd.f32 %v169, %v2507
  %v2509 = vpop.f32.mrb[0].mxu0
  %v2510 = vpop.f32.mrb[0].mxu0
  %v2511 = vadd.f32 %v170, %v2510
  %v2512 = vpop.f32.mrb[0].mxu0
  %2513 = vmatprep.mubr.bf16.mxu0 0
  %2514 = vmatmul.mubr.bf16.gmra.mrb[0].mxu0 %v2459
  %v2515 = vpop.f32.mrb[0].mxu0
  %v2516 = vadd.f32 %v171, %v2515
  %v2517 = vpop.f32.mrb[0].mxu0
  %v2518 = vpop.f32.mrb[0].mxu0
  %v2519 = vadd.f32 %v172, %v2518
  %v2520 = vpop.f32.mrb[0].mxu0
  %2521 = vmatprep.mubr.bf16.mxu0 0
  %2522 = vmatmul.mubr.bf16.gmra.mrb[0].mxu0 %v2462
  %v2523 = vpop.f32.mrb[0].mxu0
  %v2524 = vadd.f32 %v173, %v2523
  %v2525 = vpop.f32.mrb[0].mxu0
  %v2526 = vpop.f32.mrb[0].mxu0
  %v2527 = vadd.f32 %v174, %v2526
  %v2528 = vpop.f32.mrb[0].mxu0
  %2529 = vdwg.mxu0
  %v2530 = vsel %vm102, %v2508, -inf
  %2531 = vmax.xlane.f32.xlu0 %v2530
  %v2532 = vpop.xlane.xlu0 %2531
  %v2533 = vsel %vm102, %v2511, -inf
  %2534 = vmax.xlane.f32.xlu0 %v2533
  %v2535 = vpop.xlane.xlu0 %2534
  %v2536 = vsel %vm102, %v2516, -inf
  %2537 = vmax.xlane.f32.xlu0 %v2536
  %v2538 = vpop.xlane.xlu0 %2537
  %v2539 = vsel %vm102, %v2519, -inf
  %2540 = vmax.xlane.f32.xlu0 %v2539
  %v2541 = vpop.xlane.xlu0 %2540
  %v2542 = vsel %vm102, %v2524, -inf
  %2543 = vmax.xlane.f32.xlu0 %v2542
  %v2544 = vpop.xlane.xlu0 %2543
  %v2545 = vsel %vm102, %v2527, -inf
  %2546 = vmax.xlane.f32.xlu0 %v2545
  %v2547 = vpop.xlane.xlu0 %2546
  %v2548 = vsub.f32 %v2508, %v2532
  %v2549 = vsub.f32 %v2511, %v2535
  %v2550 = vsub.f32 %v2516, %v2538
  %v2551 = vsub.f32 %v2519, %v2541
  %v2552 = vsub.f32 %v2524, %v2544
  %v2553 = vsub.f32 %v2527, %v2547
  %v2554 = vmul.f32 %v2548, 1.442695
  %v2555 = vpow.pop %v2554
  %v2556 = vmul.f32 %v2549, 1.442695
  %v2557 = vpow.pop %v2556
  %v2558 = vmul.f32 %v2550, 1.442695
  %v2559 = vpow.pop %v2558
  %v2560 = vmul.f32 %v2551, 1.442695
  %v2561 = vpow.pop %v2560
  %v2562 = vmul.f32 %v2552, 1.442695
  %v2563 = vpow.pop %v2562
  %v2564 = vmul.f32 %v2553, 1.442695
  %v2565 = vpow.pop %v2564
  %v2566 = vsel %vm102, %v2555, 0.0
  %2567 = vadd.xlane.f32.xlu0 %v2566
  %v2568 = vpop.xlane.xlu0 %2567
  %v2569 = vsel %vm102, %v2557, 0.0
  %2570 = vadd.xlane.f32.xlu0 %v2569
  %v2571 = vpop.xlane.xlu0 %2570
  %v2572 = vsel %vm102, %v2559, 0.0
  %2573 = vadd.xlane.f32.xlu0 %v2572
  %v2574 = vpop.xlane.xlu0 %2573
  %v2575 = vsel %vm102, %v2561, 0.0
  %2576 = vadd.xlane.f32.xlu0 %v2575
  %v2577 = vpop.xlane.xlu0 %2576
  %v2578 = vsel %vm102, %v2563, 0.0
  %2579 = vadd.xlane.f32.xlu0 %v2578
  %v2580 = vpop.xlane.xlu0 %2579
  %v2581 = vsel %vm102, %v2565, 0.0
  %2582 = vadd.xlane.f32.xlu0 %v2581
  %v2583 = vpop.xlane.xlu0 %2582
  %v2584 = vrcp.pop %v2568
  %v2585 = vrcp.pop %v2571
  %v2586 = vrcp.pop %v2574
  %v2587 = vrcp.pop %v2577
  %v2588 = vrcp.pop %v2580
  %v2589 = vrcp.pop %v2583
  %v2590 = vmul.f32 %v2555, %v2584
  %v2591 = vmul.f32 %v2557, %v2585
  %v2592 = vmul.f32 %v2559, %v2586
  %v2593 = vmul.f32 %v2561, %v2587
  %v2594 = vmul.f32 %v2563, %v2588
  %v2595 = vmul.f32 %v2565, %v2589
  %v2596 = vpack.c.bf16 %v2591, %v2590
  %v2597 = vpack.c.bf16 %v2593, %v2592
  %v2598 = vpack.c.bf16 %v2595, %v2594
  %2599 = vrot.lane.b32.xlu0 %v2207, 56
  %v2600 = vpop.permute.xlu0 %2599
  %2601 = vrot.lane.b32.xlu0 %v2208, 56
  %v2602 = vpop.permute.xlu0 %2601
  %2603 = vrot.lane.b32.xlu0 %v2209, 56
  %v2604 = vpop.permute.xlu0 %2603
  %v2609 = vsel %vm102, %v2596, 0
  %v2612 = vsel %vm102, %v2597, 0
  %v2615 = vsel %vm102, %v2598, 0
  %2617 = vmatprep.subr.bf16.mxu0 0
  %2618 = vmatpush1.bf16.msra.mxu0 %v2600
  %2619 = vmatprep.subr.bf16.mxu0 0
  %2620 = vmatpush1.bf16.msra.mxu0 %v2602
  %2621 = vmatprep.subr.bf16.mxu0 0
  %2622 = vmatpush1.bf16.msra.mxu0 %v2604
  %2623 = vmatprep.subr.bf16.mxu0 0
  %2624 = vmatpush1.bf16.msra.mxu0 0
  %2625 = vmatprep.subr.bf16.mxu0 0
  %2626 = vmatpush1.bf16.msra.mxu0 0
  %2627 = vmatprep.subr.bf16.mxu0 0
  %2628 = vmatpush1.bf16.msra.mxu0 0
  %2629 = vmatprep.subr.bf16.mxu0 0
  %2630 = vmatpush1.bf16.msra.mxu0 0
  %2631 = vmatprep.subr.bf16.mxu0 0
  %2632 = vmatpush1.bf16.msra.mxu0 0
  %2633 = vmatprep.subr.bf16.mxu0 0
  %2634 = vmatpush1.bf16.msra.mxu0 0
  %2635 = vmatprep.subr.bf16.mxu0 0
  %2636 = vmatpush1.bf16.msra.mxu0 0
  %2637 = vmatprep.subr.bf16.mxu0 0
  %2638 = vmatpush1.bf16.msra.mxu0 0
  %2639 = vmatprep.subr.bf16.mxu0 0
  %2640 = vmatpush1.bf16.msra.mxu0 0
  %2641 = vmatprep.subr.bf16.mxu0 0
  %2642 = vmatpush1.bf16.msra.mxu0 0
  %2643 = vmatprep.subr.bf16.mxu0 0
  %2644 = vmatpush1.bf16.msra.mxu0 0
  %2645 = vmatprep.subr.bf16.mxu0 0
  %2646 = vmatpush1.bf16.msra.mxu0 0
  %2647 = vmatprep.subr.bf16.mxu0 0
  %2648 = vmatpush1.bf16.msra.mxu0 0
  %2649 = vmatprep.mubr.bf16.mxu0 0
  %2650 = vmatmul.mubr.bf16.gmra.mrb[0].mxu0 %v2609
  %v2651 = vpop.f32.mrb[0].mxu0
  %v2652 = vadd.f32 0.0, %v2651
  %v2653 = vpop.f32.mrb[0].mxu0
  %v2654 = vpop.f32.mrb[0].mxu0
  %v2655 = vadd.f32 0.0, %v2654
  %v2656 = vpop.f32.mrb[0].mxu0
  %2657 = vmatprep.mubr.bf16.mxu0 0
  %2658 = vmatmul.mubr.bf16.gmra.mrb[0].mxu0 %v2612
  %v2659 = vpop.f32.mrb[0].mxu0
  %v2660 = vadd.f32 0.0, %v2659
  %v2661 = vpop.f32.mrb[0].mxu0
  %v2662 = vpop.f32.mrb[0].mxu0
  %v2663 = vadd.f32 0.0, %v2662
  %v2664 = vpop.f32.mrb[0].mxu0
  %2665 = vmatprep.mubr.bf16.mxu0 0
  %2666 = vmatmul.mubr.bf16.gmra.mrb[0].mxu0 %v2615
  %v2667 = vpop.f32.mrb[0].mxu0
  %v2668 = vadd.f32 0.0, %v2667
  %v2669 = vpop.f32.mrb[0].mxu0
  %v2670 = vpop.f32.mrb[0].mxu0
  %v2671 = vadd.f32 0.0, %v2670
  %v2672 = vpop.f32.mrb[0].mxu0
  %2673 = vdwg.mxu0
  %s2674 = scalar_lea.vmem %s8, 20
  %v2675 = vld [vmem:[%s2674] sm:$0xf]
  %v2676 = vpack.c.bf16 %v2655, %v2652
  %v2677 = vpack.c.bf16 %v2663, %v2660
  %v2678 = vpack.c.bf16 %v2671, %v2668
  %v2680 = vsel %vm385, %v2676, 0
  %v2683 = vsel %vm385, %v2677, 0
  %v2686 = vsel %vm385, %v2678, 0
  %v2689 = vsel %vm854, %v2675, 0
  %2691 = vmatprep.subr.bf16.mxu0 0
  %2692 = vmatpush1.bf16.msra.mxu0 %v2689
  %2693 = vmatprep.subr.bf16.mxu0 0
  %2694 = vmatpush1.bf16.msra.mxu0 0
  %2695 = vmatprep.subr.bf16.mxu0 0
  %2696 = vmatpush1.bf16.msra.mxu0 0
  %2697 = vmatprep.subr.bf16.mxu0 0
  %2698 = vmatpush1.bf16.msra.mxu0 0
  %2699 = vmatprep.subr.bf16.mxu0 0
  %2700 = vmatpush1.bf16.msra.mxu0 0
  %2701 = vmatprep.subr.bf16.mxu0 0
  %2702 = vmatpush1.bf16.msra.mxu0 0
  %2703 = vmatprep.subr.bf16.mxu0 0
  %2704 = vmatpush1.bf16.msra.mxu0 0
  %2705 = vmatprep.subr.bf16.mxu0 0
  %2706 = vmatpush1.bf16.msra.mxu0 0
  %2707 = vmatprep.subr.bf16.mxu0 0
  %2708 = vmatpush1.bf16.msra.mxu0 0
  %2709 = vmatprep.subr.bf16.mxu0 0
  %2710 = vmatpush1.bf16.msra.mxu0 0
  %2711 = vmatprep.subr.bf16.mxu0 0
  %2712 = vmatpush1.bf16.msra.mxu0 0
  %2713 = vmatprep.subr.bf16.mxu0 0
  %2714 = vmatpush1.bf16.msra.mxu0 0
  %2715 = vmatprep.subr.bf16.mxu0 0
  %2716 = vmatpush1.bf16.msra.mxu0 0
  %2717 = vmatprep.subr.bf16.mxu0 0
  %2718 = vmatpush1.bf16.msra.mxu0 0
  %2719 = vmatprep.subr.bf16.mxu0 0
  %2720 = vmatpush1.bf16.msra.mxu0 0
  %2721 = vmatprep.subr.bf16.mxu0 0
  %2722 = vmatpush1.bf16.msra.mxu0 0
  %2723 = vmatprep.mubr.bf16.mxu0 0
  %2724 = vmatmul.mubr.bf16.gmra.mrb[0].mxu0 %v2680
  %v2725 = vpop.f32.mrb[0].mxu0
  %v2726 = vadd.f32 0.0, %v2725
  %v2727 = vpop.f32.mrb[0].mxu0
  %v2728 = vpop.f32.mrb[0].mxu0
  %v2729 = vadd.f32 0.0, %v2728
  %v2730 = vpop.f32.mrb[0].mxu0
  %2731 = vmatprep.mubr.bf16.mxu0 0
  %2732 = vmatmul.mubr.bf16.gmra.mrb[0].mxu0 %v2683
  %v2733 = vpop.f32.mrb[0].mxu0
  %v2734 = vadd.f32 0.0, %v2733
  %v2735 = vpop.f32.mrb[0].mxu0
  %v2736 = vpop.f32.mrb[0].mxu0
  %v2737 = vadd.f32 0.0, %v2736
  %v2738 = vpop.f32.mrb[0].mxu0
  %2739 = vmatprep.mubr.bf16.mxu0 0
  %2740 = vmatmul.mubr.bf16.gmra.mrb[0].mxu0 %v2686
  %v2741 = vpop.f32.mrb[0].mxu0
  %v2742 = vadd.f32 0.0, %v2741
  %v2743 = vpop.f32.mrb[0].mxu0
  %v2744 = vpop.f32.mrb[0].mxu0
  %v2745 = vadd.f32 0.0, %v2744
  %v2746 = vpop.f32.mrb[0].mxu0
  %2747 = vdwg.mxu0
  %v2749 = vsel %vm385, %v2440, 0
  %v2752 = vsel %vm385, %v2441, 0
  %v2755 = vsel %vm385, %v2442, 0
  %v2758 = vsel %vm854, %v2439, 0
  %2760 = vmatprep.subr.bf16.mxu0 0
  %2761 = vmatpush1.bf16.msra.mxu0 %v2758
  %2762 = vmatprep.subr.bf16.mxu0 0
  %2763 = vmatpush1.bf16.msra.mxu0 0
  %2764 = vmatprep.subr.bf16.mxu0 0
  %2765 = vmatpush1.bf16.msra.mxu0 0
  %2766 = vmatprep.subr.bf16.mxu0 0
  %2767 = vmatpush1.bf16.msra.mxu0 0
  %2768 = vmatprep.subr.bf16.mxu0 0
  %2769 = vmatpush1.bf16.msra.mxu0 0
  %2770 = vmatprep.subr.bf16.mxu0 0
  %2771 = vmatpush1.bf16.msra.mxu0 0
  %2772 = vmatprep.subr.bf16.mxu0 0
  %2773 = vmatpush1.bf16.msra.mxu0 0
  %2774 = vmatprep.subr.bf16.mxu0 0
  %2775 = vmatpush1.bf16.msra.mxu0 0
  %2776 = vmatprep.subr.bf16.mxu0 0
  %2777 = vmatpush1.bf16.msra.mxu0 0
  %2778 = vmatprep.subr.bf16.mxu0 0
  %2779 = vmatpush1.bf16.msra.mxu0 0
  %2780 = vmatprep.subr.bf16.mxu0 0
  %2781 = vmatpush1.bf16.msra.mxu0 0
  %2782 = vmatprep.subr.bf16.mxu0 0
  %2783 = vmatpush1.bf16.msra.mxu0 0
  %2784 = vmatprep.subr.bf16.mxu0 0
  %2785 = vmatpush1.bf16.msra.mxu0 0
  %2786 = vmatprep.subr.bf16.mxu0 0
  %2787 = vmatpush1.bf16.msra.mxu0 0
  %2788 = vmatprep.subr.bf16.mxu0 0
  %2789 = vmatpush1.bf16.msra.mxu0 0
  %2790 = vmatprep.subr.bf16.mxu0 0
  %2791 = vmatpush1.bf16.msra.mxu0 0
  %2792 = vmatprep.mubr.bf16.mxu0 0
  %2793 = vmatmul.mubr.bf16.gmra.mrb[0].mxu0 %v2749
  %v2794 = vpop.f32.mrb[0].mxu0
  %v2795 = vadd.f32 %v2726, %v2794
  %v2796 = vpop.f32.mrb[0].mxu0
  %v2797 = vpop.f32.mrb[0].mxu0
  %v2798 = vadd.f32 %v2729, %v2797
  %v2799 = vpop.f32.mrb[0].mxu0
  %2800 = vmatprep.mubr.bf16.mxu0 0
  %2801 = vmatmul.mubr.bf16.gmra.mrb[0].mxu0 %v2752
  %v2802 = vpop.f32.mrb[0].mxu0
  %v2803 = vadd.f32 %v2734, %v2802
  %v2804 = vpop.f32.mrb[0].mxu0
  %v2805 = vpop.f32.mrb[0].mxu0
  %v2806 = vadd.f32 %v2737, %v2805
  %v2807 = vpop.f32.mrb[0].mxu0
  %2808 = vmatprep.mubr.bf16.mxu0 0
  %2809 = vmatmul.mubr.bf16.gmra.mrb[0].mxu0 %v2755
  %v2810 = vpop.f32.mrb[0].mxu0
  %v2811 = vadd.f32 %v2742, %v2810
  %v2812 = vpop.f32.mrb[0].mxu0
  %v2813 = vpop.f32.mrb[0].mxu0
  %v2814 = vadd.f32 %v2745, %v2813
  %v2815 = vpop.f32.mrb[0].mxu0
  %2816 = vdwg.mxu0
  %2817 = vrot.lane.b32.xlu0 %v2207, 112
  %v2818 = vpop.permute.xlu0 %2817
  %2819 = vrot.lane.b32.xlu0 %v2208, 112
  %v2820 = vpop.permute.xlu0 %2819
  %2821 = vrot.lane.b32.xlu0 %v2209, 112
  %v2822 = vpop.permute.xlu0 %2821
  %2823 = vrot.lane.b32.xlu0 %v2207, 80
  %v2824 = vpop.permute.xlu0 %2823
  %2825 = vrot.lane.b32.xlu0 %v2208, 80
  %v2826 = vpop.permute.xlu0 %2825
  %2827 = vrot.lane.b32.xlu0 %v2209, 80
  %v2828 = vpop.permute.xlu0 %2827
  %v2830 = vsel %vm385, %v2818, 0
  %v2833 = vsel %vm385, %v2820, 0
  %v2836 = vsel %vm385, %v2822, 0
  %v2839 = vsel %vm385, %v2824, 0
  %v2842 = vsel %vm385, %v2826, 0
  %v2845 = vsel %vm385, %v2828, 0
  %2847 = vmatprep.subr.bf16.mxu0 0
  %2848 = vmatpush1.bf16.xpose.msra.mxu0 %v2839
  %2849 = vmatprep.subr.bf16.mxu0 0
  %2850 = vmatpush1.bf16.xpose.msra.mxu0 %v2842
  %2851 = vmatprep.subr.bf16.mxu0 0
  %2852 = vmatpush1.bf16.xpose.msra.mxu0 %v2845
  %2853 = vmatprep.subr.bf16.mxu0 0
  %2854 = vmatpush1.bf16.xpose.msra.mxu0 0
  %2855 = vmatprep.subr.bf16.mxu0 0
  %2856 = vmatpush1.bf16.xpose.msra.mxu0 0
  %2857 = vmatprep.subr.bf16.mxu0 0
  %2858 = vmatpush1.bf16.xpose.msra.mxu0 0
  %2859 = vmatprep.subr.bf16.mxu0 0
  %2860 = vmatpush1.bf16.xpose.msra.mxu0 0
  %2861 = vmatprep.subr.bf16.mxu0 0
  %2862 = vmatpush1.bf16.xpose.msra.mxu0 0
  %2863 = vmatprep.subr.bf16.mxu0 0
  %2864 = vmatpush1.bf16.xpose.msra.mxu0 0
  %2865 = vmatprep.subr.bf16.mxu0 0
  %2866 = vmatpush1.bf16.xpose.msra.mxu0 0
  %2867 = vmatprep.subr.bf16.mxu0 0
  %2868 = vmatpush1.bf16.xpose.msra.mxu0 0
  %2869 = vmatprep.subr.bf16.mxu0 0
  %2870 = vmatpush1.bf16.xpose.msra.mxu0 0
  %2871 = vmatprep.subr.bf16.mxu0 0
  %2872 = vmatpush1.bf16.xpose.msra.mxu0 0
  %2873 = vmatprep.subr.bf16.mxu0 0
  %2874 = vmatpush1.bf16.xpose.msra.mxu0 0
  %2875 = vmatprep.subr.bf16.mxu0 0
  %2876 = vmatpush1.bf16.xpose.msra.mxu0 0
  %2877 = vmatprep.subr.bf16.mxu0 0
  %2878 = vmatpush1.bf16.xpose.msra.mxu0 0
  %2879 = vmatprep.mubr.bf16.mxu0 0
  %2880 = vmatmul.mubr.bf16.gmra.mrb[0].mxu0 %v2830
  %v2881 = vpop.f32.mrb[0].mxu0
  %v2882 = vadd.f32 %v169, %v2881
  %v2883 = vpop.f32.mrb[0].mxu0
  %v2884 = vpop.f32.mrb[0].mxu0
  %v2885 = vadd.f32 %v170, %v2884
  %v2886 = vpop.f32.mrb[0].mxu0
  %2887 = vmatprep.mubr.bf16.mxu0 0
  %2888 = vmatmul.mubr.bf16.gmra.mrb[0].mxu0 %v2833
  %v2889 = vpop.f32.mrb[0].mxu0
  %v2890 = vadd.f32 %v171, %v2889
  %v2891 = vpop.f32.mrb[0].mxu0
  %v2892 = vpop.f32.mrb[0].mxu0
  %v2893 = vadd.f32 %v172, %v2892
  %v2894 = vpop.f32.mrb[0].mxu0
  %2895 = vmatprep.mubr.bf16.mxu0 0
  %2896 = vmatmul.mubr.bf16.gmra.mrb[0].mxu0 %v2836
  %v2897 = vpop.f32.mrb[0].mxu0
  %v2898 = vadd.f32 %v173, %v2897
  %v2899 = vpop.f32.mrb[0].mxu0
  %v2900 = vpop.f32.mrb[0].mxu0
  %v2901 = vadd.f32 %v174, %v2900
  %v2902 = vpop.f32.mrb[0].mxu0
  %2903 = vdwg.mxu0
  %v2904 = vsel %vm102, %v2882, -inf
  %2905 = vmax.xlane.f32.xlu0 %v2904
  %v2906 = vpop.xlane.xlu0 %2905
  %v2907 = vsel %vm102, %v2885, -inf
  %2908 = vmax.xlane.f32.xlu0 %v2907
  %v2909 = vpop.xlane.xlu0 %2908
  %v2910 = vsel %vm102, %v2890, -inf
  %2911 = vmax.xlane.f32.xlu0 %v2910
  %v2912 = vpop.xlane.xlu0 %2911
  %v2913 = vsel %vm102, %v2893, -inf
  %2914 = vmax.xlane.f32.xlu0 %v2913
  %v2915 = vpop.xlane.xlu0 %2914
  %v2916 = vsel %vm102, %v2898, -inf
  %2917 = vmax.xlane.f32.xlu0 %v2916
  %v2918 = vpop.xlane.xlu0 %2917
  %v2919 = vsel %vm102, %v2901, -inf
  %2920 = vmax.xlane.f32.xlu0 %v2919
  %v2921 = vpop.xlane.xlu0 %2920
  %v2922 = vsub.f32 %v2882, %v2906
  %v2923 = vsub.f32 %v2885, %v2909
  %v2924 = vsub.f32 %v2890, %v2912
  %v2925 = vsub.f32 %v2893, %v2915
  %v2926 = vsub.f32 %v2898, %v2918
  %v2927 = vsub.f32 %v2901, %v2921
  %v2928 = vmul.f32 %v2922, 1.442695
  %v2929 = vpow.pop %v2928
  %v2930 = vmul.f32 %v2923, 1.442695
  %v2931 = vpow.pop %v2930
  %v2932 = vmul.f32 %v2924, 1.442695
  %v2933 = vpow.pop %v2932
  %v2934 = vmul.f32 %v2925, 1.442695
  %v2935 = vpow.pop %v2934
  %v2936 = vmul.f32 %v2926, 1.442695
  %v2937 = vpow.pop %v2936
  %v2938 = vmul.f32 %v2927, 1.442695
  %v2939 = vpow.pop %v2938
  %v2940 = vsel %vm102, %v2929, 0.0
  %2941 = vadd.xlane.f32.xlu0 %v2940
  %v2942 = vpop.xlane.xlu0 %2941
  %v2943 = vsel %vm102, %v2931, 0.0
  %2944 = vadd.xlane.f32.xlu0 %v2943
  %v2945 = vpop.xlane.xlu0 %2944
  %v2946 = vsel %vm102, %v2933, 0.0
  %2947 = vadd.xlane.f32.xlu0 %v2946
  %v2948 = vpop.xlane.xlu0 %2947
  %v2949 = vsel %vm102, %v2935, 0.0
  %2950 = vadd.xlane.f32.xlu0 %v2949
  %v2951 = vpop.xlane.xlu0 %2950
  %v2952 = vsel %vm102, %v2937, 0.0
  %2953 = vadd.xlane.f32.xlu0 %v2952
  %v2954 = vpop.xlane.xlu0 %2953
  %v2955 = vsel %vm102, %v2939, 0.0
  %2956 = vadd.xlane.f32.xlu0 %v2955
  %v2957 = vpop.xlane.xlu0 %2956
  %v2958 = vrcp.pop %v2942
  %v2959 = vrcp.pop %v2945
  %v2960 = vrcp.pop %v2948
  %v2961 = vrcp.pop %v2951
  %v2962 = vrcp.pop %v2954
  %v2963 = vrcp.pop %v2957
  %v2964 = vmul.f32 %v2929, %v2958
  %v2965 = vmul.f32 %v2931, %v2959
  %v2966 = vmul.f32 %v2933, %v2960
  %v2967 = vmul.f32 %v2935, %v2961
  %v2968 = vmul.f32 %v2937, %v2962
  %v2969 = vmul.f32 %v2939, %v2963
  %v2970 = vpack.c.bf16 %v2965, %v2964
  %v2971 = vpack.c.bf16 %v2967, %v2966
  %v2972 = vpack.c.bf16 %v2969, %v2968
  %2973 = vrot.lane.b32.xlu0 %v2207, 48
  %v2974 = vpop.permute.xlu0 %2973
  %2975 = vrot.lane.b32.xlu0 %v2208, 48
  %v2976 = vpop.permute.xlu0 %2975
  %2977 = vrot.lane.b32.xlu0 %v2209, 48
  %v2978 = vpop.permute.xlu0 %2977
  %v2983 = vsel %vm102, %v2970, 0
  %v2986 = vsel %vm102, %v2971, 0
  %v2989 = vsel %vm102, %v2972, 0
  %2991 = vmatprep.subr.bf16.mxu0 0
  %2992 = vmatpush1.bf16.msra.mxu0 %v2974
  %2993 = vmatprep.subr.bf16.mxu0 0
  %2994 = vmatpush1.bf16.msra.mxu0 %v2976
  %2995 = vmatprep.subr.bf16.mxu0 0
  %2996 = vmatpush1.bf16.msra.mxu0 %v2978
  %2997 = vmatprep.subr.bf16.mxu0 0
  %2998 = vmatpush1.bf16.msra.mxu0 0
  %2999 = vmatprep.subr.bf16.mxu0 0
  %3000 = vmatpush1.bf16.msra.mxu0 0
  %3001 = vmatprep.subr.bf16.mxu0 0
  %3002 = vmatpush1.bf16.msra.mxu0 0
  %3003 = vmatprep.subr.bf16.mxu0 0
  %3004 = vmatpush1.bf16.msra.mxu0 0
  %3005 = vmatprep.subr.bf16.mxu0 0
  %3006 = vmatpush1.bf16.msra.mxu0 0
  %3007 = vmatprep.subr.bf16.mxu0 0
  %3008 = vmatpush1.bf16.msra.mxu0 0
  %3009 = vmatprep.subr.bf16.mxu0 0
  %3010 = vmatpush1.bf16.msra.mxu0 0
  %3011 = vmatprep.subr.bf16.mxu0 0
  %3012 = vmatpush1.bf16.msra.mxu0 0
  %3013 = vmatprep.subr.bf16.mxu0 0
  %3014 = vmatpush1.bf16.msra.mxu0 0
  %3015 = vmatprep.subr.bf16.mxu0 0
  %3016 = vmatpush1.bf16.msra.mxu0 0
  %3017 = vmatprep.subr.bf16.mxu0 0
  %3018 = vmatpush1.bf16.msra.mxu0 0
  %3019 = vmatprep.subr.bf16.mxu0 0
  %3020 = vmatpush1.bf16.msra.mxu0 0
  %3021 = vmatprep.subr.bf16.mxu0 0
  %3022 = vmatpush1.bf16.msra.mxu0 0
  %3023 = vmatprep.mubr.bf16.mxu0 0
  %3024 = vmatmul.mubr.bf16.gmra.mrb[0].mxu0 %v2983
  %v3025 = vpop.f32.mrb[0].mxu0
  %v3026 = vadd.f32 0.0, %v3025
  %v3027 = vpop.f32.mrb[0].mxu0
  %v3028 = vpop.f32.mrb[0].mxu0
  %v3029 = vadd.f32 0.0, %v3028
  %v3030 = vpop.f32.mrb[0].mxu0
  %3031 = vmatprep.mubr.bf16.mxu0 0
  %3032 = vmatmul.mubr.bf16.gmra.mrb[0].mxu0 %v2986
  %v3033 = vpop.f32.mrb[0].mxu0
  %v3034 = vadd.f32 0.0, %v3033
  %v3035 = vpop.f32.mrb[0].mxu0
  %v3036 = vpop.f32.mrb[0].mxu0
  %v3037 = vadd.f32 0.0, %v3036
  %v3038 = vpop.f32.mrb[0].mxu0
  %3039 = vmatprep.mubr.bf16.mxu0 0
  %3040 = vmatmul.mubr.bf16.gmra.mrb[0].mxu0 %v2989
  %v3041 = vpop.f32.mrb[0].mxu0
  %v3042 = vadd.f32 0.0, %v3041
  %v3043 = vpop.f32.mrb[0].mxu0
  %v3044 = vpop.f32.mrb[0].mxu0
  %v3045 = vadd.f32 0.0, %v3044
  %v3046 = vpop.f32.mrb[0].mxu0
  %3047 = vdwg.mxu0
  %s3048 = scalar_lea.vmem %s8, 24
  %v3049 = vld [vmem:[%s3048] sm:$0xf]
  %v3050 = vpack.c.bf16 %v3029, %v3026
  %v3051 = vpack.c.bf16 %v3037, %v3034
  %v3052 = vpack.c.bf16 %v3045, %v3042
  %v3054 = vsel %vm385, %v3050, 0
  %v3057 = vsel %vm385, %v3051, 0
  %v3060 = vsel %vm385, %v3052, 0
  %v3063 = vsel %vm854, %v3049, 0
  %3065 = vmatprep.subr.bf16.mxu0 0
  %3066 = vmatpush1.bf16.msra.mxu0 %v3063
  %3067 = vmatprep.subr.bf16.mxu0 0
  %3068 = vmatpush1.bf16.msra.mxu0 0
  %3069 = vmatprep.subr.bf16.mxu0 0
  %3070 = vmatpush1.bf16.msra.mxu0 0
  %3071 = vmatprep.subr.bf16.mxu0 0
  %3072 = vmatpush1.bf16.msra.mxu0 0
  %3073 = vmatprep.subr.bf16.mxu0 0
  %3074 = vmatpush1.bf16.msra.mxu0 0
  %3075 = vmatprep.subr.bf16.mxu0 0
  %3076 = vmatpush1.bf16.msra.mxu0 0
  %3077 = vmatprep.subr.bf16.mxu0 0
  %3078 = vmatpush1.bf16.msra.mxu0 0
  %3079 = vmatprep.subr.bf16.mxu0 0
  %3080 = vmatpush1.bf16.msra.mxu0 0
  %3081 = vmatprep.subr.bf16.mxu0 0
  %3082 = vmatpush1.bf16.msra.mxu0 0
  %3083 = vmatprep.subr.bf16.mxu0 0
  %3084 = vmatpush1.bf16.msra.mxu0 0
  %3085 = vmatprep.subr.bf16.mxu0 0
  %3086 = vmatpush1.bf16.msra.mxu0 0
  %3087 = vmatprep.subr.bf16.mxu0 0
  %3088 = vmatpush1.bf16.msra.mxu0 0
  %3089 = vmatprep.subr.bf16.mxu0 0
  %3090 = vmatpush1.bf16.msra.mxu0 0
  %3091 = vmatprep.subr.bf16.mxu0 0
  %3092 = vmatpush1.bf16.msra.mxu0 0
  %3093 = vmatprep.subr.bf16.mxu0 0
  %3094 = vmatpush1.bf16.msra.mxu0 0
  %3095 = vmatprep.subr.bf16.mxu0 0
  %3096 = vmatpush1.bf16.msra.mxu0 0
  %3097 = vmatprep.mubr.bf16.mxu0 0
  %3098 = vmatmul.mubr.bf16.gmra.mrb[0].mxu0 %v3054
  %v3099 = vpop.f32.mrb[0].mxu0
  %v3100 = vadd.f32 0.0, %v3099
  %v3101 = vpop.f32.mrb[0].mxu0
  %v3102 = vpop.f32.mrb[0].mxu0
  %v3103 = vadd.f32 0.0, %v3102
  %v3104 = vpop.f32.mrb[0].mxu0
  %3105 = vmatprep.mubr.bf16.mxu0 0
  %3106 = vmatmul.mubr.bf16.gmra.mrb[0].mxu0 %v3057
  %v3107 = vpop.f32.mrb[0].mxu0
  %v3108 = vadd.f32 0.0, %v3107
  %v3109 = vpop.f32.mrb[0].mxu0
  %v3110 = vpop.f32.mrb[0].mxu0
  %v3111 = vadd.f32 0.0, %v3110
  %v3112 = vpop.f32.mrb[0].mxu0
  %3113 = vmatprep.mubr.bf16.mxu0 0
  %3114 = vmatmul.mubr.bf16.gmra.mrb[0].mxu0 %v3060
  %v3115 = vpop.f32.mrb[0].mxu0
  %v3116 = vadd.f32 0.0, %v3115
  %v3117 = vpop.f32.mrb[0].mxu0
  %v3118 = vpop.f32.mrb[0].mxu0
  %v3119 = vadd.f32 0.0, %v3118
  %v3120 = vpop.f32.mrb[0].mxu0
  %3121 = vdwg.mxu0
  %v3122 = vadd.f32 %v2795, %v3100
  %v3123 = vadd.f32 %v2798, %v3103
  %v3124 = vadd.f32 %v2803, %v3108
  %v3125 = vadd.f32 %v2806, %v3111
  %v3126 = vadd.f32 %v2811, %v3116
  %v3127 = vadd.f32 %v2814, %v3119
  %3128 = vrot.lane.b32.xlu0 %v2207, 104
  %v3129 = vpop.permute.xlu0 %3128
  %3130 = vrot.lane.b32.xlu0 %v2208, 104
  %v3131 = vpop.permute.xlu0 %3130
  %3132 = vrot.lane.b32.xlu0 %v2209, 104
  %v3133 = vpop.permute.xlu0 %3132
  %3134 = vrot.lane.b32.xlu0 %v2207, 72
  %v3135 = vpop.permute.xlu0 %3134
  %3136 = vrot.lane.b32.xlu0 %v2208, 72
  %v3137 = vpop.permute.xlu0 %3136
  %3138 = vrot.lane.b32.xlu0 %v2209, 72
  %v3139 = vpop.permute.xlu0 %3138
  %v3141 = vsel %vm385, %v3129, 0
  %v3144 = vsel %vm385, %v3131, 0
  %v3147 = vsel %vm385, %v3133, 0
  %v3150 = vsel %vm385, %v3135, 0
  %v3153 = vsel %vm385, %v3137, 0
  %v3156 = vsel %vm385, %v3139, 0
  %3158 = vmatprep.subr.bf16.mxu0 0
  %3159 = vmatpush1.bf16.xpose.msra.mxu0 %v3150
  %3160 = vmatprep.subr.bf16.mxu0 0
  %3161 = vmatpush1.bf16.xpose.msra.mxu0 %v3153
  %3162 = vmatprep.subr.bf16.mxu0 0
  %3163 = vmatpush1.bf16.xpose.msra.mxu0 %v3156
  %3164 = vmatprep.subr.bf16.mxu0 0
  %3165 = vmatpush1.bf16.xpose.msra.mxu0 0
  %3166 = vmatprep.subr.bf16.mxu0 0
  %3167 = vmatpush1.bf16.xpose.msra.mxu0 0
  %3168 = vmatprep.subr.bf16.mxu0 0
  %3169 = vmatpush1.bf16.xpose.msra.mxu0 0
  %3170 = vmatprep.subr.bf16.mxu0 0
  %3171 = vmatpush1.bf16.xpose.msra.mxu0 0
  %3172 = vmatprep.subr.bf16.mxu0 0
  %3173 = vmatpush1.bf16.xpose.msra.mxu0 0
  %3174 = vmatprep.subr.bf16.mxu0 0
  %3175 = vmatpush1.bf16.xpose.msra.mxu0 0
  %3176 = vmatprep.subr.bf16.mxu0 0
  %3177 = vmatpush1.bf16.xpose.msra.mxu0 0
  %3178 = vmatprep.subr.bf16.mxu0 0
  %3179 = vmatpush1.bf16.xpose.msra.mxu0 0
  %3180 = vmatprep.subr.bf16.mxu0 0
  %3181 = vmatpush1.bf16.xpose.msra.mxu0 0
  %3182 = vmatprep.subr.bf16.mxu0 0
  %3183 = vmatpush1.bf16.xpose.msra.mxu0 0
  %3184 = vmatprep.subr.bf16.mxu0 0
  %3185 = vmatpush1.bf16.xpose.msra.mxu0 0
  %3186 = vmatprep.subr.bf16.mxu0 0
  %3187 = vmatpush1.bf16.xpose.msra.mxu0 0
  %3188 = vmatprep.subr.bf16.mxu0 0
  %3189 = vmatpush1.bf16.xpose.msra.mxu0 0
  %3190 = vmatprep.mubr.bf16.mxu0 0
  %3191 = vmatmul.mubr.bf16.gmra.mrb[0].mxu0 %v3141
  %v3192 = vpop.f32.mrb[0].mxu0
  %v3193 = vadd.f32 %v169, %v3192
  %v3194 = vpop.f32.mrb[0].mxu0
  %v3195 = vpop.f32.mrb[0].mxu0
  %v3196 = vadd.f32 %v170, %v3195
  %v3197 = vpop.f32.mrb[0].mxu0
  %3198 = vmatprep.mubr.bf16.mxu0 0
  %3199 = vmatmul.mubr.bf16.gmra.mrb[0].mxu0 %v3144
  %v3200 = vpop.f32.mrb[0].mxu0
  %v3201 = vadd.f32 %v171, %v3200
  %v3202 = vpop.f32.mrb[0].mxu0
  %v3203 = vpop.f32.mrb[0].mxu0
  %v3204 = vadd.f32 %v172, %v3203
  %v3205 = vpop.f32.mrb[0].mxu0
  %3206 = vmatprep.mubr.bf16.mxu0 0
  %3207 = vmatmul.mubr.bf16.gmra.mrb[0].mxu0 %v3147
  %v3208 = vpop.f32.mrb[0].mxu0
  %v3209 = vadd.f32 %v173, %v3208
  %v3210 = vpop.f32.mrb[0].mxu0
  %v3211 = vpop.f32.mrb[0].mxu0
  %v3212 = vadd.f32 %v174, %v3211
  %v3213 = vpop.f32.mrb[0].mxu0
  %3214 = vdwg.mxu0
  %v3215 = vsel %vm102, %v3193, -inf
  %3216 = vmax.xlane.f32.xlu0 %v3215
  %v3217 = vpop.xlane.xlu0 %3216
  %v3218 = vsel %vm102, %v3196, -inf
  %3219 = vmax.xlane.f32.xlu0 %v3218
  %v3220 = vpop.xlane.xlu0 %3219
  %v3221 = vsel %vm102, %v3201, -inf
  %3222 = vmax.xlane.f32.xlu0 %v3221
  %v3223 = vpop.xlane.xlu0 %3222
  %v3224 = vsel %vm102, %v3204, -inf
  %3225 = vmax.xlane.f32.xlu0 %v3224
  %v3226 = vpop.xlane.xlu0 %3225
  %v3227 = vsel %vm102, %v3209, -inf
  %3228 = vmax.xlane.f32.xlu0 %v3227
  %v3229 = vpop.xlane.xlu0 %3228
  %v3230 = vsel %vm102, %v3212, -inf
  %3231 = vmax.xlane.f32.xlu0 %v3230
  %v3232 = vpop.xlane.xlu0 %3231
  %v3233 = vsub.f32 %v3193, %v3217
  %v3234 = vsub.f32 %v3196, %v3220
  %v3235 = vsub.f32 %v3201, %v3223
  %v3236 = vsub.f32 %v3204, %v3226
  %v3237 = vsub.f32 %v3209, %v3229
  %v3238 = vsub.f32 %v3212, %v3232
  %v3239 = vmul.f32 %v3233, 1.442695
  %v3240 = vpow.pop %v3239
  %v3241 = vmul.f32 %v3234, 1.442695
  %v3242 = vpow.pop %v3241
  %v3243 = vmul.f32 %v3235, 1.442695
  %v3244 = vpow.pop %v3243
  %v3245 = vmul.f32 %v3236, 1.442695
  %v3246 = vpow.pop %v3245
  %v3247 = vmul.f32 %v3237, 1.442695
  %v3248 = vpow.pop %v3247
  %v3249 = vmul.f32 %v3238, 1.442695
  %v3250 = vpow.pop %v3249
  %v3251 = vsel %vm102, %v3240, 0.0
  %3252 = vadd.xlane.f32.xlu0 %v3251
  %v3253 = vpop.xlane.xlu0 %3252
  %v3254 = vsel %vm102, %v3242, 0.0
  %3255 = vadd.xlane.f32.xlu0 %v3254
  %v3256 = vpop.xlane.xlu0 %3255
  %v3257 = vsel %vm102, %v3244, 0.0
  %3258 = vadd.xlane.f32.xlu0 %v3257
  %v3259 = vpop.xlane.xlu0 %3258
  %v3260 = vsel %vm102, %v3246, 0.0
  %3261 = vadd.xlane.f32.xlu0 %v3260
  %v3262 = vpop.xlane.xlu0 %3261
  %v3263 = vsel %vm102, %v3248, 0.0
  %3264 = vadd.xlane.f32.xlu0 %v3263
  %v3265 = vpop.xlane.xlu0 %3264
  %v3266 = vsel %vm102, %v3250, 0.0
  %3267 = vadd.xlane.f32.xlu0 %v3266
  %v3268 = vpop.xlane.xlu0 %3267
  %v3269 = vrcp.pop %v3253
  %v3270 = vrcp.pop %v3256
  %v3271 = vrcp.pop %v3259
  %v3272 = vrcp.pop %v3262
  %v3273 = vrcp.pop %v3265
  %v3274 = vrcp.pop %v3268
  %v3275 = vmul.f32 %v3240, %v3269
  %v3276 = vmul.f32 %v3242, %v3270
  %v3277 = vmul.f32 %v3244, %v3271
  %v3278 = vmul.f32 %v3246, %v3272
  %v3279 = vmul.f32 %v3248, %v3273
  %v3280 = vmul.f32 %v3250, %v3274
  %v3281 = vpack.c.bf16 %v3276, %v3275
  %v3282 = vpack.c.bf16 %v3278, %v3277
  %v3283 = vpack.c.bf16 %v3280, %v3279
  %3284 = vrot.lane.b32.xlu0 %v2207, 40
  %v3285 = vpop.permute.xlu0 %3284
  %3286 = vrot.lane.b32.xlu0 %v2208, 40
  %v3287 = vpop.permute.xlu0 %3286
  %3288 = vrot.lane.b32.xlu0 %v2209, 40
  %v3289 = vpop.permute.xlu0 %3288
  %v3294 = vsel %vm102, %v3281, 0
  %v3297 = vsel %vm102, %v3282, 0
  %v3300 = vsel %vm102, %v3283, 0
  %3302 = vmatprep.subr.bf16.mxu0 0
  %3303 = vmatpush1.bf16.msra.mxu0 %v3285
  %3304 = vmatprep.subr.bf16.mxu0 0
  %3305 = vmatpush1.bf16.msra.mxu0 %v3287
  %3306 = vmatprep.subr.bf16.mxu0 0
  %3307 = vmatpush1.bf16.msra.mxu0 %v3289
  %3308 = vmatprep.subr.bf16.mxu0 0
  %3309 = vmatpush1.bf16.msra.mxu0 0
  %3310 = vmatprep.subr.bf16.mxu0 0
  %3311 = vmatpush1.bf16.msra.mxu0 0
  %3312 = vmatprep.subr.bf16.mxu0 0
  %3313 = vmatpush1.bf16.msra.mxu0 0
  %3314 = vmatprep.subr.bf16.mxu0 0
  %3315 = vmatpush1.bf16.msra.mxu0 0
  %3316 = vmatprep.subr.bf16.mxu0 0
  %3317 = vmatpush1.bf16.msra.mxu0 0
  %3318 = vmatprep.subr.bf16.mxu0 0
  %3319 = vmatpush1.bf16.msra.mxu0 0
  %3320 = vmatprep.subr.bf16.mxu0 0
  %3321 = vmatpush1.bf16.msra.mxu0 0
  %3322 = vmatprep.subr.bf16.mxu0 0
  %3323 = vmatpush1.bf16.msra.mxu0 0
  %3324 = vmatprep.subr.bf16.mxu0 0
  %3325 = vmatpush1.bf16.msra.mxu0 0
  %3326 = vmatprep.subr.bf16.mxu0 0
  %3327 = vmatpush1.bf16.msra.mxu0 0
  %3328 = vmatprep.subr.bf16.mxu0 0
  %3329 = vmatpush1.bf16.msra.mxu0 0
  %3330 = vmatprep.subr.bf16.mxu0 0
  %3331 = vmatpush1.bf16.msra.mxu0 0
  %3332 = vmatprep.subr.bf16.mxu0 0
  %3333 = vmatpush1.bf16.msra.mxu0 0
  %3334 = vmatprep.mubr.bf16.mxu0 0
  %3335 = vmatmul.mubr.bf16.gmra.mrb[0].mxu0 %v3294
  %v3336 = vpop.f32.mrb[0].mxu0
  %v3337 = vadd.f32 0.0, %v3336
  %v3338 = vpop.f32.mrb[0].mxu0
  %v3339 = vpop.f32.mrb[0].mxu0
  %v3340 = vadd.f32 0.0, %v3339
  %v3341 = vpop.f32.mrb[0].mxu0
  %3342 = vmatprep.mubr.bf16.mxu0 0
  %3343 = vmatmul.mubr.bf16.gmra.mrb[0].mxu0 %v3297
  %v3344 = vpop.f32.mrb[0].mxu0
  %v3345 = vadd.f32 0.0, %v3344
  %v3346 = vpop.f32.mrb[0].mxu0
  %v3347 = vpop.f32.mrb[0].mxu0
  %v3348 = vadd.f32 0.0, %v3347
  %v3349 = vpop.f32.mrb[0].mxu0
  %3350 = vmatprep.mubr.bf16.mxu0 0
  %3351 = vmatmul.mubr.bf16.gmra.mrb[0].mxu0 %v3300
  %v3352 = vpop.f32.mrb[0].mxu0
  %v3353 = vadd.f32 0.0, %v3352
  %v3354 = vpop.f32.mrb[0].mxu0
  %v3355 = vpop.f32.mrb[0].mxu0
  %v3356 = vadd.f32 0.0, %v3355
  %v3357 = vpop.f32.mrb[0].mxu0
  %3358 = vdwg.mxu0
  %s3359 = scalar_lea.vmem %s8, 28
  %v3360 = vld [vmem:[%s3359] sm:$0xf]
  %v3361 = vpack.c.bf16 %v3340, %v3337
  %v3362 = vpack.c.bf16 %v3348, %v3345
  %v3363 = vpack.c.bf16 %v3356, %v3353
  %v3365 = vsel %vm385, %v3361, 0
  %v3368 = vsel %vm385, %v3362, 0
  %v3371 = vsel %vm385, %v3363, 0
  %v3374 = vsel %vm854, %v3360, 0
  %3376 = vmatprep.subr.bf16.mxu0 0
  %3377 = vmatpush1.bf16.msra.mxu0 %v3374
  %3378 = vmatprep.subr.bf16.mxu0 0
  %3379 = vmatpush1.bf16.msra.mxu0 0
  %3380 = vmatprep.subr.bf16.mxu0 0
  %3381 = vmatpush1.bf16.msra.mxu0 0
  %3382 = vmatprep.subr.bf16.mxu0 0
  %3383 = vmatpush1.bf16.msra.mxu0 0
  %3384 = vmatprep.subr.bf16.mxu0 0
  %3385 = vmatpush1.bf16.msra.mxu0 0
  %3386 = vmatprep.subr.bf16.mxu0 0
  %3387 = vmatpush1.bf16.msra.mxu0 0
  %3388 = vmatprep.subr.bf16.mxu0 0
  %3389 = vmatpush1.bf16.msra.mxu0 0
  %3390 = vmatprep.subr.bf16.mxu0 0
  %3391 = vmatpush1.bf16.msra.mxu0 0
  %3392 = vmatprep.subr.bf16.mxu0 0
  %3393 = vmatpush1.bf16.msra.mxu0 0
  %3394 = vmatprep.subr.bf16.mxu0 0
  %3395 = vmatpush1.bf16.msra.mxu0 0
  %3396 = vmatprep.subr.bf16.mxu0 0
  %3397 = vmatpush1.bf16.msra.mxu0 0
  %3398 = vmatprep.subr.bf16.mxu0 0
  %3399 = vmatpush1.bf16.msra.mxu0 0
  %3400 = vmatprep.subr.bf16.mxu0 0
  %3401 = vmatpush1.bf16.msra.mxu0 0
  %3402 = vmatprep.subr.bf16.mxu0 0
  %3403 = vmatpush1.bf16.msra.mxu0 0
  %3404 = vmatprep.subr.bf16.mxu0 0
  %3405 = vmatpush1.bf16.msra.mxu0 0
  %3406 = vmatprep.subr.bf16.mxu0 0
  %3407 = vmatpush1.bf16.msra.mxu0 0
  %3408 = vmatprep.mubr.bf16.mxu0 0
  %3409 = vmatmul.mubr.bf16.gmra.mrb[0].mxu0 %v3365
  %v3410 = vpop.f32.mrb[0].mxu0
  %v3411 = vadd.f32 0.0, %v3410
  %v3412 = vpop.f32.mrb[0].mxu0
  %v3413 = vpop.f32.mrb[0].mxu0
  %v3414 = vadd.f32 0.0, %v3413
  %v3415 = vpop.f32.mrb[0].mxu0
  %3416 = vmatprep.mubr.bf16.mxu0 0
  %3417 = vmatmul.mubr.bf16.gmra.mrb[0].mxu0 %v3368
  %v3418 = vpop.f32.mrb[0].mxu0
  %v3419 = vadd.f32 0.0, %v3418
  %v3420 = vpop.f32.mrb[0].mxu0
  %v3421 = vpop.f32.mrb[0].mxu0
  %v3422 = vadd.f32 0.0, %v3421
  %v3423 = vpop.f32.mrb[0].mxu0
  %3424 = vmatprep.mubr.bf16.mxu0 0
  %3425 = vmatmul.mubr.bf16.gmra.mrb[0].mxu0 %v3371
  %v3426 = vpop.f32.mrb[0].mxu0
  %v3427 = vadd.f32 0.0, %v3426
  %v3428 = vpop.f32.mrb[0].mxu0
  %v3429 = vpop.f32.mrb[0].mxu0
  %v3430 = vadd.f32 0.0, %v3429
  %v3431 = vpop.f32.mrb[0].mxu0
  %3432 = vdwg.mxu0
  %v3433 = vadd.f32 %v3122, %v3411
  %v3434 = vadd.f32 %v3123, %v3414
  %v3435 = vadd.f32 %v3124, %v3419
  %v3436 = vadd.f32 %v3125, %v3422
  %v3437 = vadd.f32 %v3126, %v3427
  %v3438 = vadd.f32 %v3127, %v3430
  %v3439 = vadd.f32 %v2001, %v3433
  %v3440 = vadd.f32 %v2002, %v3434
  %v3441 = vadd.f32 %v2003, %v3435
  %v3442 = vadd.f32 %v2004, %v3436
  %v3443 = vadd.f32 %v2005, %v3437
  %v3444 = vadd.f32 %v2006, %v3438
  %s3445 = scalar_lea.vmem %s9, 1
  %v3446 = vld [vmem:[%s3445] sm:$0x1]
  %v3448 = vlaneseq
  %v3449 = vshrl.u32 %v3448, 7
  %v3450 = vsub.s32 0, %v3449
  %v3451 = vrot.slane %v3446, %v3450
  %v3453 = vadd.f32 %v3439, %v3451
  %v3454 = vadd.f32 %v3440, %v3451
  %v3455 = vadd.f32 %v3441, %v3451
  %v3456 = vadd.f32 %v3442, %v3451
  %v3457 = vadd.f32 %v3443, %v3451
  %v3458 = vadd.f32 %v3444, %v3451
  %s3459 = scalar_lea.vmem %s10, 1
  %v3460 = vld [vmem:[%s3459] sm:$0x1]
  %s3461 = scalar_lea.vmem %s11, 1
  %v3462 = vld [vmem:[%s3461] sm:$0x1]
  %v3463 = vsel %vm177, %v3453, 0.0
  %3464 = vadd.xlane.f32.xlu0 %v3463
  %v3465 = vpop.xlane.xlu0 %3464
  %v3466 = vsel %vm177, %v3454, 0.0
  %3467 = vadd.xlane.f32.xlu0 %v3466
  %v3468 = vpop.xlane.xlu0 %3467
  %v3469 = vsel %vm177, %v3455, 0.0
  %3470 = vadd.xlane.f32.xlu0 %v3469
  %v3471 = vpop.xlane.xlu0 %3470
  %v3472 = vsel %vm177, %v3456, 0.0
  %3473 = vadd.xlane.f32.xlu0 %v3472
  %v3474 = vpop.xlane.xlu0 %3473
  %v3475 = vsel %vm177, %v3457, 0.0
  %3476 = vadd.xlane.f32.xlu0 %v3475
  %v3477 = vpop.xlane.xlu0 %3476
  %v3478 = vsel %vm177, %v3458, 0.0
  %3479 = vadd.xlane.f32.xlu0 %v3478
  %v3480 = vpop.xlane.xlu0 %3479
  %v3481 = vmul.f32 %v3465, %v196
  %v3482 = vmul.f32 %v3468, %v196
  %v3483 = vmul.f32 %v3471, %v196
  %v3484 = vmul.f32 %v3474, %v196
  %v3485 = vmul.f32 %v3477, %v196
  %v3486 = vmul.f32 %v3480, %v196
  %v3487 = vsub.f32 %v3453, %v3481
  %v3488 = vsub.f32 %v3454, %v3482
  %v3489 = vsub.f32 %v3455, %v3483
  %v3490 = vsub.f32 %v3456, %v3484
  %v3491 = vsub.f32 %v3457, %v3485
  %v3492 = vsub.f32 %v3458, %v3486
  %v3493 = vmul.f32 %v3487, %v3487
  %v3494 = vmul.f32 %v3488, %v3488
  %v3495 = vmul.f32 %v3489, %v3489
  %v3496 = vmul.f32 %v3490, %v3490
  %v3497 = vmul.f32 %v3491, %v3491
  %v3498 = vmul.f32 %v3492, %v3492
  %v3499 = vsel %vm177, %v3493, 0.0
  %3500 = vadd.xlane.f32.xlu0 %v3499
  %v3501 = vpop.xlane.xlu0 %3500
  %v3502 = vsel %vm177, %v3494, 0.0
  %3503 = vadd.xlane.f32.xlu0 %v3502
  %v3504 = vpop.xlane.xlu0 %3503
  %v3505 = vsel %vm177, %v3495, 0.0
  %3506 = vadd.xlane.f32.xlu0 %v3505
  %v3507 = vpop.xlane.xlu0 %3506
  %v3508 = vsel %vm177, %v3496, 0.0
  %3509 = vadd.xlane.f32.xlu0 %v3508
  %v3510 = vpop.xlane.xlu0 %3509
  %v3511 = vsel %vm177, %v3497, 0.0
  %3512 = vadd.xlane.f32.xlu0 %v3511
  %v3513 = vpop.xlane.xlu0 %3512
  %v3514 = vsel %vm177, %v3498, 0.0
  %3515 = vadd.xlane.f32.xlu0 %v3514
  %v3516 = vpop.xlane.xlu0 %3515
  %v3517 = vmul.f32 %v3501, %v196
  %v3518 = vmul.f32 %v3504, %v196
  %v3519 = vmul.f32 %v3507, %v196
  %v3520 = vmul.f32 %v3510, %v196
  %v3521 = vmul.f32 %v3513, %v196
  %v3522 = vmul.f32 %v3516, %v196
  %v3523 = vadd.f32 %v3517, 1e-06
  %v3524 = vadd.f32 %v3518, 1e-06
  %v3525 = vadd.f32 %v3519, 1e-06
  %v3526 = vadd.f32 %v3520, 1e-06
  %v3527 = vadd.f32 %v3521, 1e-06
  %v3528 = vadd.f32 %v3522, 1e-06
  %v3529 = vrsqrt.pop %v3523
  %v3530 = vrsqrt.pop %v3524
  %v3531 = vrsqrt.pop %v3525
  %v3532 = vrsqrt.pop %v3526
  %v3533 = vrsqrt.pop %v3527
  %v3534 = vrsqrt.pop %v3528
  %v3535 = vmul.f32 %v3487, %v3529
  %v3536 = vmul.f32 %v3488, %v3530
  %v3537 = vmul.f32 %v3489, %v3531
  %v3538 = vmul.f32 %v3490, %v3532
  %v3539 = vmul.f32 %v3491, %v3533
  %v3540 = vmul.f32 %v3492, %v3534
  %v3542 = vlaneseq
  %v3543 = vshrl.u32 %v3542, 7
  %v3544 = vsub.s32 0, %v3543
  %v3545 = vrot.slane %v3460, %v3544
  %v3547 = vmul.f32 %v3535, %v3545
  %v3548 = vmul.f32 %v3536, %v3545
  %v3549 = vmul.f32 %v3537, %v3545
  %v3550 = vmul.f32 %v3538, %v3545
  %v3551 = vmul.f32 %v3539, %v3545
  %v3552 = vmul.f32 %v3540, %v3545
  %v3554 = vlaneseq
  %v3555 = vshrl.u32 %v3554, 7
  %v3556 = vsub.s32 0, %v3555
  %v3557 = vrot.slane %v3462, %v3556
  %v3559 = vadd.f32 %v3547, %v3557
  %v3560 = vadd.f32 %v3548, %v3557
  %v3561 = vadd.f32 %v3549, %v3557
  %v3562 = vadd.f32 %v3550, %v3557
  %v3563 = vadd.f32 %v3551, %v3557
  %v3564 = vadd.f32 %v3552, %v3557
  %v3565 = vpack.c.bf16 %v3560, %v3559
  %v3566 = vpack.c.bf16 %v3562, %v3561
  %v3567 = vpack.c.bf16 %v3564, %v3563
  %s3568 = scalar_lea.vmem %s12, 16
  %v3569 = vld [vmem:[%s3568] sm:$0xf]
  %v3570 = vld [vmem:[%s3568 + $0x4] sm:$0xf]
  %v3571 = vld [vmem:[%s3568 + $0x8] sm:$0xf]
  %v3572 = vld [vmem:[%s3568 + $0xc] sm:$0xf]
  %v3577 = vunpack.c.l.b16 %v3569
  %v3578 = vunpack.c.l.b16 %v3570
  %v3579 = vunpack.c.l.b16 %v3571
  %v3580 = vunpack.c.l.b16 %v3572
  %v3581 = vpack.c.b16 %v3578, %v3577
  %v3582 = vpack.c.b16 %v3580, %v3579
  %v3586 = vsel %vm177, %v3565, 0
  %v3589 = vsel %vm177, %v3566, 0
  %v3592 = vsel %vm177, %v3567, 0
  %3594 = vmatprep.subr.bf16.mxu0 0
  %3595 = vmatpush1.bf16.msra.mxu0 %v3581
  %3596 = vmatprep.subr.bf16.mxu0 0
  %3597 = vmatpush1.bf16.msra.mxu0 %v3582
  %3598 = vmatprep.subr.bf16.mxu0 0
  %3599 = vmatpush1.bf16.msra.mxu0 0
  %3600 = vmatprep.subr.bf16.mxu0 0
  %3601 = vmatpush1.bf16.msra.mxu0 0
  %3602 = vmatprep.subr.bf16.mxu0 0
  %3603 = vmatpush1.bf16.msra.mxu0 0
  %3604 = vmatprep.subr.bf16.mxu0 0
  %3605 = vmatpush1.bf16.msra.mxu0 0
  %3606 = vmatprep.subr.bf16.mxu0 0
  %3607 = vmatpush1.bf16.msra.mxu0 0
  %3608 = vmatprep.subr.bf16.mxu0 0
  %3609 = vmatpush1.bf16.msra.mxu0 0
  %3610 = vmatprep.subr.bf16.mxu0 0
  %3611 = vmatpush1.bf16.msra.mxu0 0
  %3612 = vmatprep.subr.bf16.mxu0 0
  %3613 = vmatpush1.bf16.msra.mxu0 0
  %3614 = vmatprep.subr.bf16.mxu0 0
  %3615 = vmatpush1.bf16.msra.mxu0 0
  %3616 = vmatprep.subr.bf16.mxu0 0
  %3617 = vmatpush1.bf16.msra.mxu0 0
  %3618 = vmatprep.subr.bf16.mxu0 0
  %3619 = vmatpush1.bf16.msra.mxu0 0
  %3620 = vmatprep.subr.bf16.mxu0 0
  %3621 = vmatpush1.bf16.msra.mxu0 0
  %3622 = vmatprep.subr.bf16.mxu0 0
  %3623 = vmatpush1.bf16.msra.mxu0 0
  %3624 = vmatprep.subr.bf16.mxu0 0
  %3625 = vmatpush1.bf16.msra.mxu0 0
  %3626 = vmatprep.mubr.bf16.mxu0 0
  %3627 = vmatmul.mubr.bf16.gmra.mrb[0].mxu0 %v3586
  %v3628 = vpop.f32.mrb[0].mxu0
  %v3629 = vadd.f32 0.0, %v3628
  %v3630 = vpop.f32.mrb[0].mxu0
  %v3631 = vpop.f32.mrb[0].mxu0
  %v3632 = vadd.f32 0.0, %v3631
  %v3633 = vpop.f32.mrb[0].mxu0
  %3634 = vmatprep.mubr.bf16.mxu0 0
  %3635 = vmatmul.mubr.bf16.gmra.mrb[0].mxu0 %v3589
  %v3636 = vpop.f32.mrb[0].mxu0
  %v3637 = vadd.f32 0.0, %v3636
  %v3638 = vpop.f32.mrb[0].mxu0
  %v3639 = vpop.f32.mrb[0].mxu0
  %v3640 = vadd.f32 0.0, %v3639
  %v3641 = vpop.f32.mrb[0].mxu0
  %3642 = vmatprep.mubr.bf16.mxu0 0
  %3643 = vmatmul.mubr.bf16.gmra.mrb[0].mxu0 %v3592
  %v3644 = vpop.f32.mrb[0].mxu0
  %v3645 = vadd.f32 0.0, %v3644
  %v3646 = vpop.f32.mrb[0].mxu0
  %v3647 = vpop.f32.mrb[0].mxu0
  %v3648 = vadd.f32 0.0, %v3647
  %v3649 = vpop.f32.mrb[0].mxu0
  %3650 = vdwg.mxu0
  %v3651 = vxor.u32 %v3629, 2147483648
  %v3652 = vxor.u32 %v3632, 2147483648
  %v3653 = vxor.u32 %v3637, 2147483648
  %v3654 = vxor.u32 %v3640, 2147483648
  %v3655 = vxor.u32 %v3645, 2147483648
  %v3656 = vxor.u32 %v3648, 2147483648
  %v3657 = vmul.f32 %v3651, 1.442695
  %v3658 = vpow.pop %v3657
  %v3659 = vmul.f32 %v3652, 1.442695
  %v3660 = vpow.pop %v3659
  %v3661 = vmul.f32 %v3653, 1.442695
  %v3662 = vpow.pop %v3661
  %v3663 = vmul.f32 %v3654, 1.442695
  %v3664 = vpow.pop %v3663
  %v3665 = vmul.f32 %v3655, 1.442695
  %v3666 = vpow.pop %v3665
  %v3667 = vmul.f32 %v3656, 1.442695
  %v3668 = vpow.pop %v3667
  %v3669 = vadd.f32 %v3658, 1.0
  %v3670 = vadd.f32 %v3660, 1.0
  %v3671 = vadd.f32 %v3662, 1.0
  %v3672 = vadd.f32 %v3664, 1.0
  %v3673 = vadd.f32 %v3666, 1.0
  %v3674 = vadd.f32 %v3668, 1.0
  %v3675 = vrcp.pop %v3669
  %v3676 = vmul.f32 1.0, %v3675
  %v3677 = vrcp.pop %v3670
  %v3678 = vmul.f32 1.0, %v3677
  %v3679 = vrcp.pop %v3671
  %v3680 = vmul.f32 1.0, %v3679
  %v3681 = vrcp.pop %v3672
  %v3682 = vmul.f32 1.0, %v3681
  %v3683 = vrcp.pop %v3673
  %v3684 = vmul.f32 1.0, %v3683
  %v3685 = vrcp.pop %v3674
  %v3686 = vmul.f32 1.0, %v3685
  %v3687 = vmul.f32 %v3629, %v3676
  %v3688 = vmul.f32 %v3632, %v3678
  %v3689 = vmul.f32 %v3637, %v3680
  %v3690 = vmul.f32 %v3640, %v3682
  %v3691 = vmul.f32 %v3645, %v3684
  %v3692 = vmul.f32 %v3648, %v3686
  %3699 = vrot.lane.b32.xlu0 %v3629, 64
  %v3700 = vpop.permute.xlu0 %3699
  %3701 = vrot.lane.b32.xlu0 %v3632, 64
  %v3702 = vpop.permute.xlu0 %3701
  %3703 = vrot.lane.b32.xlu0 %v3637, 64
  %v3704 = vpop.permute.xlu0 %3703
  %3705 = vrot.lane.b32.xlu0 %v3640, 64
  %v3706 = vpop.permute.xlu0 %3705
  %3707 = vrot.lane.b32.xlu0 %v3645, 64
  %v3708 = vpop.permute.xlu0 %3707
  %3709 = vrot.lane.b32.xlu0 %v3648, 64
  %v3710 = vpop.permute.xlu0 %3709
  %v3717 = vmul.f32 %v3687, %v3700
  %v3718 = vmul.f32 %v3688, %v3702
  %v3719 = vmul.f32 %v3689, %v3704
  %v3720 = vmul.f32 %v3690, %v3706
  %v3721 = vmul.f32 %v3691, %v3708
  %v3722 = vmul.f32 %v3692, %v3710
  %v3723 = vpack.c.bf16 %v3718, %v3717
  %v3724 = vpack.c.bf16 %v3720, %v3719
  %v3725 = vpack.c.bf16 %v3722, %v3721
  %s3726 = scalar_lea.vmem %s13, 32
  %v3727 = vld [vmem:[%s3726] sm:$0xf]
  %v3728 = vld [vmem:[%s3726 + $0x4] sm:$0xf]
  %v3729 = vld [vmem:[%s3726 + $0x8] sm:$0xf]
  %v3730 = vld [vmem:[%s3726 + $0xc] sm:$0xf]
  %v3731 = vld [vmem:[%s3726 + $0x10] sm:$0xf]
  %v3732 = vld [vmem:[%s3726 + $0x14] sm:$0xf]
  %v3733 = vld [vmem:[%s3726 + $0x18] sm:$0xf]
  %v3734 = vld [vmem:[%s3726 + $0x1c] sm:$0xf]
  %v3743 = vunpack.c.l.b16 %v3727
  %v3744 = vunpack.c.l.b16 %v3728
  %v3745 = vunpack.c.l.b16 %v3729
  %v3746 = vunpack.c.l.b16 %v3730
  %v3747 = vunpack.c.l.b16 %v3731
  %v3748 = vunpack.c.l.b16 %v3732
  %v3749 = vunpack.c.l.b16 %v3733
  %v3750 = vunpack.c.l.b16 %v3734
  %v3751 = vpack.c.b16 %v3744, %v3743
  %v3752 = vpack.c.b16 %v3746, %v3745
  %v3753 = vpack.c.b16 %v3748, %v3747
  %v3754 = vpack.c.b16 %v3750, %v3749
  %v3760 = vsel %vm1921, %v3723, 0
  %v3763 = vsel %vm1921, %v3724, 0
  %v3766 = vsel %vm1921, %v3725, 0
  %3768 = vmatprep.subr.bf16.mxu0 0
  %3769 = vmatpush1.bf16.msra.mxu0 %v3751
  %3770 = vmatprep.subr.bf16.mxu0 0
  %3771 = vmatpush1.bf16.msra.mxu0 %v3752
  %3772 = vmatprep.subr.bf16.mxu0 0
  %3773 = vmatpush1.bf16.msra.mxu0 %v3753
  %3774 = vmatprep.subr.bf16.mxu0 0
  %3775 = vmatpush1.bf16.msra.mxu0 %v3754
  %3776 = vmatprep.subr.bf16.mxu0 0
  %3777 = vmatpush1.bf16.msra.mxu0 0
  %3778 = vmatprep.subr.bf16.mxu0 0
  %3779 = vmatpush1.bf16.msra.mxu0 0
  %3780 = vmatprep.subr.bf16.mxu0 0
  %3781 = vmatpush1.bf16.msra.mxu0 0
  %3782 = vmatprep.subr.bf16.mxu0 0
  %3783 = vmatpush1.bf16.msra.mxu0 0
  %3784 = vmatprep.subr.bf16.mxu0 0
  %3785 = vmatpush1.bf16.msra.mxu0 0
  %3786 = vmatprep.subr.bf16.mxu0 0
  %3787 = vmatpush1.bf16.msra.mxu0 0
  %3788 = vmatprep.subr.bf16.mxu0 0
  %3789 = vmatpush1.bf16.msra.mxu0 0
  %3790 = vmatprep.subr.bf16.mxu0 0
  %3791 = vmatpush1.bf16.msra.mxu0 0
  %3792 = vmatprep.subr.bf16.mxu0 0
  %3793 = vmatpush1.bf16.msra.mxu0 0
  %3794 = vmatprep.subr.bf16.mxu0 0
  %3795 = vmatpush1.bf16.msra.mxu0 0
  %3796 = vmatprep.subr.bf16.mxu0 0
  %3797 = vmatpush1.bf16.msra.mxu0 0
  %3798 = vmatprep.subr.bf16.mxu0 0
  %3799 = vmatpush1.bf16.msra.mxu0 0
  %3800 = vmatprep.mubr.bf16.mxu0 0
  %3801 = vmatmul.mubr.bf16.gmra.mrb[0].mxu0 %v3760
  %v3802 = vpop.f32.mrb[0].mxu0
  %v3803 = vadd.f32 0.0, %v3802
  %v3804 = vpop.f32.mrb[0].mxu0
  %v3805 = vpop.f32.mrb[0].mxu0
  %v3806 = vadd.f32 0.0, %v3805
  %v3807 = vpop.f32.mrb[0].mxu0
  %3808 = vmatprep.mubr.bf16.mxu0 0
  %3809 = vmatmul.mubr.bf16.gmra.mrb[0].mxu0 %v3763
  %v3810 = vpop.f32.mrb[0].mxu0
  %v3811 = vadd.f32 0.0, %v3810
  %v3812 = vpop.f32.mrb[0].mxu0
  %v3813 = vpop.f32.mrb[0].mxu0
  %v3814 = vadd.f32 0.0, %v3813
  %v3815 = vpop.f32.mrb[0].mxu0
  %3816 = vmatprep.mubr.bf16.mxu0 0
  %3817 = vmatmul.mubr.bf16.gmra.mrb[0].mxu0 %v3766
  %v3818 = vpop.f32.mrb[0].mxu0
  %v3819 = vadd.f32 0.0, %v3818
  %v3820 = vpop.f32.mrb[0].mxu0
  %v3821 = vpop.f32.mrb[0].mxu0
  %v3822 = vadd.f32 0.0, %v3821
  %v3823 = vpop.f32.mrb[0].mxu0
  %3824 = vdwg.mxu0
  %v3825 = vadd.f32 %v3453, %v3803
  %v3826 = vadd.f32 %v3454, %v3806
  %v3827 = vadd.f32 %v3455, %v3811
  %v3828 = vadd.f32 %v3456, %v3814
  %v3829 = vadd.f32 %v3457, %v3819
  %v3830 = vadd.f32 %v3458, %v3822
  %s3831 = scalar_lea.vmem %s14, 1
  %v3832 = vld [vmem:[%s3831] sm:$0x1]
  %v3834 = vlaneseq
  %v3835 = vshrl.u32 %v3834, 7
  %v3836 = vsub.s32 0, %v3835
  %v3837 = vrot.slane %v3832, %v3836
  %v3839 = vadd.f32 %v3825, %v3837
  %v3840 = vadd.f32 %v3826, %v3837
  %v3841 = vadd.f32 %v3827, %v3837
  %v3842 = vadd.f32 %v3828, %v3837
  %v3843 = vadd.f32 %v3829, %v3837
  %v3844 = vadd.f32 %v3830, %v3837
  %v3845 = vld [vmem:[%s15] sm:$0x1]
  %v3846 = vld [vmem:[%s16] sm:$0x1]
  %v3847 = vsel %vm177, %v3839, 0.0
  %3848 = vadd.xlane.f32.xlu0 %v3847
  %v3849 = vpop.xlane.xlu0 %3848
  %v3850 = vsel %vm177, %v3840, 0.0
  %3851 = vadd.xlane.f32.xlu0 %v3850
  %v3852 = vpop.xlane.xlu0 %3851
  %v3853 = vsel %vm177, %v3841, 0.0
  %3854 = vadd.xlane.f32.xlu0 %v3853
  %v3855 = vpop.xlane.xlu0 %3854
  %v3856 = vsel %vm177, %v3842, 0.0
  %3857 = vadd.xlane.f32.xlu0 %v3856
  %v3858 = vpop.xlane.xlu0 %3857
  %v3859 = vsel %vm177, %v3843, 0.0
  %3860 = vadd.xlane.f32.xlu0 %v3859
  %v3861 = vpop.xlane.xlu0 %3860
  %v3862 = vsel %vm177, %v3844, 0.0
  %3863 = vadd.xlane.f32.xlu0 %v3862
  %v3864 = vpop.xlane.xlu0 %3863
  %v3865 = vmul.f32 %v3849, %v196
  %v3866 = vmul.f32 %v3852, %v196
  %v3867 = vmul.f32 %v3855, %v196
  %v3868 = vmul.f32 %v3858, %v196
  %v3869 = vmul.f32 %v3861, %v196
  %v3870 = vmul.f32 %v3864, %v196
  %v3871 = vsub.f32 %v3839, %v3865
  %v3872 = vsub.f32 %v3840, %v3866
  %v3873 = vsub.f32 %v3841, %v3867
  %v3874 = vsub.f32 %v3842, %v3868
  %v3875 = vsub.f32 %v3843, %v3869
  %v3876 = vsub.f32 %v3844, %v3870
  %v3877 = vmul.f32 %v3871, %v3871
  %v3878 = vmul.f32 %v3872, %v3872
  %v3879 = vmul.f32 %v3873, %v3873
  %v3880 = vmul.f32 %v3874, %v3874
  %v3881 = vmul.f32 %v3875, %v3875
  %v3882 = vmul.f32 %v3876, %v3876
  %v3883 = vsel %vm177, %v3877, 0.0
  %3884 = vadd.xlane.f32.xlu0 %v3883
  %v3885 = vpop.xlane.xlu0 %3884
  %v3886 = vsel %vm177, %v3878, 0.0
  %3887 = vadd.xlane.f32.xlu0 %v3886
  %v3888 = vpop.xlane.xlu0 %3887
  %v3889 = vsel %vm177, %v3879, 0.0
  %3890 = vadd.xlane.f32.xlu0 %v3889
  %v3891 = vpop.xlane.xlu0 %3890
  %v3892 = vsel %vm177, %v3880, 0.0
  %3893 = vadd.xlane.f32.xlu0 %v3892
  %v3894 = vpop.xlane.xlu0 %3893
  %v3895 = vsel %vm177, %v3881, 0.0
  %3896 = vadd.xlane.f32.xlu0 %v3895
  %v3897 = vpop.xlane.xlu0 %3896
  %v3898 = vsel %vm177, %v3882, 0.0
  %3899 = vadd.xlane.f32.xlu0 %v3898
  %v3900 = vpop.xlane.xlu0 %3899
  %v3901 = vmul.f32 %v3885, %v196
  %v3902 = vmul.f32 %v3888, %v196
  %v3903 = vmul.f32 %v3891, %v196
  %v3904 = vmul.f32 %v3894, %v196
  %v3905 = vmul.f32 %v3897, %v196
  %v3906 = vmul.f32 %v3900, %v196
  %v3907 = vadd.f32 %v3901, 1e-06
  %v3908 = vadd.f32 %v3902, 1e-06
  %v3909 = vadd.f32 %v3903, 1e-06
  %v3910 = vadd.f32 %v3904, 1e-06
  %v3911 = vadd.f32 %v3905, 1e-06
  %v3912 = vadd.f32 %v3906, 1e-06
  %v3913 = vrsqrt.pop %v3907
  %v3914 = vrsqrt.pop %v3908
  %v3915 = vrsqrt.pop %v3909
  %v3916 = vrsqrt.pop %v3910
  %v3917 = vrsqrt.pop %v3911
  %v3918 = vrsqrt.pop %v3912
  %v3919 = vmul.f32 %v3871, %v3913
  %v3920 = vmul.f32 %v3872, %v3914
  %v3921 = vmul.f32 %v3873, %v3915
  %v3922 = vmul.f32 %v3874, %v3916
  %v3923 = vmul.f32 %v3875, %v3917
  %v3924 = vmul.f32 %v3876, %v3918
  %v3926 = vlaneseq
  %v3927 = vshrl.u32 %v3926, 7
  %v3928 = vsub.s32 0, %v3927
  %v3929 = vrot.slane %v3845, %v3928
  %v3931 = vmul.f32 %v3919, %v3929
  %v3932 = vmul.f32 %v3920, %v3929
  %v3933 = vmul.f32 %v3921, %v3929
  %v3934 = vmul.f32 %v3922, %v3929
  %v3935 = vmul.f32 %v3923, %v3929
  %v3936 = vmul.f32 %v3924, %v3929
  %v3938 = vlaneseq
  %v3939 = vshrl.u32 %v3938, 7
  %v3940 = vsub.s32 0, %v3939
  %v3941 = vrot.slane %v3846, %v3940
  %v3943 = vadd.f32 %v3931, %v3941
  %v3944 = vadd.f32 %v3932, %v3941
  %v3945 = vadd.f32 %v3933, %v3941
  %v3946 = vadd.f32 %v3934, %v3941
  %v3947 = vadd.f32 %v3935, %v3941
  %v3948 = vadd.f32 %v3936, %v3941
  %v3949 = vpack.c.bf16 %v3944, %v3943
  %v3950 = vpack.c.bf16 %v3946, %v3945
  %v3951 = vpack.c.bf16 %v3948, %v3947
  %v3952 = vld [vmem:[%s17] sm:$0xf]
  %v3953 = vld [vmem:[%s17 + $0x4] sm:$0xf]
  %v3954 = vld [vmem:[%s17 + $0x8] sm:$0xf]
  %v3955 = vld [vmem:[%s17 + $0xc] sm:$0xf]
  %v3956 = vld [vmem:[%s18] sm:$0x1]
  %v3958 = vlaneseq
  %v3959 = vshrl.u32 %v3958, 7
  %v3960 = vsub.s32 0, %v3959
  %v3961 = vrot.slane %v3956, %v3960
  %v3967 = vunpack.c.l.b16 %v3952
  %v3968 = vunpack.c.l.b16 %v3953
  %v3969 = vunpack.c.l.b16 %v3954
  %v3970 = vunpack.c.l.b16 %v3955
  %v3971 = vpack.c.b16 %v3968, %v3967
  %v3972 = vpack.c.b16 %v3970, %v3969
  %v3976 = vsel %vm177, %v3949, 0
  %v3979 = vsel %vm177, %v3950, 0
  %v3982 = vsel %vm177, %v3951, 0
  %3984 = vmatprep.subr.bf16.mxu0 0
  %3985 = vmatpush1.bf16.msra.mxu0 %v3971
  %3986 = vmatprep.subr.bf16.mxu0 0
  %3987 = vmatpush1.bf16.msra.mxu0 %v3972
  %3988 = vmatprep.subr.bf16.mxu0 0
  %3989 = vmatpush1.bf16.msra.mxu0 0
  %3990 = vmatprep.subr.bf16.mxu0 0
  %3991 = vmatpush1.bf16.msra.mxu0 0
  %3992 = vmatprep.subr.bf16.mxu0 0
  %3993 = vmatpush1.bf16.msra.mxu0 0
  %3994 = vmatprep.subr.bf16.mxu0 0
  %3995 = vmatpush1.bf16.msra.mxu0 0
  %3996 = vmatprep.subr.bf16.mxu0 0
  %3997 = vmatpush1.bf16.msra.mxu0 0
  %3998 = vmatprep.subr.bf16.mxu0 0
  %3999 = vmatpush1.bf16.msra.mxu0 0
  %4000 = vmatprep.subr.bf16.mxu0 0
  %4001 = vmatpush1.bf16.msra.mxu0 0
  %4002 = vmatprep.subr.bf16.mxu0 0
  %4003 = vmatpush1.bf16.msra.mxu0 0
  %4004 = vmatprep.subr.bf16.mxu0 0
  %4005 = vmatpush1.bf16.msra.mxu0 0
  %4006 = vmatprep.subr.bf16.mxu0 0
  %4007 = vmatpush1.bf16.msra.mxu0 0
  %4008 = vmatprep.subr.bf16.mxu0 0
  %4009 = vmatpush1.bf16.msra.mxu0 0
  %4010 = vmatprep.subr.bf16.mxu0 0
  %4011 = vmatpush1.bf16.msra.mxu0 0
  %4012 = vmatprep.subr.bf16.mxu0 0
  %4013 = vmatpush1.bf16.msra.mxu0 0
  %4014 = vmatprep.subr.bf16.mxu0 0
  %4015 = vmatpush1.bf16.msra.mxu0 0
  %4016 = vmatprep.mubr.bf16.mxu0 0
  %4017 = vmatmul.mubr.bf16.gmra.mrb[0].mxu0 %v3976
  %v4018 = vpop.f32.mrb[0].mxu0
  %v4019 = vadd.f32 %v3961, %v4018
  %v4020 = vpop.f32.mrb[0].mxu0
  %v4021 = vpop.f32.mrb[0].mxu0
  %v4022 = vadd.f32 %v3961, %v4021
  %v4023 = vpop.f32.mrb[0].mxu0
  %4024 = vmatprep.mubr.bf16.mxu0 0
  %4025 = vmatmul.mubr.bf16.gmra.mrb[0].mxu0 %v3979
  %v4026 = vpop.f32.mrb[0].mxu0
  %v4027 = vadd.f32 %v3961, %v4026
  %v4028 = vpop.f32.mrb[0].mxu0
  %v4029 = vpop.f32.mrb[0].mxu0
  %v4030 = vadd.f32 %v3961, %v4029
  %v4031 = vpop.f32.mrb[0].mxu0
  %4032 = vmatprep.mubr.bf16.mxu0 0
  %4033 = vmatmul.mubr.bf16.gmra.mrb[0].mxu0 %v3982
  %v4034 = vpop.f32.mrb[0].mxu0
  %v4035 = vadd.f32 %v3961, %v4034
  %v4036 = vpop.f32.mrb[0].mxu0
  %v4037 = vpop.f32.mrb[0].mxu0
  %v4038 = vadd.f32 %v3961, %v4037
  %v4039 = vpop.f32.mrb[0].mxu0
  %4040 = vdwg.mxu0
  %v4041 = vxor.u32 %v4019, 2147483648
  %v4042 = vxor.u32 %v4022, 2147483648
  %v4043 = vxor.u32 %v4027, 2147483648
  %v4044 = vxor.u32 %v4030, 2147483648
  %v4045 = vxor.u32 %v4035, 2147483648
  %v4046 = vxor.u32 %v4038, 2147483648
  %v4047 = vmul.f32 %v4041, 1.442695
  %v4048 = vpow.pop %v4047
  %v4049 = vmul.f32 %v4042, 1.442695
  %v4050 = vpow.pop %v4049
  %v4051 = vmul.f32 %v4043, 1.442695
  %v4052 = vpow.pop %v4051
  %v4053 = vmul.f32 %v4044, 1.442695
  %v4054 = vpow.pop %v4053
  %v4055 = vmul.f32 %v4045, 1.442695
  %v4056 = vpow.pop %v4055
  %v4057 = vmul.f32 %v4046, 1.442695
  %v4058 = vpow.pop %v4057
  %v4059 = vadd.f32 %v4048, 1.0
  %v4060 = vadd.f32 %v4050, 1.0
  %v4061 = vadd.f32 %v4052, 1.0
  %v4062 = vadd.f32 %v4054, 1.0
  %v4063 = vadd.f32 %v4056, 1.0
  %v4064 = vadd.f32 %v4058, 1.0
  %v4065 = vrcp.pop %v4059
  %v4066 = vmul.f32 1.0, %v4065
  %v4067 = vrcp.pop %v4060
  %v4068 = vmul.f32 1.0, %v4067
  %v4069 = vrcp.pop %v4061
  %v4070 = vmul.f32 1.0, %v4069
  %v4071 = vrcp.pop %v4062
  %v4072 = vmul.f32 1.0, %v4071
  %v4073 = vrcp.pop %v4063
  %v4074 = vmul.f32 1.0, %v4073
  %v4075 = vrcp.pop %v4064
  %v4076 = vmul.f32 1.0, %v4075
  %4077 = vst [vmem:[%s19] sm:$0xff] %v4066
  %4078 = vst [vmem:[%s19 + $0x8] sm:$0xff] %v4068
  %4079 = vst [vmem:[%s19 + $0x10] sm:$0xff] %v4070
  %4080 = vst [vmem:[%s19 + $0x18] sm:$0xff] %v4072
  %4081 = vst [vmem:[%s19 + $0x20] sm:$0xff] %v4074
  %4082 = vst [vmem:[%s19 + $0x28] sm:$0xff] %v4076
  // Predicated region
  $region78: #{isic_forward.1} parent=0 // pred_check
    _
  $region79: #{isic_forward.1} parent=0 // pred_check_branch
    %4084 = sbr.rel (0) target = $region81
  $region80: #{isic_forward.1} parent=0 // pred_region
    _
  $region81: #{isic_forward.1} parent=0 // pred_fallthru
    _
  // Predicated region
  $region82: #{isic_forward.1} parent=0 // pred_check
    _
  $region83: #{isic_forward.1} parent=0 // pred_check_branch
    %4086 = sbr.rel (0) target = $region85
  $region84: #{isic_forward.1} parent=0 // pred_region
    _
  $region85: #{isic_forward.1} parent=0 // pred_fallthru
    _

</llo_original>
